<compile_context>
chip_gen: v7x
topology: tpu7x:2x2x1
jax: 0.10.0
libtpu: 0.0.40
codegen_flags: <defaults>
</compile_context>

<pallas_src>
import functools

import jax
import jax.numpy as jnp
from jax.experimental import pallas as pl
from jax.experimental.pallas import tpu as pltpu


def dqn_kernel(x_ref, zf_ref, wxf_ref, bv_ref, wov_ref, bov_ref,
               waz_ref, ba_ref, woa_ref, boa_ref, qsa_ref, *, n_valid):
    # x_ref:   (TB, H)          squeezed state block
    # zf_ref:  (TB*Np, A)       flattened (batch-major) padded actions
    # wxf_ref: (H, 2*Hh)        fused, pre-transposed [fc2_value ; fc2_adv_x]
    # waz_ref: (A, Hh)          pre-transposed z-half of fc2_advantage
    # qsa_ref: (TB, Np)         lane-dense output slab
    TB, _ = x_ref.shape
    Hh = waz_ref.shape[1]
    Np = qsa_ref.shape[1]

    x2 = x_ref[...]                       # (TB, H)
    zf = zf_ref[...]                      # (TB*Np, A)

    # ---- fused x-side matmul: one MXU push serves both heads ----------------
    hxf = jnp.dot(x2, wxf_ref[...], preferred_element_type=jnp.float32)  # (TB, 2Hh)
    hv_pre = hxf[:, :Hh]                  # fc2_value(x)   pre-bias
    hx = hxf[:, Hh:]                      # x-half of fc2_advantage(cat(x, z))

    # ---- value head ----------------------------------------------------------
    h_v = jnp.maximum(hv_pre + bv_ref[...], 0.0)                          # (TB, Hh)
    value = jnp.sum(h_v * wov_ref[...], axis=-1, keepdims=True) + bov_ref[...]  # (TB, 1)

    # ---- advantage head ------------------------------------------------------
    # cat((x_rep, z), -1) @ Wa^T  ==  x @ Wa[:, :H]^T + z @ Wa[:, H:]^T
    hz = jnp.dot(zf, waz_ref[...], preferred_element_type=jnp.float32)    # (TB*Np, Hh)
    h_a = jnp.maximum(
        hz.reshape(TB, Np, Hh) + hx[:, None, :] + ba_ref[...], 0.0)       # (TB, Np, Hh)
    adv = jnp.sum(h_a * woa_ref[...], axis=-1) + boa_ref[...]             # (TB, Np)

    # ---- dueling combine (mean over only the n_valid real action columns) ---
    col = jax.lax.broadcasted_iota(jnp.int32, (TB, Np), 1)
    valid = col < n_valid
    adv_mean = jnp.sum(jnp.where(valid, adv, 0.0), axis=1, keepdims=True) / n_valid

    qsa_ref[...] = adv + value - adv_mean                                 # (TB, Np)


def dqn_forward(x, z, params, *, tb=8):
    """x: (B, 1, H) f32, z: (B, N, A) f32 -> qsa: (B, N) f32."""
    wv, bv, wov, bov, wa, ba, woa, boa = params
    B, _, H = x.shape
    _, N, A = z.shape
    Hh = wv.shape[0]

    # ---- weight prep (transposes / fusion done in XLA, outside the kernel) --
    wax = wa[:, :H]                                        # (Hh, H)
    waz = wa[:, H:]                                        # (Hh, A)
    wxf_T = jnp.concatenate([wv, wax], axis=0).T           # (H, 2*Hh) fused x-path
    waz_T = waz.T                                          # (A, Hh)

    bv2 = bv.reshape(1, Hh)
    wov2 = wov.reshape(1, Hh)
    bov2 = bov.reshape(1, 1)
    ba2 = ba.reshape(1, Hh)
    woa2 = woa.reshape(1, Hh)
    boa2 = boa.reshape(1, 1)

    # ---- activation prep: squeeze / flatten / pad to (8-sublane, 128-lane) --
    LANES = 128
    Np = max(LANES, ((N + LANES - 1) // LANES) * LANES)    # lane-dense action axis
    Bp = ((B + tb - 1) // tb) * tb                         # grid-friendly batch axis

    x2 = jnp.pad(x[:, 0, :], ((0, Bp - B), (0, 0)))        # (Bp, H)
    zp = jnp.pad(z, ((0, Bp - B), (0, Np - N), (0, 0)))    # (Bp, Np, A), zero-padded
    zf = zp.reshape(Bp * Np, A)                            # (Bp*Np, A), batch-major

    def full(arr):
        nd = arr.ndim
        return pl.BlockSpec(arr.shape, lambda i, _nd=nd: (0,) * _nd)

    kernel = functools.partial(dqn_kernel, n_valid=N)

    qsa_p = pl.pallas_call(
        kernel,
        out_shape=jax.ShapeDtypeStruct((Bp, Np), jnp.float32),
        grid_spec=pltpu.PrefetchScalarGridSpec(
            num_scalar_prefetch=0,
            grid=(Bp // tb,),
            in_specs=[
                pl.BlockSpec((tb, H), lambda i: (i, 0)),           # x2
                pl.BlockSpec((tb * Np, A), lambda i: (i, 0)),      # zf (batch-major)
                full(wxf_T), full(bv2), full(wov2), full(bov2),
                full(waz_T), full(ba2), full(woa2), full(boa2),
            ],
            out_specs=pl.BlockSpec((tb, Np), lambda i: (i, 0)),
        ),
        compiler_params=pltpu.CompilerParams(
            dimension_semantics=("parallel",)),                    # v7x: shard batch over 2 TCs
    )(x2, zf, wxf_T, bv2, wov2, bov2, waz_T, ba2, woa2, boa2)

    return qsa_p[:B, :N]


def init_params(key, hidden_size, action_size):
    """PyTorch nn.Linear-style uniform(-1/sqrt(fan_in), 1/sqrt(fan_in)) init."""
    ks = jax.random.split(key, 8)

    def lin(kw, kb, out_f, in_f):
        bound = 1.0 / jnp.sqrt(in_f)
        w = jax.random.uniform(kw, (out_f, in_f), jnp.float32, -bound, bound)
        b = jax.random.uniform(kb, (out_f,), jnp.float32, -bound, bound)
        return w, b

    wv, bv = lin(ks[0], ks[1], hidden_size, hidden_size)                 # fc2_value
    wov, bov = lin(ks[2], ks[3], 1, hidden_size)                         # out_value
    wa, ba = lin(ks[4], ks[5], hidden_size, hidden_size + action_size)   # fc2_advantage
    woa, boa = lin(ks[6], ks[7], 1, hidden_size)                         # out_advantage
    return (wv, bv, wov, bov, wa, ba, woa, boa)


def dqn_reference(x, z, params):
    """Pure-JAX replica of the PyTorch forward (choose_action=True)."""
    wv, bv, wov, bov, wa, ba, woa, boa = params
    value = (jnp.maximum(x @ wv.T + bv, 0.0) @ wov.T + bov)[..., 0]      # (B, 1)
    x_rep = jnp.broadcast_to(x, (x.shape[0], z.shape[1], x.shape[2]))
    sca = jnp.concatenate([x_rep, z], axis=2)
    adv = (jnp.maximum(sca @ wa.T + ba, 0.0) @ woa.T + boa)[..., 0]      # (B, N)
    return adv + value - adv.mean(axis=1, keepdims=True)


if __name__ == "__main__":
    hidden_size = 32
    action_size = 8
    B = 2          # batch
    N = 8          # number of candidate actions (z.size(1))

    key = jax.random.PRNGKey(0)
    k_p, k_x, k_z = jax.random.split(key, 3)

    params = init_params(k_p, hidden_size, action_size)
    x = jax.random.normal(k_x, (B, 1, hidden_size), jnp.float32)
    z = jax.random.normal(k_z, (B, N, action_size), jnp.float32)

    qsa = dqn_forward(x, z, params)
    qsa = jax.block_until_ready(qsa)

    ref = dqn_reference(x, z, params)
    assert qsa.shape == (B, N)
    assert jnp.allclose(qsa, ref, atol=1e-4, rtol=1e-4), (
        f"max abs err {jnp.max(jnp.abs(qsa - ref))}")

    print("KERNEL_OK")
</pallas_src>

<mosaic_0001>
module attributes {stable_mosaic.version = 11 : i64} {
  func.func @dqn_kernel(%arg0: i32, %arg1: memref<8x32xf32, #tpu.memory_space<vmem>>, %arg2: memref<1024x8xf32, #tpu.memory_space<vmem>>, %arg3: memref<32x64xf32, #tpu.memory_space<vmem>>, %arg4: memref<1x32xf32, #tpu.memory_space<vmem>>, %arg5: memref<1x32xf32, #tpu.memory_space<vmem>>, %arg6: memref<1x1xf32, #tpu.memory_space<vmem>>, %arg7: memref<8x32xf32, #tpu.memory_space<vmem>>, %arg8: memref<1x32xf32, #tpu.memory_space<vmem>>, %arg9: memref<1x32xf32, #tpu.memory_space<vmem>>, %arg10: memref<1x1xf32, #tpu.memory_space<vmem>>, %arg11: memref<8x128xf32, #tpu.memory_space<vmem>>) attributes {dimension_semantics = [#tpu.dimension_semantics<parallel>], iteration_bounds = array<i64: 1>, scalar_prefetch = 0 : i64, scratch_operands = 0 : i64, tpu.core_type = #tpu.core_type<tc>, window_params = [{transform_indices = @transform_0, window_bounds = array<i64: 8, 32>}, {transform_indices = @transform_1, window_bounds = array<i64: 1024, 8>}, {pipeline_mode = #tpu.pipeline_mode<synchronous>, transform_indices = @transform_2, window_bounds = array<i64: 32, 64>}, {pipeline_mode = #tpu.pipeline_mode<synchronous>, transform_indices = @transform_3, window_bounds = array<i64: 1, 32>}, {pipeline_mode = #tpu.pipeline_mode<synchronous>, transform_indices = @transform_4, window_bounds = array<i64: 1, 32>}, {pipeline_mode = #tpu.pipeline_mode<synchronous>, transform_indices = @transform_5, window_bounds = array<i64: 1, 1>}, {pipeline_mode = #tpu.pipeline_mode<synchronous>, transform_indices = @transform_6, window_bounds = array<i64: 8, 32>}, {pipeline_mode = #tpu.pipeline_mode<synchronous>, transform_indices = @transform_7, window_bounds = array<i64: 1, 32>}, {pipeline_mode = #tpu.pipeline_mode<synchronous>, transform_indices = @transform_8, window_bounds = array<i64: 1, 32>}, {pipeline_mode = #tpu.pipeline_mode<synchronous>, transform_indices = @transform_9, window_bounds = array<i64: 1, 1>}, {transform_indices = @transform_10, window_bounds = array<i64: 8, 128>}]} {
    %c0 = arith.constant 0 : index
    %c0_0 = arith.constant 0 : index
    %0 = vector.load %arg1[%c0, %c0_0] : memref<8x32xf32, #tpu.memory_space<vmem>>, vector<8x32xf32>
    %c0_1 = arith.constant 0 : index
    %c0_2 = arith.constant 0 : index
    %1 = vector.load %arg2[%c0_1, %c0_2] : memref<1024x8xf32, #tpu.memory_space<vmem>>, vector<1024x8xf32>
    %c0_3 = arith.constant 0 : index
    %c0_4 = arith.constant 0 : index
    %2 = vector.load %arg3[%c0_3, %c0_4] : memref<32x64xf32, #tpu.memory_space<vmem>>, vector<32x64xf32>
    %cst = arith.constant dense<0.000000e+00> : vector<8x64xf32>
    %3 = tpu.matmul %0, %2, %cst {dimension_numbers = #tpu.dot_dimension_numbers<[1], [0], [0], [1], [0, 0, 1, 1], [], []>} : vector<8x32xf32>, vector<32x64xf32>, vector<8x64xf32> -> vector<8x64xf32>
    %4 = vector.extract_strided_slice %3 {offsets = [0, 0], sizes = [8, 32], strides = [1, 1]} : vector<8x64xf32> to vector<8x32xf32>
    %5 = vector.extract_strided_slice %3 {offsets = [0, 32], sizes = [8, 32], strides = [1, 1]} : vector<8x64xf32> to vector<8x32xf32>
    %c0_5 = arith.constant 0 : index
    %c0_6 = arith.constant 0 : index
    %6 = vector.load %arg4[%c0_5, %c0_6] : memref<1x32xf32, #tpu.memory_space<vmem>>, vector<1x32xf32>
    %7 = vector.broadcast %6 : vector<1x32xf32> to vector<8x32xf32>
    %8 = arith.addf %4, %7 : vector<8x32xf32>
    %cst_7 = arith.constant 0.000000e+00 : f32
    %9 = vector.broadcast %cst_7 : f32 to vector<8x32xf32>
    %10 = arith.maximumf %8, %9 : vector<8x32xf32>
    %c0_8 = arith.constant 0 : index
    %c0_9 = arith.constant 0 : index
    %11 = vector.load %arg5[%c0_8, %c0_9] : memref<1x32xf32, #tpu.memory_space<vmem>>, vector<1x32xf32>
    %12 = vector.broadcast %11 : vector<1x32xf32> to vector<8x32xf32>
    %13 = arith.mulf %10, %12 : vector<8x32xf32>
    %cst_10 = arith.constant dense<0.000000e+00> : vector<8xf32>
    %14 = vector.multi_reduction <add>, %13, %cst_10 [1] : vector<8x32xf32> to vector<8xf32>
    %15 = vector.shape_cast %14 : vector<8xf32> to vector<8x1xf32>
    %c0_11 = arith.constant 0 : index
    %c0_12 = arith.constant 0 : index
    %16 = vector.load %arg6[%c0_11, %c0_12] : memref<1x1xf32, #tpu.memory_space<vmem>>, vector<1x1xf32>
    %17 = vector.broadcast %16 : vector<1x1xf32> to vector<8x1xf32>
    %18 = arith.addf %15, %17 : vector<8x1xf32>
    %c0_13 = arith.constant 0 : index
    %c0_14 = arith.constant 0 : index
    %19 = vector.load %arg7[%c0_13, %c0_14] : memref<8x32xf32, #tpu.memory_space<vmem>>, vector<8x32xf32>
    %cst_15 = arith.constant dense<0.000000e+00> : vector<1024x32xf32>
    %20 = tpu.matmul %1, %19, %cst_15 {dimension_numbers = #tpu.dot_dimension_numbers<[1], [0], [0], [1], [0, 0, 1, 1], [], []>} : vector<1024x8xf32>, vector<8x32xf32>, vector<1024x32xf32> -> vector<1024x32xf32>
    %21 = vector.shape_cast %20 : vector<1024x32xf32> to vector<8x128x32xf32>
    %22 = vector.shape_cast %5 : vector<8x32xf32> to vector<8x1x32xf32>
    %23 = vector.broadcast %22 : vector<8x1x32xf32> to vector<8x128x32xf32>
    %24 = arith.addf %21, %23 : vector<8x128x32xf32>
    %c0_16 = arith.constant 0 : index
    %c0_17 = arith.constant 0 : index
    %25 = vector.load %arg8[%c0_16, %c0_17] : memref<1x32xf32, #tpu.memory_space<vmem>>, vector<1x32xf32>
    %26 = vector.shape_cast %25 : vector<1x32xf32> to vector<1x1x32xf32>
    %27 = vector.broadcast %26 : vector<1x1x32xf32> to vector<8x128x32xf32>
    %28 = arith.addf %24, %27 : vector<8x128x32xf32>
    %cst_18 = arith.constant 0.000000e+00 : f32
    %29 = vector.broadcast %cst_18 : f32 to vector<8x128x32xf32>
    %30 = arith.maximumf %28, %29 : vector<8x128x32xf32>
    %c0_19 = arith.constant 0 : index
    %c0_20 = arith.constant 0 : index
    %31 = vector.load %arg9[%c0_19, %c0_20] : memref<1x32xf32, #tpu.memory_space<vmem>>, vector<1x32xf32>
    %32 = vector.shape_cast %31 : vector<1x32xf32> to vector<1x1x32xf32>
    %33 = vector.broadcast %32 : vector<1x1x32xf32> to vector<8x128x32xf32>
    %34 = arith.mulf %30, %33 : vector<8x128x32xf32>
    %cst_21 = arith.constant dense<0.000000e+00> : vector<8x128xf32>
    %35 = vector.multi_reduction <add>, %34, %cst_21 [2] : vector<8x128x32xf32> to vector<8x128xf32>
    %c0_22 = arith.constant 0 : index
    %c0_23 = arith.constant 0 : index
    %36 = vector.load %arg10[%c0_22, %c0_23] : memref<1x1xf32, #tpu.memory_space<vmem>>, vector<1x1xf32>
    %37 = vector.broadcast %36 : vector<1x1xf32> to vector<8x128xf32>
    %38 = arith.addf %35, %37 : vector<8x128xf32>
    %39 = tpu.iota {dimensions = array<i32: 1>} : vector<8x128xi32>
    %c8_i32 = arith.constant 8 : i32
    %40 = vector.broadcast %c8_i32 : i32 to vector<8x128xi32>
    %41 = arith.cmpi slt, %39, %40 : vector<8x128xi32>
    %cst_24 = arith.constant 0.000000e+00 : f32
    %42 = vector.broadcast %cst_24 : f32 to vector<8x128xf32>
    %43 = arith.select %41, %38, %42 : vector<8x128xi1>, vector<8x128xf32>
    %cst_25 = arith.constant dense<0.000000e+00> : vector<8xf32>
    %44 = vector.multi_reduction <add>, %43, %cst_25 [1] : vector<8x128xf32> to vector<8xf32>
    %45 = vector.shape_cast %44 : vector<8xf32> to vector<8x1xf32>
    %cst_26 = arith.constant 8.000000e+00 : f32
    %46 = vector.broadcast %cst_26 : f32 to vector<8x1xf32>
    %47 = arith.divf %45, %46 : vector<8x1xf32>
    %48 = vector.broadcast %18 : vector<8x1xf32> to vector<8x128xf32>
    %49 = arith.addf %38, %48 : vector<8x128xf32>
    %50 = vector.broadcast %47 : vector<8x1xf32> to vector<8x128xf32>
    %51 = arith.subf %49, %50 : vector<8x128xf32>
    %c0_27 = arith.constant 0 : index
    %c0_28 = arith.constant 0 : index
    %52 = vector.load %arg11[%c0_27, %c0_28] : memref<8x128xf32, #tpu.memory_space<vmem>>, vector<8x128xf32>
    tpu.vector_store %arg11[%c0_27, %c0_28], %51 {strides = array<i32>} : memref<8x128xf32, #tpu.memory_space<vmem>>, vector<8x128xf32>,
    return
  }
  func.func @transform_0(%arg0: i32) -> (i32, i32) {
    %c0_i32 = arith.constant 0 : i32
    %c0_i32_0 = arith.constant 0 : i32
    return %arg0, %c0_i32 : i32, i32
  }
  func.func @transform_1(%arg0: i32) -> (i32, i32) {
    %c0_i32 = arith.constant 0 : i32
    %c0_i32_0 = arith.constant 0 : i32
    return %arg0, %c0_i32 : i32, i32
  }
  func.func @transform_2(%arg0: i32) -> (i32, i32) {
    %c0_i32 = arith.constant 0 : i32
    %c0_i32_0 = arith.constant 0 : i32
    %c0_i32_1 = arith.constant 0 : i32
    return %c0_i32, %c0_i32_0 : i32, i32
  }
  func.func @transform_3(%arg0: i32) -> (i32, i32) {
    %c0_i32 = arith.constant 0 : i32
    %c0_i32_0 = arith.constant 0 : i32
    %c0_i32_1 = arith.constant 0 : i32
    return %c0_i32, %c0_i32_0 : i32, i32
  }
  func.func @transform_4(%arg0: i32) -> (i32, i32) {
    %c0_i32 = arith.constant 0 : i32
    %c0_i32_0 = arith.constant 0 : i32
    %c0_i32_1 = arith.constant 0 : i32
    return %c0_i32, %c0_i32_0 : i32, i32
  }
  func.func @transform_5(%arg0: i32) -> (i32, i32) {
    %c0_i32 = arith.constant 0 : i32
    %c0_i32_0 = arith.constant 0 : i32
    %c0_i32_1 = arith.constant 0 : i32
    return %c0_i32, %c0_i32_0 : i32, i32
  }
  func.func @transform_6(%arg0: i32) -> (i32, i32) {
    %c0_i32 = arith.constant 0 : i32
    %c0_i32_0 = arith.constant 0 : i32
    %c0_i32_1 = arith.constant 0 : i32
    return %c0_i32, %c0_i32_0 : i32, i32
  }
  func.func @transform_7(%arg0: i32) -> (i32, i32) {
    %c0_i32 = arith.constant 0 : i32
    %c0_i32_0 = arith.constant 0 : i32
    %c0_i32_1 = arith.constant 0 : i32
    return %c0_i32, %c0_i32_0 : i32, i32
  }
  func.func @transform_8(%arg0: i32) -> (i32, i32) {
    %c0_i32 = arith.constant 0 : i32
    %c0_i32_0 = arith.constant 0 : i32
    %c0_i32_1 = arith.constant 0 : i32
    return %c0_i32, %c0_i32_0 : i32, i32
  }
  func.func @transform_9(%arg0: i32) -> (i32, i32) {
    %c0_i32 = arith.constant 0 : i32
    %c0_i32_0 = arith.constant 0 : i32
    %c0_i32_1 = arith.constant 0 : i32
    return %c0_i32, %c0_i32_0 : i32, i32
  }
  func.func @transform_10(%arg0: i32) -> (i32, i32) {
    %c0_i32 = arith.constant 0 : i32
    %c0_i32_0 = arith.constant 0 : i32
    return %arg0, %c0_i32 : i32, i32
  }
}

</mosaic_0001>

<llo_original>
// kernel: tpu_custom_call.1
$region0: #{tpu_custom_call.1}
  #allocation0 [shape = 'u32[]', space=smem, size = 0x4, offset = 0x4, fixed_abs, tag = 'smem constant byte address 0x4 - core index']
  #allocation1 [shape = 'u32[144,128]{1,0:T(1,128)}', space=vmem, size = 0x12000, scoped, tag = 'internal scratch']
  #allocation2 [shape = 'f32[1,1]{1,0:T(1,128)S(1)}', space=vmem, size = 0x200, scoped, tag = 'scoped memory for tpu_custom_call.1']
  #allocation3 [shape = 'f32[1,1]{1,0:T(1,128)S(1)}', space=vmem, size = 0x200, scoped, tag = 'scoped memory for tpu_custom_call.1']
  %s0 = inlined_call_operand.vmem [shape: f32[8,32], index: 0, kind: input, shape index: {}]
  %s1 = inlined_call_operand.vmem [shape: f32[1024,8], index: 1, kind: input, shape index: {}]
  %s2 = inlined_call_operand.vmem [shape: f32[32,64], index: 2, kind: input, shape index: {}]
  %s3 = inlined_call_operand.vmem [shape: f32[1,32], index: 3, kind: input, shape index: {}]
  %s4 = inlined_call_operand.vmem [shape: f32[1,32], index: 4, kind: input, shape index: {}]
  %s5 = inlined_call_operand.<no memory space> [shape: f32[1,1], index: 5, kind: input, shape index: {}]
  %s6 = inlined_call_operand.vmem [shape: f32[8,32], index: 6, kind: input, shape index: {}]
  %s7 = inlined_call_operand.vmem [shape: f32[1,32], index: 7, kind: input, shape index: {}]
  %s8 = inlined_call_operand.vmem [shape: f32[1,32], index: 8, kind: input, shape index: {}]
  %s9 = inlined_call_operand.<no memory space> [shape: f32[1,1], index: 9, kind: input, shape index: {}]
  %s10 = inlined_call_operand.hbm [shape: f32[8,128], index: 10, kind: output, shape index: {}]
  %s11 = sld [smem:[#allocation0]]
  $region50: #{tpu_custom_call.1} parent=0
    _
  %s13 = ssub.s32 1, %s11
  %s14 = scalar_select 0, %s13, %s11
  %v15 = vstv %s5
  %16 = vst [vmem:[#allocation2] sm:$0x1] %v15
  %v17 = vstv %s9
  %18 = vst [vmem:[#allocation3] sm:$0x1] %v17
  $region1: #{tpu_custom_call.1} parent=0
    #allocation4 [shape = 'u8[4096]{0}', space=vmem, size = 0x1000, scoped, tag = 'output window, operand 0, single buffered']
    #allocation5 [shape = 's32[1]{0}', space=sflag, size = 0x4, scoped, tag = 'scoped memory for tpu_custom_call.1']
    %19 = vsyncpa [#allocation5], 0
    // Predicated region
    $region2: #{tpu_custom_call.1} parent=1 // pred_check
      _
    $region3: #{tpu_custom_call.1} parent=1 // pred_check_branch
      %21 = sbr.rel (0) target = $region5
    $region4: #{tpu_custom_call.1} parent=1 // pred_region
      _
    $region5: #{tpu_custom_call.1} parent=1 // pred_fallthru
      _
    // Predicated region
    $region6: #{tpu_custom_call.1} parent=1 // pred_check
      _
    $region7: #{tpu_custom_call.1} parent=1 // pred_check_branch
      %23 = sbr.rel (0) target = $region9
    $region8: #{tpu_custom_call.1} parent=1 // pred_region
      _
    $region9: #{tpu_custom_call.1} parent=1 // pred_fallthru
      _
    // Predicated region
    $region10: #{tpu_custom_call.1} parent=1 // pred_check
      _
    $region11: #{tpu_custom_call.1} parent=1 // pred_check_branch
      %25 = sbr.rel (0) target = $region13
    $region12: #{tpu_custom_call.1} parent=1 // pred_region
      _
    $region13: #{tpu_custom_call.1} parent=1 // pred_fallthru
      _
    // Predicated region
    $region14: #{tpu_custom_call.1} parent=1 // pred_check
      _
    $region15: #{tpu_custom_call.1} parent=1 // pred_check_branch
      %27 = sbr.rel (0) target = $region17
    $region16: #{tpu_custom_call.1} parent=1 // pred_region
      _
    $region17: #{tpu_custom_call.1} parent=1 // pred_fallthru
      _
    // Predicated region
    $region18: #{tpu_custom_call.1} parent=1 // pred_check
      _
    $region19: #{tpu_custom_call.1} parent=1 // pred_check_branch
      %29 = sbr.rel (0) target = $region21
    $region20: #{tpu_custom_call.1} parent=1 // pred_region
      _
    $region21: #{tpu_custom_call.1} parent=1 // pred_fallthru
      _
    // Predicated region
    $region22: #{tpu_custom_call.1} parent=1 // pred_check
      _
    $region23: #{tpu_custom_call.1} parent=1 // pred_check_branch
      %31 = sbr.rel (0) target = $region25
    $region24: #{tpu_custom_call.1} parent=1 // pred_region
      _
    $region25: #{tpu_custom_call.1} parent=1 // pred_fallthru
      _
    // Predicated region
    $region26: #{tpu_custom_call.1} parent=1 // pred_check
      _
    $region27: #{tpu_custom_call.1} parent=1 // pred_check_branch
      %33 = sbr.rel (0) target = $region29
    $region28: #{tpu_custom_call.1} parent=1 // pred_region
      _
    $region29: #{tpu_custom_call.1} parent=1 // pred_fallthru
      _
    // Predicated region
    $region30: #{tpu_custom_call.1} parent=1 // pred_check
      _
    $region31: #{tpu_custom_call.1} parent=1 // pred_check_branch
      %35 = sbr.rel (0) target = $region33
    $region32: #{tpu_custom_call.1} parent=1 // pred_region
      _
    $region33: #{tpu_custom_call.1} parent=1 // pred_fallthru
      _
    // Predicated region
    $region34: #{tpu_custom_call.1} parent=1 // pred_check
      _
    $region35: #{tpu_custom_call.1} parent=1 // pred_check_branch
      %37 = sbr.rel (0) target = $region37
    $region36: #{tpu_custom_call.1} parent=1 // pred_region
      _
    $region37: #{tpu_custom_call.1} parent=1 // pred_fallthru
      _
    // Predicated region
    $region38: #{tpu_custom_call.1} parent=1 // pred_check
      _
    $region39: #{tpu_custom_call.1} parent=1 // pred_check_branch
      %39 = sbr.rel (0) target = $region41
    $region40: #{tpu_custom_call.1} parent=1 // pred_region
      _
    $region41: #{tpu_custom_call.1} parent=1 // pred_fallthru
      _
    %v40 = vld [vmem:[%s0] sm:$0xff]
    %v41 = vld [vmem:[%s1] sm:$0xff]
    %v42 = vld [vmem:[%s1 + $0x8] sm:$0xff]
    %v43 = vld [vmem:[%s1 + $0x10] sm:$0xff]
    %v44 = vld [vmem:[%s1 + $0x18] sm:$0xff]
    %v45 = vld [vmem:[%s1 + $0x20] sm:$0xff]
    %v46 = vld [vmem:[%s1 + $0x28] sm:$0xff]
    %v47 = vld [vmem:[%s1 + $0x30] sm:$0xff]
    %v48 = vld [vmem:[%s1 + $0x38] sm:$0xff]
    %v49 = vld [vmem:[%s1 + $0x40] sm:$0xff]
    %v50 = vld [vmem:[%s1 + $0x48] sm:$0xff]
    %v51 = vld [vmem:[%s1 + $0x50] sm:$0xff]
    %v52 = vld [vmem:[%s1 + $0x58] sm:$0xff]
    %v53 = vld [vmem:[%s1 + $0x60] sm:$0xff]
    %v54 = vld [vmem:[%s1 + $0x68] sm:$0xff]
    %v55 = vld [vmem:[%s1 + $0x70] sm:$0xff]
    %v56 = vld [vmem:[%s1 + $0x78] sm:$0xff]
    %v57 = vld [vmem:[%s1 + $0x80] sm:$0xff]
    %v58 = vld [vmem:[%s1 + $0x88] sm:$0xff]
    %v59 = vld [vmem:[%s1 + $0x90] sm:$0xff]
    %v60 = vld [vmem:[%s1 + $0x98] sm:$0xff]
    %v61 = vld [vmem:[%s1 + $0xa0] sm:$0xff]
    %v62 = vld [vmem:[%s1 + $0xa8] sm:$0xff]
    %v63 = vld [vmem:[%s1 + $0xb0] sm:$0xff]
    %v64 = vld [vmem:[%s1 + $0xb8] sm:$0xff]
    %v65 = vld [vmem:[%s1 + $0xc0] sm:$0xff]
    %v66 = vld [vmem:[%s1 + $0xc8] sm:$0xff]
    %v67 = vld [vmem:[%s1 + $0xd0] sm:$0xff]
    %v68 = vld [vmem:[%s1 + $0xd8] sm:$0xff]
    %v69 = vld [vmem:[%s1 + $0xe0] sm:$0xff]
    %v70 = vld [vmem:[%s1 + $0xe8] sm:$0xff]
    %v71 = vld [vmem:[%s1 + $0xf0] sm:$0xff]
    %v72 = vld [vmem:[%s1 + $0xf8] sm:$0xff]
    %v73 = vld [vmem:[%s1 + $0x100] sm:$0xff]
    %v74 = vld [vmem:[%s1 + $0x108] sm:$0xff]
    %v75 = vld [vmem:[%s1 + $0x110] sm:$0xff]
    %v76 = vld [vmem:[%s1 + $0x118] sm:$0xff]
    %v77 = vld [vmem:[%s1 + $0x120] sm:$0xff]
    %v78 = vld [vmem:[%s1 + $0x128] sm:$0xff]
    %v79 = vld [vmem:[%s1 + $0x130] sm:$0xff]
    %v80 = vld [vmem:[%s1 + $0x138] sm:$0xff]
    %v81 = vld [vmem:[%s1 + $0x140] sm:$0xff]
    %v82 = vld [vmem:[%s1 + $0x148] sm:$0xff]
    %v83 = vld [vmem:[%s1 + $0x150] sm:$0xff]
    %v84 = vld [vmem:[%s1 + $0x158] sm:$0xff]
    %v85 = vld [vmem:[%s1 + $0x160] sm:$0xff]
    %v86 = vld [vmem:[%s1 + $0x168] sm:$0xff]
    %v87 = vld [vmem:[%s1 + $0x170] sm:$0xff]
    %v88 = vld [vmem:[%s1 + $0x178] sm:$0xff]
    %v89 = vld [vmem:[%s1 + $0x180] sm:$0xff]
    %v90 = vld [vmem:[%s1 + $0x188] sm:$0xff]
    %v91 = vld [vmem:[%s1 + $0x190] sm:$0xff]
    %v92 = vld [vmem:[%s1 + $0x198] sm:$0xff]
    %v93 = vld [vmem:[%s1 + $0x1a0] sm:$0xff]
    %v94 = vld [vmem:[%s1 + $0x1a8] sm:$0xff]
    %v95 = vld [vmem:[%s1 + $0x1b0] sm:$0xff]
    %v96 = vld [vmem:[%s1 + $0x1b8] sm:$0xff]
    %v97 = vld [vmem:[%s1 + $0x1c0] sm:$0xff]
    %v98 = vld [vmem:[%s1 + $0x1c8] sm:$0xff]
    %v99 = vld [vmem:[%s1 + $0x1d0] sm:$0xff]
    %v100 = vld [vmem:[%s1 + $0x1d8] sm:$0xff]
    %v101 = vld [vmem:[%s1 + $0x1e0] sm:$0xff]
    %v102 = vld [vmem:[%s1 + $0x1e8] sm:$0xff]
    %v103 = vld [vmem:[%s1 + $0x1f0] sm:$0xff]
    %v104 = vld [vmem:[%s1 + $0x1f8] sm:$0xff]
    %v105 = vld [vmem:[%s1 + $0x200] sm:$0xff]
    %v106 = vld [vmem:[%s1 + $0x208] sm:$0xff]
    %v107 = vld [vmem:[%s1 + $0x210] sm:$0xff]
    %v108 = vld [vmem:[%s1 + $0x218] sm:$0xff]
    %v109 = vld [vmem:[%s1 + $0x220] sm:$0xff]
    %v110 = vld [vmem:[%s1 + $0x228] sm:$0xff]
    %v111 = vld [vmem:[%s1 + $0x230] sm:$0xff]
    %v112 = vld [vmem:[%s1 + $0x238] sm:$0xff]
    %v113 = vld [vmem:[%s1 + $0x240] sm:$0xff]
    %v114 = vld [vmem:[%s1 + $0x248] sm:$0xff]
    %v115 = vld [vmem:[%s1 + $0x250] sm:$0xff]
    %v116 = vld [vmem:[%s1 + $0x258] sm:$0xff]
    %v117 = vld [vmem:[%s1 + $0x260] sm:$0xff]
    %v118 = vld [vmem:[%s1 + $0x268] sm:$0xff]
    %v119 = vld [vmem:[%s1 + $0x270] sm:$0xff]
    %v120 = vld [vmem:[%s1 + $0x278] sm:$0xff]
    %v121 = vld [vmem:[%s1 + $0x280] sm:$0xff]
    %v122 = vld [vmem:[%s1 + $0x288] sm:$0xff]
    %v123 = vld [vmem:[%s1 + $0x290] sm:$0xff]
    %v124 = vld [vmem:[%s1 + $0x298] sm:$0xff]
    %v125 = vld [vmem:[%s1 + $0x2a0] sm:$0xff]
    %v126 = vld [vmem:[%s1 + $0x2a8] sm:$0xff]
    %v127 = vld [vmem:[%s1 + $0x2b0] sm:$0xff]
    %v128 = vld [vmem:[%s1 + $0x2b8] sm:$0xff]
    %v129 = vld [vmem:[%s1 + $0x2c0] sm:$0xff]
    %v130 = vld [vmem:[%s1 + $0x2c8] sm:$0xff]
    %v131 = vld [vmem:[%s1 + $0x2d0] sm:$0xff]
    %v132 = vld [vmem:[%s1 + $0x2d8] sm:$0xff]
    %v133 = vld [vmem:[%s1 + $0x2e0] sm:$0xff]
    %v134 = vld [vmem:[%s1 + $0x2e8] sm:$0xff]
    %v135 = vld [vmem:[%s1 + $0x2f0] sm:$0xff]
    %v136 = vld [vmem:[%s1 + $0x2f8] sm:$0xff]
    %v137 = vld [vmem:[%s1 + $0x300] sm:$0xff]
    %v138 = vld [vmem:[%s1 + $0x308] sm:$0xff]
    %v139 = vld [vmem:[%s1 + $0x310] sm:$0xff]
    %v140 = vld [vmem:[%s1 + $0x318] sm:$0xff]
    %v141 = vld [vmem:[%s1 + $0x320] sm:$0xff]
    %v142 = vld [vmem:[%s1 + $0x328] sm:$0xff]
    %v143 = vld [vmem:[%s1 + $0x330] sm:$0xff]
    %v144 = vld [vmem:[%s1 + $0x338] sm:$0xff]
    %v145 = vld [vmem:[%s1 + $0x340] sm:$0xff]
    %v146 = vld [vmem:[%s1 + $0x348] sm:$0xff]
    %v147 = vld [vmem:[%s1 + $0x350] sm:$0xff]
    %v148 = vld [vmem:[%s1 + $0x358] sm:$0xff]
    %v149 = vld [vmem:[%s1 + $0x360] sm:$0xff]
    %v150 = vld [vmem:[%s1 + $0x368] sm:$0xff]
    %v151 = vld [vmem:[%s1 + $0x370] sm:$0xff]
    %v152 = vld [vmem:[%s1 + $0x378] sm:$0xff]
    %v153 = vld [vmem:[%s1 + $0x380] sm:$0xff]
    %v154 = vld [vmem:[%s1 + $0x388] sm:$0xff]
    %v155 = vld [vmem:[%s1 + $0x390] sm:$0xff]
    %v156 = vld [vmem:[%s1 + $0x398] sm:$0xff]
    %v157 = vld [vmem:[%s1 + $0x3a0] sm:$0xff]
    %v158 = vld [vmem:[%s1 + $0x3a8] sm:$0xff]
    %v159 = vld [vmem:[%s1 + $0x3b0] sm:$0xff]
    %v160 = vld [vmem:[%s1 + $0x3b8] sm:$0xff]
    %v161 = vld [vmem:[%s1 + $0x3c0] sm:$0xff]
    %v162 = vld [vmem:[%s1 + $0x3c8] sm:$0xff]
    %v163 = vld [vmem:[%s1 + $0x3d0] sm:$0xff]
    %v164 = vld [vmem:[%s1 + $0x3d8] sm:$0xff]
    %v165 = vld [vmem:[%s1 + $0x3e0] sm:$0xff]
    %v166 = vld [vmem:[%s1 + $0x3e8] sm:$0xff]
    %v167 = vld [vmem:[%s1 + $0x3f0] sm:$0xff]
    %v168 = vld [vmem:[%s1 + $0x3f8] sm:$0xff]
    %v169 = vld [vmem:[%s2] sm:$0xff]
    %v170 = vld [vmem:[%s2 + $0x8] sm:$0xff]
    %v171 = vld [vmem:[%s2 + $0x10] sm:$0xff]
    %v172 = vld [vmem:[%s2 + $0x18] sm:$0xff]
    %vm173 = vcmask 261120
    %v175 = vsel %vm173, %v40, 0
    %177 = vmatprep.subr.mxu0 0.0
    %178 = vmatpush1.msra.mxu0 %v169
    %179 = vmatprep.subr.mxu0 0.0
    %180 = vmatpush1.msra.mxu0 %v170
    %181 = vmatprep.subr.mxu0 0.0
    %182 = vmatpush1.msra.mxu0 %v171
    %183 = vmatprep.subr.mxu0 0.0
    %184 = vmatpush1.msra.mxu0 %v172
    %185 = vmatprep.subr.mxu0 0.0
    %186 = vmatpush1.msra.mxu0 0.0
    %187 = vmatprep.subr.mxu0 0.0
    %188 = vmatpush1.msra.mxu0 0.0
    %189 = vmatprep.subr.mxu0 0.0
    %190 = vmatpush1.msra.mxu0 0.0
    %191 = vmatprep.subr.mxu0 0.0
    %192 = vmatpush1.msra.mxu0 0.0
    %193 = vmatprep.subr.mxu0 0.0
    %194 = vmatpush1.msra.mxu0 0.0
    %195 = vmatprep.subr.mxu0 0.0
    %196 = vmatpush1.msra.mxu0 0.0
    %197 = vmatprep.subr.mxu0 0.0
    %198 = vmatpush1.msra.mxu0 0.0
    %199 = vmatprep.subr.mxu0 0.0
    %200 = vmatpush1.msra.mxu0 0.0
    %201 = vmatprep.subr.mxu0 0.0
    %202 = vmatpush1.msra.mxu0 0.0
    %203 = vmatprep.subr.mxu0 0.0
    %204 = vmatpush1.msra.mxu0 0.0
    %205 = vmatprep.subr.mxu0 0.0
    %206 = vmatpush1.msra.mxu0 0.0
    %207 = vmatprep.subr.mxu0 0.0
    %208 = vmatpush1.msra.mxu0 0.0
    %209 = vmatprep.subr.mxu0 0.0
    %210 = vmatpush1.msra.mxu0 0.0
    %211 = vmatprep.subr.mxu0 0.0
    %212 = vmatpush1.msra.mxu0 0.0
    %213 = vmatprep.subr.mxu0 0.0
    %214 = vmatpush1.msra.mxu0 0.0
    %215 = vmatprep.subr.mxu0 0.0
    %216 = vmatpush1.msra.mxu0 0.0
    %217 = vmatprep.subr.mxu0 0.0
    %218 = vmatpush1.msra.mxu0 0.0
    %219 = vmatprep.subr.mxu0 0.0
    %220 = vmatpush1.msra.mxu0 0.0
    %221 = vmatprep.subr.mxu0 0.0
    %222 = vmatpush1.msra.mxu0 0.0
    %223 = vmatprep.subr.mxu0 0.0
    %224 = vmatpush1.msra.mxu0 0.0
    %225 = vmatprep.subr.mxu0 0.0
    %226 = vmatpush1.msra.mxu0 0.0
    %227 = vmatprep.subr.mxu0 0.0
    %228 = vmatpush1.msra.mxu0 0.0
    %229 = vmatprep.subr.mxu0 0.0
    %230 = vmatpush1.msra.mxu0 0.0
    %231 = vmatprep.subr.mxu0 0.0
    %232 = vmatpush1.msra.mxu0 0.0
    %233 = vmatprep.subr.mxu0 0.0
    %234 = vmatpush1.msra.mxu0 0.0
    %235 = vmatprep.subr.mxu0 0.0
    %236 = vmatpush1.msra.mxu0 0.0
    %237 = vmatprep.subr.mxu0 0.0
    %238 = vmatpush1.msra.mxu0 0.0
    %239 = vmatprep.subr.mxu0 0.0
    %240 = vmatpush1.msra.mxu0 0.0
    %241 = vmatprep.mubr.f32.mxu0 0.0
    %242 = vmatmul.mubr.f32.gmra.mrb[0].mxu0 %v175
    %v243 = vpop.f32.mrb[0].mxu0
    %v244 = vadd.f32 0.0, %v243
    %v245 = vpop.f32.mrb[0].mxu0
    %246 = vdwg.mxu0
    %v247 = vld [vmem:[%s3] sm:$0x1]
    %v249 = vlaneseq
    %v250 = vshrl.u32 %v249, 7
    %v251 = vsub.s32 0, %v250
    %v252 = vrot.slane %v247, %v251
    %v254 = vadd.f32 %v244, %v252
    %v255 = vmax.f32 %v254, 0.0
    %v256 = vld [vmem:[%s4] sm:$0x1]
    %v258 = vlaneseq
    %v259 = vshrl.u32 %v258, 7
    %v260 = vsub.s32 0, %v259
    %v261 = vrot.slane %v256, %v260
    %v263 = vmul.f32 %v255, %v261
    %v264 = vsel %vm173, %v263, 0.0
    %265 = vadd.xlane.f32.xlu0 %v264
    %v266 = vpop.xlane.xlu0 %265
    %v267 = vld [vmem:[#allocation2] sm:$0x1]
    %v269 = vlaneseq
    %v270 = vshrl.u32 %v269, 7
    %v271 = vsub.s32 0, %v270
    %v272 = vrot.slane %v267, %v271
    %v274 = vadd.f32 %v266, %v272
    %v275 = vld [vmem:[%s6] sm:$0xff]
    %vm276 = vcmask 64512
    %v278 = vsel %vm276, %v41, 0
    %v281 = vsel %vm276, %v42, 0
    %v284 = vsel %vm276, %v43, 0
    %v287 = vsel %vm276, %v44, 0
    %v290 = vsel %vm276, %v45, 0
    %v293 = vsel %vm276, %v46, 0
    %v296 = vsel %vm276, %v47, 0
    %v299 = vsel %vm276, %v48, 0
    %v302 = vsel %vm276, %v49, 0
    %v305 = vsel %vm276, %v50, 0
    %v308 = vsel %vm276, %v51, 0
    %v311 = vsel %vm276, %v52, 0
    %v314 = vsel %vm276, %v53, 0
    %v317 = vsel %vm276, %v54, 0
    %v320 = vsel %vm276, %v55, 0
    %v323 = vsel %vm276, %v56, 0
    %v326 = vsel %vm276, %v57, 0
    %v329 = vsel %vm276, %v58, 0
    %v332 = vsel %vm276, %v59, 0
    %v335 = vsel %vm276, %v60, 0
    %v338 = vsel %vm276, %v61, 0
    %v341 = vsel %vm276, %v62, 0
    %v344 = vsel %vm276, %v63, 0
    %v347 = vsel %vm276, %v64, 0
    %v350 = vsel %vm276, %v65, 0
    %v353 = vsel %vm276, %v66, 0
    %v356 = vsel %vm276, %v67, 0
    %v359 = vsel %vm276, %v68, 0
    %v362 = vsel %vm276, %v69, 0
    %v365 = vsel %vm276, %v70, 0
    %v368 = vsel %vm276, %v71, 0
    %v371 = vsel %vm276, %v72, 0
    %v374 = vsel %vm276, %v73, 0
    %v377 = vsel %vm276, %v74, 0
    %v380 = vsel %vm276, %v75, 0
    %v383 = vsel %vm276, %v76, 0
    %v386 = vsel %vm276, %v77, 0
    %v389 = vsel %vm276, %v78, 0
    %v392 = vsel %vm276, %v79, 0
    %v395 = vsel %vm276, %v80, 0
    %v398 = vsel %vm276, %v81, 0
    %v401 = vsel %vm276, %v82, 0
    %v404 = vsel %vm276, %v83, 0
    %v407 = vsel %vm276, %v84, 0
    %v410 = vsel %vm276, %v85, 0
    %v413 = vsel %vm276, %v86, 0
    %v416 = vsel %vm276, %v87, 0
    %v419 = vsel %vm276, %v88, 0
    %v422 = vsel %vm276, %v89, 0
    %v425 = vsel %vm276, %v90, 0
    %v428 = vsel %vm276, %v91, 0
    %v431 = vsel %vm276, %v92, 0
    %v434 = vsel %vm276, %v93, 0
    %v437 = vsel %vm276, %v94, 0
    %v440 = vsel %vm276, %v95, 0
    %v443 = vsel %vm276, %v96, 0
    %v446 = vsel %vm276, %v97, 0
    %v449 = vsel %vm276, %v98, 0
    %v452 = vsel %vm276, %v99, 0
    %v455 = vsel %vm276, %v100, 0
    %v458 = vsel %vm276, %v101, 0
    %v461 = vsel %vm276, %v102, 0
    %v464 = vsel %vm276, %v103, 0
    %v467 = vsel %vm276, %v104, 0
    %v470 = vsel %vm276, %v105, 0
    %v473 = vsel %vm276, %v106, 0
    %v476 = vsel %vm276, %v107, 0
    %v479 = vsel %vm276, %v108, 0
    %v482 = vsel %vm276, %v109, 0
    %v485 = vsel %vm276, %v110, 0
    %v488 = vsel %vm276, %v111, 0
    %v491 = vsel %vm276, %v112, 0
    %v494 = vsel %vm276, %v113, 0
    %v497 = vsel %vm276, %v114, 0
    %v500 = vsel %vm276, %v115, 0
    %v503 = vsel %vm276, %v116, 0
    %v506 = vsel %vm276, %v117, 0
    %v509 = vsel %vm276, %v118, 0
    %v512 = vsel %vm276, %v119, 0
    %v515 = vsel %vm276, %v120, 0
    %v518 = vsel %vm276, %v121, 0
    %v521 = vsel %vm276, %v122, 0
    %v524 = vsel %vm276, %v123, 0
    %v527 = vsel %vm276, %v124, 0
    %v530 = vsel %vm276, %v125, 0
    %v533 = vsel %vm276, %v126, 0
    %v536 = vsel %vm276, %v127, 0
    %v539 = vsel %vm276, %v128, 0
    %v542 = vsel %vm276, %v129, 0
    %v545 = vsel %vm276, %v130, 0
    %v548 = vsel %vm276, %v131, 0
    %v551 = vsel %vm276, %v132, 0
    %v554 = vsel %vm276, %v133, 0
    %v557 = vsel %vm276, %v134, 0
    %v560 = vsel %vm276, %v135, 0
    %v563 = vsel %vm276, %v136, 0
    %v566 = vsel %vm276, %v137, 0
    %v569 = vsel %vm276, %v138, 0
    %v572 = vsel %vm276, %v139, 0
    %v575 = vsel %vm276, %v140, 0
    %v578 = vsel %vm276, %v141, 0
    %v581 = vsel %vm276, %v142, 0
    %v584 = vsel %vm276, %v143, 0
    %v587 = vsel %vm276, %v144, 0
    %v590 = vsel %vm276, %v145, 0
    %v593 = vsel %vm276, %v146, 0
    %v596 = vsel %vm276, %v147, 0
    %v599 = vsel %vm276, %v148, 0
    %v602 = vsel %vm276, %v149, 0
    %v605 = vsel %vm276, %v150, 0
    %v608 = vsel %vm276, %v151, 0
    %v611 = vsel %vm276, %v152, 0
    %v614 = vsel %vm276, %v153, 0
    %v617 = vsel %vm276, %v154, 0
    %v620 = vsel %vm276, %v155, 0
    %v623 = vsel %vm276, %v156, 0
    %v626 = vsel %vm276, %v157, 0
    %v629 = vsel %vm276, %v158, 0
    %v632 = vsel %vm276, %v159, 0
    %v635 = vsel %vm276, %v160, 0
    %v638 = vsel %vm276, %v161, 0
    %v641 = vsel %vm276, %v162, 0
    %v644 = vsel %vm276, %v163, 0
    %v647 = vsel %vm276, %v164, 0
    %v650 = vsel %vm276, %v165, 0
    %v653 = vsel %vm276, %v166, 0
    %v656 = vsel %vm276, %v167, 0
    %v659 = vsel %vm276, %v168, 0
    %661 = vmatprep.subr.mxu0 0.0
    %662 = vmatpush1.msra.mxu0 %v275
    %663 = vmatprep.subr.mxu0 0.0
    %664 = vmatpush1.msra.mxu0 0.0
    %665 = vmatprep.subr.mxu0 0.0
    %666 = vmatpush1.msra.mxu0 0.0
    %667 = vmatprep.subr.mxu0 0.0
    %668 = vmatpush1.msra.mxu0 0.0
    %669 = vmatprep.subr.mxu0 0.0
    %670 = vmatpush1.msra.mxu0 0.0
    %671 = vmatprep.subr.mxu0 0.0
    %672 = vmatpush1.msra.mxu0 0.0
    %673 = vmatprep.subr.mxu0 0.0
    %674 = vmatpush1.msra.mxu0 0.0
    %675 = vmatprep.subr.mxu0 0.0
    %676 = vmatpush1.msra.mxu0 0.0
    %677 = vmatprep.subr.mxu0 0.0
    %678 = vmatpush1.msra.mxu0 0.0
    %679 = vmatprep.subr.mxu0 0.0
    %680 = vmatpush1.msra.mxu0 0.0
    %681 = vmatprep.subr.mxu0 0.0
    %682 = vmatpush1.msra.mxu0 0.0
    %683 = vmatprep.subr.mxu0 0.0
    %684 = vmatpush1.msra.mxu0 0.0
    %685 = vmatprep.subr.mxu0 0.0
    %686 = vmatpush1.msra.mxu0 0.0
    %687 = vmatprep.subr.mxu0 0.0
    %688 = vmatpush1.msra.mxu0 0.0
    %689 = vmatprep.subr.mxu0 0.0
    %690 = vmatpush1.msra.mxu0 0.0
    %691 = vmatprep.subr.mxu0 0.0
    %692 = vmatpush1.msra.mxu0 0.0
    %693 = vmatprep.subr.mxu0 0.0
    %694 = vmatpush1.msra.mxu0 0.0
    %695 = vmatprep.subr.mxu0 0.0
    %696 = vmatpush1.msra.mxu0 0.0
    %697 = vmatprep.subr.mxu0 0.0
    %698 = vmatpush1.msra.mxu0 0.0
    %699 = vmatprep.subr.mxu0 0.0
    %700 = vmatpush1.msra.mxu0 0.0
    %701 = vmatprep.subr.mxu0 0.0
    %702 = vmatpush1.msra.mxu0 0.0
    %703 = vmatprep.subr.mxu0 0.0
    %704 = vmatpush1.msra.mxu0 0.0
    %705 = vmatprep.subr.mxu0 0.0
    %706 = vmatpush1.msra.mxu0 0.0
    %707 = vmatprep.subr.mxu0 0.0
    %708 = vmatpush1.msra.mxu0 0.0
    %709 = vmatprep.subr.mxu0 0.0
    %710 = vmatpush1.msra.mxu0 0.0
    %711 = vmatprep.subr.mxu0 0.0
    %712 = vmatpush1.msra.mxu0 0.0
    %713 = vmatprep.subr.mxu0 0.0
    %714 = vmatpush1.msra.mxu0 0.0
    %715 = vmatprep.subr.mxu0 0.0
    %716 = vmatpush1.msra.mxu0 0.0
    %717 = vmatprep.subr.mxu0 0.0
    %718 = vmatpush1.msra.mxu0 0.0
    %719 = vmatprep.subr.mxu0 0.0
    %720 = vmatpush1.msra.mxu0 0.0
    %721 = vmatprep.subr.mxu0 0.0
    %722 = vmatpush1.msra.mxu0 0.0
    %723 = vmatprep.subr.mxu0 0.0
    %724 = vmatpush1.msra.mxu0 0.0
    %725 = vmatprep.mubr.f32.mxu0 0.0
    %726 = vmatmul.mubr.f32.gmra.mrb[0].mxu0 %v278
    %v727 = vpop.f32.mrb[0].mxu0
    %v728 = vadd.f32 0.0, %v727
    %v729 = vpop.f32.mrb[0].mxu0
    %730 = vmatprep.mubr.f32.mxu0 0.0
    %731 = vmatmul.mubr.f32.gmra.mrb[0].mxu0 %v281
    %v732 = vpop.f32.mrb[0].mxu0
    %v733 = vadd.f32 0.0, %v732
    %v734 = vpop.f32.mrb[0].mxu0
    %735 = vmatprep.mubr.f32.mxu0 0.0
    %736 = vmatmul.mubr.f32.gmra.mrb[0].mxu0 %v284
    %v737 = vpop.f32.mrb[0].mxu0
    %v738 = vadd.f32 0.0, %v737
    %v739 = vpop.f32.mrb[0].mxu0
    %740 = vmatprep.mubr.f32.mxu0 0.0
    %741 = vmatmul.mubr.f32.gmra.mrb[0].mxu0 %v287
    %v742 = vpop.f32.mrb[0].mxu0
    %v743 = vadd.f32 0.0, %v742
    %v744 = vpop.f32.mrb[0].mxu0
    %745 = vmatprep.mubr.f32.mxu0 0.0
    %746 = vmatmul.mubr.f32.gmra.mrb[0].mxu0 %v290
    %v747 = vpop.f32.mrb[0].mxu0
    %v748 = vadd.f32 0.0, %v747
    %v749 = vpop.f32.mrb[0].mxu0
    %750 = vmatprep.mubr.f32.mxu0 0.0
    %751 = vmatmul.mubr.f32.gmra.mrb[0].mxu0 %v293
    %v752 = vpop.f32.mrb[0].mxu0
    %v753 = vadd.f32 0.0, %v752
    %v754 = vpop.f32.mrb[0].mxu0
    %755 = vmatprep.mubr.f32.mxu0 0.0
    %756 = vmatmul.mubr.f32.gmra.mrb[0].mxu0 %v296
    %v757 = vpop.f32.mrb[0].mxu0
    %v758 = vadd.f32 0.0, %v757
    %v759 = vpop.f32.mrb[0].mxu0
    %760 = vmatprep.mubr.f32.mxu0 0.0
    %761 = vmatmul.mubr.f32.gmra.mrb[0].mxu0 %v299
    %v762 = vpop.f32.mrb[0].mxu0
    %v763 = vadd.f32 0.0, %v762
    %v764 = vpop.f32.mrb[0].mxu0
    %765 = vmatprep.mubr.f32.mxu0 0.0
    %766 = vmatmul.mubr.f32.gmra.mrb[0].mxu0 %v302
    %v767 = vpop.f32.mrb[0].mxu0
    %v768 = vadd.f32 0.0, %v767
    %v769 = vpop.f32.mrb[0].mxu0
    %770 = vmatprep.mubr.f32.mxu0 0.0
    %771 = vmatmul.mubr.f32.gmra.mrb[0].mxu0 %v305
    %v772 = vpop.f32.mrb[0].mxu0
    %v773 = vadd.f32 0.0, %v772
    %v774 = vpop.f32.mrb[0].mxu0
    %775 = vmatprep.mubr.f32.mxu0 0.0
    %776 = vmatmul.mubr.f32.gmra.mrb[0].mxu0 %v308
    %v777 = vpop.f32.mrb[0].mxu0
    %v778 = vadd.f32 0.0, %v777
    %v779 = vpop.f32.mrb[0].mxu0
    %780 = vmatprep.mubr.f32.mxu0 0.0
    %781 = vmatmul.mubr.f32.gmra.mrb[0].mxu0 %v311
    %v782 = vpop.f32.mrb[0].mxu0
    %v783 = vadd.f32 0.0, %v782
    %v784 = vpop.f32.mrb[0].mxu0
    %785 = vmatprep.mubr.f32.mxu0 0.0
    %786 = vmatmul.mubr.f32.gmra.mrb[0].mxu0 %v314
    %v787 = vpop.f32.mrb[0].mxu0
    %v788 = vadd.f32 0.0, %v787
    %v789 = vpop.f32.mrb[0].mxu0
    %790 = vmatprep.mubr.f32.mxu0 0.0
    %791 = vmatmul.mubr.f32.gmra.mrb[0].mxu0 %v317
    %v792 = vpop.f32.mrb[0].mxu0
    %v793 = vadd.f32 0.0, %v792
    %v794 = vpop.f32.mrb[0].mxu0
    %795 = vmatprep.mubr.f32.mxu0 0.0
    %796 = vmatmul.mubr.f32.gmra.mrb[0].mxu0 %v320
    %v797 = vpop.f32.mrb[0].mxu0
    %v798 = vadd.f32 0.0, %v797
    %v799 = vpop.f32.mrb[0].mxu0
    %800 = vmatprep.mubr.f32.mxu0 0.0
    %801 = vmatmul.mubr.f32.gmra.mrb[0].mxu0 %v323
    %v802 = vpop.f32.mrb[0].mxu0
    %v803 = vadd.f32 0.0, %v802
    %v804 = vpop.f32.mrb[0].mxu0
    %805 = vmatprep.mubr.f32.mxu0 0.0
    %806 = vmatmul.mubr.f32.gmra.mrb[0].mxu0 %v326
    %v807 = vpop.f32.mrb[0].mxu0
    %v808 = vadd.f32 0.0, %v807
    %v809 = vpop.f32.mrb[0].mxu0
    %810 = vmatprep.mubr.f32.mxu0 0.0
    %811 = vmatmul.mubr.f32.gmra.mrb[0].mxu0 %v329
    %v812 = vpop.f32.mrb[0].mxu0
    %v813 = vadd.f32 0.0, %v812
    %v814 = vpop.f32.mrb[0].mxu0
    %815 = vmatprep.mubr.f32.mxu0 0.0
    %816 = vmatmul.mubr.f32.gmra.mrb[0].mxu0 %v332
    %v817 = vpop.f32.mrb[0].mxu0
    %v818 = vadd.f32 0.0, %v817
    %v819 = vpop.f32.mrb[0].mxu0
    %820 = vmatprep.mubr.f32.mxu0 0.0
    %821 = vmatmul.mubr.f32.gmra.mrb[0].mxu0 %v335
    %v822 = vpop.f32.mrb[0].mxu0
    %v823 = vadd.f32 0.0, %v822
    %v824 = vpop.f32.mrb[0].mxu0
    %825 = vmatprep.mubr.f32.mxu0 0.0
    %826 = vmatmul.mubr.f32.gmra.mrb[0].mxu0 %v338
    %v827 = vpop.f32.mrb[0].mxu0
    %v828 = vadd.f32 0.0, %v827
    %v829 = vpop.f32.mrb[0].mxu0
    %830 = vmatprep.mubr.f32.mxu0 0.0
    %831 = vmatmul.mubr.f32.gmra.mrb[0].mxu0 %v341
    %v832 = vpop.f32.mrb[0].mxu0
    %v833 = vadd.f32 0.0, %v832
    %v834 = vpop.f32.mrb[0].mxu0
    %835 = vmatprep.mubr.f32.mxu0 0.0
    %836 = vmatmul.mubr.f32.gmra.mrb[0].mxu0 %v344
    %v837 = vpop.f32.mrb[0].mxu0
    %v838 = vadd.f32 0.0, %v837
    %v839 = vpop.f32.mrb[0].mxu0
    %840 = vmatprep.mubr.f32.mxu0 0.0
    %841 = vmatmul.mubr.f32.gmra.mrb[0].mxu0 %v347
    %v842 = vpop.f32.mrb[0].mxu0
    %v843 = vadd.f32 0.0, %v842
    %v844 = vpop.f32.mrb[0].mxu0
    %845 = vmatprep.mubr.f32.mxu0 0.0
    %846 = vmatmul.mubr.f32.gmra.mrb[0].mxu0 %v350
    %v847 = vpop.f32.mrb[0].mxu0
    %v848 = vadd.f32 0.0, %v847
    %v849 = vpop.f32.mrb[0].mxu0
    %850 = vmatprep.mubr.f32.mxu0 0.0
    %851 = vmatmul.mubr.f32.gmra.mrb[0].mxu0 %v353
    %v852 = vpop.f32.mrb[0].mxu0
    %v853 = vadd.f32 0.0, %v852
    %v854 = vpop.f32.mrb[0].mxu0
    %855 = vmatprep.mubr.f32.mxu0 0.0
    %856 = vmatmul.mubr.f32.gmra.mrb[0].mxu0 %v356
    %v857 = vpop.f32.mrb[0].mxu0
    %v858 = vadd.f32 0.0, %v857
    %v859 = vpop.f32.mrb[0].mxu0
    %860 = vmatprep.mubr.f32.mxu0 0.0
    %861 = vmatmul.mubr.f32.gmra.mrb[0].mxu0 %v359
    %v862 = vpop.f32.mrb[0].mxu0
    %v863 = vadd.f32 0.0, %v862
    %v864 = vpop.f32.mrb[0].mxu0
    %865 = vmatprep.mubr.f32.mxu0 0.0
    %866 = vmatmul.mubr.f32.gmra.mrb[0].mxu0 %v362
    %v867 = vpop.f32.mrb[0].mxu0
    %v868 = vadd.f32 0.0, %v867
    %v869 = vpop.f32.mrb[0].mxu0
    %870 = vmatprep.mubr.f32.mxu0 0.0
    %871 = vmatmul.mubr.f32.gmra.mrb[0].mxu0 %v365
    %v872 = vpop.f32.mrb[0].mxu0
    %v873 = vadd.f32 0.0, %v872
    %v874 = vpop.f32.mrb[0].mxu0
    %875 = vmatprep.mubr.f32.mxu0 0.0
    %876 = vmatmul.mubr.f32.gmra.mrb[0].mxu0 %v368
    %v877 = vpop.f32.mrb[0].mxu0
    %v878 = vadd.f32 0.0, %v877
    %v879 = vpop.f32.mrb[0].mxu0
    %880 = vmatprep.mubr.f32.mxu0 0.0
    %881 = vmatmul.mubr.f32.gmra.mrb[0].mxu0 %v371
    %v882 = vpop.f32.mrb[0].mxu0
    %v883 = vadd.f32 0.0, %v882
    %v884 = vpop.f32.mrb[0].mxu0
    %885 = vmatprep.mubr.f32.mxu0 0.0
    %886 = vmatmul.mubr.f32.gmra.mrb[0].mxu0 %v374
    %v887 = vpop.f32.mrb[0].mxu0
    %v888 = vadd.f32 0.0, %v887
    %v889 = vpop.f32.mrb[0].mxu0
    %890 = vmatprep.mubr.f32.mxu0 0.0
    %891 = vmatmul.mubr.f32.gmra.mrb[0].mxu0 %v377
    %v892 = vpop.f32.mrb[0].mxu0
    %v893 = vadd.f32 0.0, %v892
    %v894 = vpop.f32.mrb[0].mxu0
    %895 = vmatprep.mubr.f32.mxu0 0.0
    %896 = vmatmul.mubr.f32.gmra.mrb[0].mxu0 %v380
    %v897 = vpop.f32.mrb[0].mxu0
    %v898 = vadd.f32 0.0, %v897
    %v899 = vpop.f32.mrb[0].mxu0
    %900 = vmatprep.mubr.f32.mxu0 0.0
    %901 = vmatmul.mubr.f32.gmra.mrb[0].mxu0 %v383
    %v902 = vpop.f32.mrb[0].mxu0
    %v903 = vadd.f32 0.0, %v902
    %v904 = vpop.f32.mrb[0].mxu0
    %905 = vmatprep.mubr.f32.mxu0 0.0
    %906 = vmatmul.mubr.f32.gmra.mrb[0].mxu0 %v386
    %v907 = vpop.f32.mrb[0].mxu0
    %v908 = vadd.f32 0.0, %v907
    %v909 = vpop.f32.mrb[0].mxu0
    %910 = vmatprep.mubr.f32.mxu0 0.0
    %911 = vmatmul.mubr.f32.gmra.mrb[0].mxu0 %v389
    %v912 = vpop.f32.mrb[0].mxu0
    %v913 = vadd.f32 0.0, %v912
    %v914 = vpop.f32.mrb[0].mxu0
    %915 = vmatprep.mubr.f32.mxu0 0.0
    %916 = vmatmul.mubr.f32.gmra.mrb[0].mxu0 %v392
    %v917 = vpop.f32.mrb[0].mxu0
    %v918 = vadd.f32 0.0, %v917
    %v919 = vpop.f32.mrb[0].mxu0
    %920 = vmatprep.mubr.f32.mxu0 0.0
    %921 = vmatmul.mubr.f32.gmra.mrb[0].mxu0 %v395
    %v922 = vpop.f32.mrb[0].mxu0
    %v923 = vadd.f32 0.0, %v922
    %v924 = vpop.f32.mrb[0].mxu0
    %925 = vmatprep.mubr.f32.mxu0 0.0
    %926 = vmatmul.mubr.f32.gmra.mrb[0].mxu0 %v398
    %v927 = vpop.f32.mrb[0].mxu0
    %v928 = vadd.f32 0.0, %v927
    %v929 = vpop.f32.mrb[0].mxu0
    %930 = vmatprep.mubr.f32.mxu0 0.0
    %931 = vmatmul.mubr.f32.gmra.mrb[0].mxu0 %v401
    %v932 = vpop.f32.mrb[0].mxu0
    %v933 = vadd.f32 0.0, %v932
    %v934 = vpop.f32.mrb[0].mxu0
    %935 = vmatprep.mubr.f32.mxu0 0.0
    %936 = vmatmul.mubr.f32.gmra.mrb[0].mxu0 %v404
    %v937 = vpop.f32.mrb[0].mxu0
    %v938 = vadd.f32 0.0, %v937
    %v939 = vpop.f32.mrb[0].mxu0
    %940 = vmatprep.mubr.f32.mxu0 0.0
    %941 = vmatmul.mubr.f32.gmra.mrb[0].mxu0 %v407
    %v942 = vpop.f32.mrb[0].mxu0
    %v943 = vadd.f32 0.0, %v942
    %v944 = vpop.f32.mrb[0].mxu0
    %945 = vmatprep.mubr.f32.mxu0 0.0
    %946 = vmatmul.mubr.f32.gmra.mrb[0].mxu0 %v410
    %v947 = vpop.f32.mrb[0].mxu0
    %v948 = vadd.f32 0.0, %v947
    %v949 = vpop.f32.mrb[0].mxu0
    %950 = vmatprep.mubr.f32.mxu0 0.0
    %951 = vmatmul.mubr.f32.gmra.mrb[0].mxu0 %v413
    %v952 = vpop.f32.mrb[0].mxu0
    %v953 = vadd.f32 0.0, %v952
    %v954 = vpop.f32.mrb[0].mxu0
    %955 = vmatprep.mubr.f32.mxu0 0.0
    %956 = vmatmul.mubr.f32.gmra.mrb[0].mxu0 %v416
    %v957 = vpop.f32.mrb[0].mxu0
    %v958 = vadd.f32 0.0, %v957
    %v959 = vpop.f32.mrb[0].mxu0
    %960 = vmatprep.mubr.f32.mxu0 0.0
    %961 = vmatmul.mubr.f32.gmra.mrb[0].mxu0 %v419
    %v962 = vpop.f32.mrb[0].mxu0
    %v963 = vadd.f32 0.0, %v962
    %v964 = vpop.f32.mrb[0].mxu0
    %965 = vmatprep.mubr.f32.mxu0 0.0
    %966 = vmatmul.mubr.f32.gmra.mrb[0].mxu0 %v422
    %v967 = vpop.f32.mrb[0].mxu0
    %v968 = vadd.f32 0.0, %v967
    %v969 = vpop.f32.mrb[0].mxu0
    %970 = vmatprep.mubr.f32.mxu0 0.0
    %971 = vmatmul.mubr.f32.gmra.mrb[0].mxu0 %v425
    %v972 = vpop.f32.mrb[0].mxu0
    %v973 = vadd.f32 0.0, %v972
    %v974 = vpop.f32.mrb[0].mxu0
    %975 = vmatprep.mubr.f32.mxu0 0.0
    %976 = vmatmul.mubr.f32.gmra.mrb[0].mxu0 %v428
    %v977 = vpop.f32.mrb[0].mxu0
    %v978 = vadd.f32 0.0, %v977
    %v979 = vpop.f32.mrb[0].mxu0
    %980 = vmatprep.mubr.f32.mxu0 0.0
    %981 = vmatmul.mubr.f32.gmra.mrb[0].mxu0 %v431
    %v982 = vpop.f32.mrb[0].mxu0
    %v983 = vadd.f32 0.0, %v982
    %v984 = vpop.f32.mrb[0].mxu0
    %985 = vmatprep.mubr.f32.mxu0 0.0
    %986 = vmatmul.mubr.f32.gmra.mrb[0].mxu0 %v434
    %v987 = vpop.f32.mrb[0].mxu0
    %v988 = vadd.f32 0.0, %v987
    %v989 = vpop.f32.mrb[0].mxu0
    %990 = vmatprep.mubr.f32.mxu0 0.0
    %991 = vmatmul.mubr.f32.gmra.mrb[0].mxu0 %v437
    %v992 = vpop.f32.mrb[0].mxu0
    %v993 = vadd.f32 0.0, %v992
    %v994 = vpop.f32.mrb[0].mxu0
    %995 = vmatprep.mubr.f32.mxu0 0.0
    %996 = vmatmul.mubr.f32.gmra.mrb[0].mxu0 %v440
    %v997 = vpop.f32.mrb[0].mxu0
    %v998 = vadd.f32 0.0, %v997
    %v999 = vpop.f32.mrb[0].mxu0
    %1000 = vmatprep.mubr.f32.mxu0 0.0
    %1001 = vmatmul.mubr.f32.gmra.mrb[0].mxu0 %v443
    %v1002 = vpop.f32.mrb[0].mxu0
    %v1003 = vadd.f32 0.0, %v1002
    %v1004 = vpop.f32.mrb[0].mxu0
    %1005 = vmatprep.mubr.f32.mxu0 0.0
    %1006 = vmatmul.mubr.f32.gmra.mrb[0].mxu0 %v446
    %v1007 = vpop.f32.mrb[0].mxu0
    %v1008 = vadd.f32 0.0, %v1007
    %v1009 = vpop.f32.mrb[0].mxu0
    %1010 = vmatprep.mubr.f32.mxu0 0.0
    %1011 = vmatmul.mubr.f32.gmra.mrb[0].mxu0 %v449
    %v1012 = vpop.f32.mrb[0].mxu0
    %v1013 = vadd.f32 0.0, %v1012
    %v1014 = vpop.f32.mrb[0].mxu0
    %1015 = vmatprep.mubr.f32.mxu0 0.0
    %1016 = vmatmul.mubr.f32.gmra.mrb[0].mxu0 %v452
    %v1017 = vpop.f32.mrb[0].mxu0
    %v1018 = vadd.f32 0.0, %v1017
    %v1019 = vpop.f32.mrb[0].mxu0
    %1020 = vmatprep.mubr.f32.mxu0 0.0
    %1021 = vmatmul.mubr.f32.gmra.mrb[0].mxu0 %v455
    %v1022 = vpop.f32.mrb[0].mxu0
    %v1023 = vadd.f32 0.0, %v1022
    %v1024 = vpop.f32.mrb[0].mxu0
    %1025 = vmatprep.mubr.f32.mxu0 0.0
    %1026 = vmatmul.mubr.f32.gmra.mrb[0].mxu0 %v458
    %v1027 = vpop.f32.mrb[0].mxu0
    %v1028 = vadd.f32 0.0, %v1027
    %v1029 = vpop.f32.mrb[0].mxu0
    %1030 = vmatprep.mubr.f32.mxu0 0.0
    %1031 = vmatmul.mubr.f32.gmra.mrb[0].mxu0 %v461
    %v1032 = vpop.f32.mrb[0].mxu0
    %v1033 = vadd.f32 0.0, %v1032
    %v1034 = vpop.f32.mrb[0].mxu0
    %1035 = vmatprep.mubr.f32.mxu0 0.0
    %1036 = vmatmul.mubr.f32.gmra.mrb[0].mxu0 %v464
    %v1037 = vpop.f32.mrb[0].mxu0
    %v1038 = vadd.f32 0.0, %v1037
    %v1039 = vpop.f32.mrb[0].mxu0
    %1040 = vmatprep.mubr.f32.mxu0 0.0
    %1041 = vmatmul.mubr.f32.gmra.mrb[0].mxu0 %v467
    %v1042 = vpop.f32.mrb[0].mxu0
    %v1043 = vadd.f32 0.0, %v1042
    %v1044 = vpop.f32.mrb[0].mxu0
    %1045 = vmatprep.mubr.f32.mxu0 0.0
    %1046 = vmatmul.mubr.f32.gmra.mrb[0].mxu0 %v470
    %v1047 = vpop.f32.mrb[0].mxu0
    %v1048 = vadd.f32 0.0, %v1047
    %v1049 = vpop.f32.mrb[0].mxu0
    %1050 = vmatprep.mubr.f32.mxu0 0.0
    %1051 = vmatmul.mubr.f32.gmra.mrb[0].mxu0 %v473
    %v1052 = vpop.f32.mrb[0].mxu0
    %v1053 = vadd.f32 0.0, %v1052
    %v1054 = vpop.f32.mrb[0].mxu0
    %1055 = vmatprep.mubr.f32.mxu0 0.0
    %1056 = vmatmul.mubr.f32.gmra.mrb[0].mxu0 %v476
    %v1057 = vpop.f32.mrb[0].mxu0
    %v1058 = vadd.f32 0.0, %v1057
    %v1059 = vpop.f32.mrb[0].mxu0
    %1060 = vmatprep.mubr.f32.mxu0 0.0
    %1061 = vmatmul.mubr.f32.gmra.mrb[0].mxu0 %v479
    %v1062 = vpop.f32.mrb[0].mxu0
    %v1063 = vadd.f32 0.0, %v1062
    %v1064 = vpop.f32.mrb[0].mxu0
    %1065 = vmatprep.mubr.f32.mxu0 0.0
    %1066 = vmatmul.mubr.f32.gmra.mrb[0].mxu0 %v482
    %v1067 = vpop.f32.mrb[0].mxu0
    %v1068 = vadd.f32 0.0, %v1067
    %v1069 = vpop.f32.mrb[0].mxu0
    %1070 = vmatprep.mubr.f32.mxu0 0.0
    %1071 = vmatmul.mubr.f32.gmra.mrb[0].mxu0 %v485
    %v1072 = vpop.f32.mrb[0].mxu0
    %v1073 = vadd.f32 0.0, %v1072
    %v1074 = vpop.f32.mrb[0].mxu0
    %1075 = vmatprep.mubr.f32.mxu0 0.0
    %1076 = vmatmul.mubr.f32.gmra.mrb[0].mxu0 %v488
    %v1077 = vpop.f32.mrb[0].mxu0
    %v1078 = vadd.f32 0.0, %v1077
    %v1079 = vpop.f32.mrb[0].mxu0
    %1080 = vmatprep.mubr.f32.mxu0 0.0
    %1081 = vmatmul.mubr.f32.gmra.mrb[0].mxu0 %v491
    %v1082 = vpop.f32.mrb[0].mxu0
    %v1083 = vadd.f32 0.0, %v1082
    %v1084 = vpop.f32.mrb[0].mxu0
    %1085 = vmatprep.mubr.f32.mxu0 0.0
    %1086 = vmatmul.mubr.f32.gmra.mrb[0].mxu0 %v494
    %v1087 = vpop.f32.mrb[0].mxu0
    %v1088 = vadd.f32 0.0, %v1087
    %v1089 = vpop.f32.mrb[0].mxu0
    %1090 = vmatprep.mubr.f32.mxu0 0.0
    %1091 = vmatmul.mubr.f32.gmra.mrb[0].mxu0 %v497
    %v1092 = vpop.f32.mrb[0].mxu0
    %v1093 = vadd.f32 0.0, %v1092
    %v1094 = vpop.f32.mrb[0].mxu0
    %1095 = vmatprep.mubr.f32.mxu0 0.0
    %1096 = vmatmul.mubr.f32.gmra.mrb[0].mxu0 %v500
    %v1097 = vpop.f32.mrb[0].mxu0
    %v1098 = vadd.f32 0.0, %v1097
    %v1099 = vpop.f32.mrb[0].mxu0
    %1100 = vmatprep.mubr.f32.mxu0 0.0
    %1101 = vmatmul.mubr.f32.gmra.mrb[0].mxu0 %v503
    %v1102 = vpop.f32.mrb[0].mxu0
    %v1103 = vadd.f32 0.0, %v1102
    %v1104 = vpop.f32.mrb[0].mxu0
    %1105 = vmatprep.mubr.f32.mxu0 0.0
    %1106 = vmatmul.mubr.f32.gmra.mrb[0].mxu0 %v506
    %v1107 = vpop.f32.mrb[0].mxu0
    %v1108 = vadd.f32 0.0, %v1107
    %v1109 = vpop.f32.mrb[0].mxu0
    %1110 = vmatprep.mubr.f32.mxu0 0.0
    %1111 = vmatmul.mubr.f32.gmra.mrb[0].mxu0 %v509
    %v1112 = vpop.f32.mrb[0].mxu0
    %v1113 = vadd.f32 0.0, %v1112
    %v1114 = vpop.f32.mrb[0].mxu0
    %1115 = vmatprep.mubr.f32.mxu0 0.0
    %1116 = vmatmul.mubr.f32.gmra.mrb[0].mxu0 %v512
    %v1117 = vpop.f32.mrb[0].mxu0
    %v1118 = vadd.f32 0.0, %v1117
    %v1119 = vpop.f32.mrb[0].mxu0
    %1120 = vmatprep.mubr.f32.mxu0 0.0
    %1121 = vmatmul.mubr.f32.gmra.mrb[0].mxu0 %v515
    %v1122 = vpop.f32.mrb[0].mxu0
    %v1123 = vadd.f32 0.0, %v1122
    %v1124 = vpop.f32.mrb[0].mxu0
    %1125 = vmatprep.mubr.f32.mxu0 0.0
    %1126 = vmatmul.mubr.f32.gmra.mrb[0].mxu0 %v518
    %v1127 = vpop.f32.mrb[0].mxu0
    %v1128 = vadd.f32 0.0, %v1127
    %v1129 = vpop.f32.mrb[0].mxu0
    %1130 = vmatprep.mubr.f32.mxu0 0.0
    %1131 = vmatmul.mubr.f32.gmra.mrb[0].mxu0 %v521
    %v1132 = vpop.f32.mrb[0].mxu0
    %v1133 = vadd.f32 0.0, %v1132
    %v1134 = vpop.f32.mrb[0].mxu0
    %1135 = vmatprep.mubr.f32.mxu0 0.0
    %1136 = vmatmul.mubr.f32.gmra.mrb[0].mxu0 %v524
    %v1137 = vpop.f32.mrb[0].mxu0
    %v1138 = vadd.f32 0.0, %v1137
    %v1139 = vpop.f32.mrb[0].mxu0
    %1140 = vmatprep.mubr.f32.mxu0 0.0
    %1141 = vmatmul.mubr.f32.gmra.mrb[0].mxu0 %v527
    %v1142 = vpop.f32.mrb[0].mxu0
    %v1143 = vadd.f32 0.0, %v1142
    %v1144 = vpop.f32.mrb[0].mxu0
    %1145 = vmatprep.mubr.f32.mxu0 0.0
    %1146 = vmatmul.mubr.f32.gmra.mrb[0].mxu0 %v530
    %v1147 = vpop.f32.mrb[0].mxu0
    %v1148 = vadd.f32 0.0, %v1147
    %v1149 = vpop.f32.mrb[0].mxu0
    %1150 = vmatprep.mubr.f32.mxu0 0.0
    %1151 = vmatmul.mubr.f32.gmra.mrb[0].mxu0 %v533
    %v1152 = vpop.f32.mrb[0].mxu0
    %v1153 = vadd.f32 0.0, %v1152
    %v1154 = vpop.f32.mrb[0].mxu0
    %1155 = vmatprep.mubr.f32.mxu0 0.0
    %1156 = vmatmul.mubr.f32.gmra.mrb[0].mxu0 %v536
    %v1157 = vpop.f32.mrb[0].mxu0
    %v1158 = vadd.f32 0.0, %v1157
    %v1159 = vpop.f32.mrb[0].mxu0
    %1160 = vmatprep.mubr.f32.mxu0 0.0
    %1161 = vmatmul.mubr.f32.gmra.mrb[0].mxu0 %v539
    %v1162 = vpop.f32.mrb[0].mxu0
    %v1163 = vadd.f32 0.0, %v1162
    %v1164 = vpop.f32.mrb[0].mxu0
    %1165 = vmatprep.mubr.f32.mxu0 0.0
    %1166 = vmatmul.mubr.f32.gmra.mrb[0].mxu0 %v542
    %v1167 = vpop.f32.mrb[0].mxu0
    %v1168 = vadd.f32 0.0, %v1167
    %v1169 = vpop.f32.mrb[0].mxu0
    %1170 = vmatprep.mubr.f32.mxu0 0.0
    %1171 = vmatmul.mubr.f32.gmra.mrb[0].mxu0 %v545
    %v1172 = vpop.f32.mrb[0].mxu0
    %v1173 = vadd.f32 0.0, %v1172
    %v1174 = vpop.f32.mrb[0].mxu0
    %1175 = vmatprep.mubr.f32.mxu0 0.0
    %1176 = vmatmul.mubr.f32.gmra.mrb[0].mxu0 %v548
    %v1177 = vpop.f32.mrb[0].mxu0
    %v1178 = vadd.f32 0.0, %v1177
    %v1179 = vpop.f32.mrb[0].mxu0
    %1180 = vmatprep.mubr.f32.mxu0 0.0
    %1181 = vmatmul.mubr.f32.gmra.mrb[0].mxu0 %v551
    %v1182 = vpop.f32.mrb[0].mxu0
    %v1183 = vadd.f32 0.0, %v1182
    %v1184 = vpop.f32.mrb[0].mxu0
    %1185 = vmatprep.mubr.f32.mxu0 0.0
    %1186 = vmatmul.mubr.f32.gmra.mrb[0].mxu0 %v554
    %v1187 = vpop.f32.mrb[0].mxu0
    %v1188 = vadd.f32 0.0, %v1187
    %v1189 = vpop.f32.mrb[0].mxu0
    %1190 = vmatprep.mubr.f32.mxu0 0.0
    %1191 = vmatmul.mubr.f32.gmra.mrb[0].mxu0 %v557
    %v1192 = vpop.f32.mrb[0].mxu0
    %v1193 = vadd.f32 0.0, %v1192
    %v1194 = vpop.f32.mrb[0].mxu0
    %1195 = vmatprep.mubr.f32.mxu0 0.0
    %1196 = vmatmul.mubr.f32.gmra.mrb[0].mxu0 %v560
    %v1197 = vpop.f32.mrb[0].mxu0
    %v1198 = vadd.f32 0.0, %v1197
    %v1199 = vpop.f32.mrb[0].mxu0
    %1200 = vmatprep.mubr.f32.mxu0 0.0
    %1201 = vmatmul.mubr.f32.gmra.mrb[0].mxu0 %v563
    %v1202 = vpop.f32.mrb[0].mxu0
    %v1203 = vadd.f32 0.0, %v1202
    %v1204 = vpop.f32.mrb[0].mxu0
    %1205 = vmatprep.mubr.f32.mxu0 0.0
    %1206 = vmatmul.mubr.f32.gmra.mrb[0].mxu0 %v566
    %v1207 = vpop.f32.mrb[0].mxu0
    %v1208 = vadd.f32 0.0, %v1207
    %v1209 = vpop.f32.mrb[0].mxu0
    %1210 = vmatprep.mubr.f32.mxu0 0.0
    %1211 = vmatmul.mubr.f32.gmra.mrb[0].mxu0 %v569
    %v1212 = vpop.f32.mrb[0].mxu0
    %v1213 = vadd.f32 0.0, %v1212
    %v1214 = vpop.f32.mrb[0].mxu0
    %1215 = vmatprep.mubr.f32.mxu0 0.0
    %1216 = vmatmul.mubr.f32.gmra.mrb[0].mxu0 %v572
    %v1217 = vpop.f32.mrb[0].mxu0
    %v1218 = vadd.f32 0.0, %v1217
    %v1219 = vpop.f32.mrb[0].mxu0
    %1220 = vmatprep.mubr.f32.mxu0 0.0
    %1221 = vmatmul.mubr.f32.gmra.mrb[0].mxu0 %v575
    %v1222 = vpop.f32.mrb[0].mxu0
    %v1223 = vadd.f32 0.0, %v1222
    %v1224 = vpop.f32.mrb[0].mxu0
    %1225 = vmatprep.mubr.f32.mxu0 0.0
    %1226 = vmatmul.mubr.f32.gmra.mrb[0].mxu0 %v578
    %v1227 = vpop.f32.mrb[0].mxu0
    %v1228 = vadd.f32 0.0, %v1227
    %v1229 = vpop.f32.mrb[0].mxu0
    %1230 = vmatprep.mubr.f32.mxu0 0.0
    %1231 = vmatmul.mubr.f32.gmra.mrb[0].mxu0 %v581
    %v1232 = vpop.f32.mrb[0].mxu0
    %v1233 = vadd.f32 0.0, %v1232
    %v1234 = vpop.f32.mrb[0].mxu0
    %1235 = vmatprep.mubr.f32.mxu0 0.0
    %1236 = vmatmul.mubr.f32.gmra.mrb[0].mxu0 %v584
    %v1237 = vpop.f32.mrb[0].mxu0
    %v1238 = vadd.f32 0.0, %v1237
    %v1239 = vpop.f32.mrb[0].mxu0
    %1240 = vmatprep.mubr.f32.mxu0 0.0
    %1241 = vmatmul.mubr.f32.gmra.mrb[0].mxu0 %v587
    %v1242 = vpop.f32.mrb[0].mxu0
    %v1243 = vadd.f32 0.0, %v1242
    %v1244 = vpop.f32.mrb[0].mxu0
    %1245 = vmatprep.mubr.f32.mxu0 0.0
    %1246 = vmatmul.mubr.f32.gmra.mrb[0].mxu0 %v590
    %v1247 = vpop.f32.mrb[0].mxu0
    %v1248 = vadd.f32 0.0, %v1247
    %v1249 = vpop.f32.mrb[0].mxu0
    %1250 = vmatprep.mubr.f32.mxu0 0.0
    %1251 = vmatmul.mubr.f32.gmra.mrb[0].mxu0 %v593
    %v1252 = vpop.f32.mrb[0].mxu0
    %v1253 = vadd.f32 0.0, %v1252
    %v1254 = vpop.f32.mrb[0].mxu0
    %1255 = vmatprep.mubr.f32.mxu0 0.0
    %1256 = vmatmul.mubr.f32.gmra.mrb[0].mxu0 %v596
    %v1257 = vpop.f32.mrb[0].mxu0
    %v1258 = vadd.f32 0.0, %v1257
    %v1259 = vpop.f32.mrb[0].mxu0
    %1260 = vmatprep.mubr.f32.mxu0 0.0
    %1261 = vmatmul.mubr.f32.gmra.mrb[0].mxu0 %v599
    %v1262 = vpop.f32.mrb[0].mxu0
    %v1263 = vadd.f32 0.0, %v1262
    %v1264 = vpop.f32.mrb[0].mxu0
    %1265 = vmatprep.mubr.f32.mxu0 0.0
    %1266 = vmatmul.mubr.f32.gmra.mrb[0].mxu0 %v602
    %v1267 = vpop.f32.mrb[0].mxu0
    %v1268 = vadd.f32 0.0, %v1267
    %v1269 = vpop.f32.mrb[0].mxu0
    %1270 = vmatprep.mubr.f32.mxu0 0.0
    %1271 = vmatmul.mubr.f32.gmra.mrb[0].mxu0 %v605
    %v1272 = vpop.f32.mrb[0].mxu0
    %v1273 = vadd.f32 0.0, %v1272
    %v1274 = vpop.f32.mrb[0].mxu0
    %1275 = vmatprep.mubr.f32.mxu0 0.0
    %1276 = vmatmul.mubr.f32.gmra.mrb[0].mxu0 %v608
    %v1277 = vpop.f32.mrb[0].mxu0
    %v1278 = vadd.f32 0.0, %v1277
    %v1279 = vpop.f32.mrb[0].mxu0
    %1280 = vmatprep.mubr.f32.mxu0 0.0
    %1281 = vmatmul.mubr.f32.gmra.mrb[0].mxu0 %v611
    %v1282 = vpop.f32.mrb[0].mxu0
    %v1283 = vadd.f32 0.0, %v1282
    %v1284 = vpop.f32.mrb[0].mxu0
    %1285 = vmatprep.mubr.f32.mxu0 0.0
    %1286 = vmatmul.mubr.f32.gmra.mrb[0].mxu0 %v614
    %v1287 = vpop.f32.mrb[0].mxu0
    %v1288 = vadd.f32 0.0, %v1287
    %v1289 = vpop.f32.mrb[0].mxu0
    %1290 = vmatprep.mubr.f32.mxu0 0.0
    %1291 = vmatmul.mubr.f32.gmra.mrb[0].mxu0 %v617
    %v1292 = vpop.f32.mrb[0].mxu0
    %v1293 = vadd.f32 0.0, %v1292
    %v1294 = vpop.f32.mrb[0].mxu0
    %1295 = vmatprep.mubr.f32.mxu0 0.0
    %1296 = vmatmul.mubr.f32.gmra.mrb[0].mxu0 %v620
    %v1297 = vpop.f32.mrb[0].mxu0
    %v1298 = vadd.f32 0.0, %v1297
    %v1299 = vpop.f32.mrb[0].mxu0
    %1300 = vmatprep.mubr.f32.mxu0 0.0
    %1301 = vmatmul.mubr.f32.gmra.mrb[0].mxu0 %v623
    %v1302 = vpop.f32.mrb[0].mxu0
    %v1303 = vadd.f32 0.0, %v1302
    %v1304 = vpop.f32.mrb[0].mxu0
    %1305 = vmatprep.mubr.f32.mxu0 0.0
    %1306 = vmatmul.mubr.f32.gmra.mrb[0].mxu0 %v626
    %v1307 = vpop.f32.mrb[0].mxu0
    %v1308 = vadd.f32 0.0, %v1307
    %v1309 = vpop.f32.mrb[0].mxu0
    %1310 = vmatprep.mubr.f32.mxu0 0.0
    %1311 = vmatmul.mubr.f32.gmra.mrb[0].mxu0 %v629
    %v1312 = vpop.f32.mrb[0].mxu0
    %v1313 = vadd.f32 0.0, %v1312
    %v1314 = vpop.f32.mrb[0].mxu0
    %1315 = vmatprep.mubr.f32.mxu0 0.0
    %1316 = vmatmul.mubr.f32.gmra.mrb[0].mxu0 %v632
    %v1317 = vpop.f32.mrb[0].mxu0
    %v1318 = vadd.f32 0.0, %v1317
    %v1319 = vpop.f32.mrb[0].mxu0
    %1320 = vmatprep.mubr.f32.mxu0 0.0
    %1321 = vmatmul.mubr.f32.gmra.mrb[0].mxu0 %v635
    %v1322 = vpop.f32.mrb[0].mxu0
    %v1323 = vadd.f32 0.0, %v1322
    %v1324 = vpop.f32.mrb[0].mxu0
    %1325 = vmatprep.mubr.f32.mxu0 0.0
    %1326 = vmatmul.mubr.f32.gmra.mrb[0].mxu0 %v638
    %v1327 = vpop.f32.mrb[0].mxu0
    %v1328 = vadd.f32 0.0, %v1327
    %v1329 = vpop.f32.mrb[0].mxu0
    %1330 = vmatprep.mubr.f32.mxu0 0.0
    %1331 = vmatmul.mubr.f32.gmra.mrb[0].mxu0 %v641
    %v1332 = vpop.f32.mrb[0].mxu0
    %v1333 = vadd.f32 0.0, %v1332
    %v1334 = vpop.f32.mrb[0].mxu0
    %1335 = vmatprep.mubr.f32.mxu0 0.0
    %1336 = vmatmul.mubr.f32.gmra.mrb[0].mxu0 %v644
    %v1337 = vpop.f32.mrb[0].mxu0
    %v1338 = vadd.f32 0.0, %v1337
    %v1339 = vpop.f32.mrb[0].mxu0
    %1340 = vmatprep.mubr.f32.mxu0 0.0
    %1341 = vmatmul.mubr.f32.gmra.mrb[0].mxu0 %v647
    %v1342 = vpop.f32.mrb[0].mxu0
    %v1343 = vadd.f32 0.0, %v1342
    %v1344 = vpop.f32.mrb[0].mxu0
    %1345 = vmatprep.mubr.f32.mxu0 0.0
    %1346 = vmatmul.mubr.f32.gmra.mrb[0].mxu0 %v650
    %v1347 = vpop.f32.mrb[0].mxu0
    %v1348 = vadd.f32 0.0, %v1347
    %v1349 = vpop.f32.mrb[0].mxu0
    %1350 = vmatprep.mubr.f32.mxu0 0.0
    %1351 = vmatmul.mubr.f32.gmra.mrb[0].mxu0 %v653
    %v1352 = vpop.f32.mrb[0].mxu0
    %v1353 = vadd.f32 0.0, %v1352
    %v1354 = vpop.f32.mrb[0].mxu0
    %1355 = vmatprep.mubr.f32.mxu0 0.0
    %1356 = vmatmul.mubr.f32.gmra.mrb[0].mxu0 %v656
    %v1357 = vpop.f32.mrb[0].mxu0
    %v1358 = vadd.f32 0.0, %v1357
    %v1359 = vpop.f32.mrb[0].mxu0
    %1360 = vmatprep.mubr.f32.mxu0 0.0
    %1361 = vmatmul.mubr.f32.gmra.mrb[0].mxu0 %v659
    %v1362 = vpop.f32.mrb[0].mxu0
    %v1363 = vadd.f32 0.0, %v1362
    %v1364 = vpop.f32.mrb[0].mxu0
    %1365 = vdwg.mxu0
    %v1367 = vcombine.high %v244, %v244
    %v1369 = vunpack.c.l.s4 1966171168
    %v1370 = vunpack.c.0.s8 %v1369
    %v1371 = vlaneseq
    %v1372 = vshrl.u32 %v1371, 7
    %v1373 = vsub.s32 %v1370, %v1372
    %v1374 = vrot.slane %v244, %v1373
    %v1376 = vunpack.c.l.s4 1966171168
    %v1377 = vunpack.c.0.s8 %v1376
    %v1378 = vlaneseq
    %v1379 = vshrl.u32 %v1378, 7
    %v1380 = vsub.s32 %v1377, %v1379
    %v1381 = vrot.slane %v1367, %v1380
    %v1382 = vcombine.high %v1374, %v1374
    %v1383 = vcombine.high %v1381, %v1381
    %v1385 = vunpack.c.l.s4 1966171168
    %v1386 = vunpack.c.0.s8 %v1385
    %v1387 = vlaneseq
    %v1388 = vshrl.u32 %v1387, 7
    %v1389 = vsub.s32 %v1386, %v1388
    %v1390 = vrot.slane %v1374, %v1389
    %v1392 = vunpack.c.l.s4 1966171168
    %v1393 = vunpack.c.0.s8 %v1392
    %v1394 = vlaneseq
    %v1395 = vshrl.u32 %v1394, 7
    %v1396 = vsub.s32 %v1393, %v1395
    %v1397 = vrot.slane %v1381, %v1396
    %v1399 = vunpack.c.l.s4 1966171168
    %v1400 = vunpack.c.0.s8 %v1399
    %v1401 = vlaneseq
    %v1402 = vshrl.u32 %v1401, 7
    %v1403 = vsub.s32 %v1400, %v1402
    %v1404 = vrot.slane %v1382, %v1403
    %v1406 = vunpack.c.l.s4 1966171168
    %v1407 = vunpack.c.0.s8 %v1406
    %v1408 = vlaneseq
    %v1409 = vshrl.u32 %v1408, 7
    %v1410 = vsub.s32 %v1407, %v1409
    %v1411 = vrot.slane %v1383, %v1410
    %v1412 = vcombine.high %v1390, %v1390
    %v1413 = vcombine.high %v1397, %v1397
    %v1414 = vcombine.high %v1404, %v1404
    %v1415 = vcombine.high %v1411, %v1411
    %v1416 = vlaneseq
    %v1417 = vshrl.u32 %v1416, 7
    %v1418 = vsub.s32 0, %v1417
    %v1419 = vrot.slane %v1390, %v1418
    %v1420 = vlaneseq
    %v1421 = vshrl.u32 %v1420, 7
    %v1422 = vsub.s32 0, %v1421
    %v1423 = vrot.slane %v1404, %v1422
    %v1424 = vlaneseq
    %v1425 = vshrl.u32 %v1424, 7
    %v1426 = vsub.s32 0, %v1425
    %v1427 = vrot.slane %v1412, %v1426
    %v1428 = vlaneseq
    %v1429 = vshrl.u32 %v1428, 7
    %v1430 = vsub.s32 0, %v1429
    %v1431 = vrot.slane %v1414, %v1430
    %v1432 = vlaneseq
    %v1433 = vshrl.u32 %v1432, 7
    %v1434 = vsub.s32 0, %v1433
    %v1435 = vrot.slane %v1397, %v1434
    %v1436 = vlaneseq
    %v1437 = vshrl.u32 %v1436, 7
    %v1438 = vsub.s32 0, %v1437
    %v1439 = vrot.slane %v1411, %v1438
    %v1440 = vlaneseq
    %v1441 = vshrl.u32 %v1440, 7
    %v1442 = vsub.s32 0, %v1441
    %v1443 = vrot.slane %v1413, %v1442
    %v1444 = vlaneseq
    %v1445 = vshrl.u32 %v1444, 7
    %v1446 = vsub.s32 0, %v1445
    %v1447 = vrot.slane %v1415, %v1446
    %1448 = vrot.lane.b32.xlu0 %v1419, 96
    %v1449 = vpop.permute.xlu0 %1448
    %1450 = vrot.lane.b32.xlu0 %v1423, 96
    %v1451 = vpop.permute.xlu0 %1450
    %1452 = vrot.lane.b32.xlu0 %v1427, 96
    %v1453 = vpop.permute.xlu0 %1452
    %1454 = vrot.lane.b32.xlu0 %v1431, 96
    %v1455 = vpop.permute.xlu0 %1454
    %1456 = vrot.lane.b32.xlu0 %v1435, 96
    %v1457 = vpop.permute.xlu0 %1456
    %1458 = vrot.lane.b32.xlu0 %v1439, 96
    %v1459 = vpop.permute.xlu0 %1458
    %1460 = vrot.lane.b32.xlu0 %v1443, 96
    %v1461 = vpop.permute.xlu0 %1460
    %1462 = vrot.lane.b32.xlu0 %v1447, 96
    %v1463 = vpop.permute.xlu0 %1462
    %v1472 = vadd.f32 %v728, %v1449
    %v1473 = vadd.f32 %v733, %v1449
    %v1474 = vadd.f32 %v738, %v1449
    %v1475 = vadd.f32 %v743, %v1449
    %v1476 = vadd.f32 %v748, %v1449
    %v1477 = vadd.f32 %v753, %v1449
    %v1478 = vadd.f32 %v758, %v1449
    %v1479 = vadd.f32 %v763, %v1449
    %v1480 = vadd.f32 %v768, %v1449
    %v1481 = vadd.f32 %v773, %v1449
    %v1482 = vadd.f32 %v778, %v1449
    %v1483 = vadd.f32 %v783, %v1449
    %v1484 = vadd.f32 %v788, %v1449
    %v1485 = vadd.f32 %v793, %v1449
    %v1486 = vadd.f32 %v798, %v1449
    %v1487 = vadd.f32 %v803, %v1449
    %v1488 = vadd.f32 %v808, %v1451
    %v1489 = vadd.f32 %v813, %v1451
    %v1490 = vadd.f32 %v818, %v1451
    %v1491 = vadd.f32 %v823, %v1451
    %v1492 = vadd.f32 %v828, %v1451
    %v1493 = vadd.f32 %v833, %v1451
    %v1494 = vadd.f32 %v838, %v1451
    %v1495 = vadd.f32 %v843, %v1451
    %v1496 = vadd.f32 %v848, %v1451
    %v1497 = vadd.f32 %v853, %v1451
    %v1498 = vadd.f32 %v858, %v1451
    %v1499 = vadd.f32 %v863, %v1451
    %v1500 = vadd.f32 %v868, %v1451
    %v1501 = vadd.f32 %v873, %v1451
    %v1502 = vadd.f32 %v878, %v1451
    %v1503 = vadd.f32 %v883, %v1451
    %v1504 = vadd.f32 %v888, %v1453
    %v1505 = vadd.f32 %v893, %v1453
    %v1506 = vadd.f32 %v898, %v1453
    %v1507 = vadd.f32 %v903, %v1453
    %v1508 = vadd.f32 %v908, %v1453
    %v1509 = vadd.f32 %v913, %v1453
    %v1510 = vadd.f32 %v918, %v1453
    %v1511 = vadd.f32 %v923, %v1453
    %v1512 = vadd.f32 %v928, %v1453
    %v1513 = vadd.f32 %v933, %v1453
    %v1514 = vadd.f32 %v938, %v1453
    %v1515 = vadd.f32 %v943, %v1453
    %v1516 = vadd.f32 %v948, %v1453
    %v1517 = vadd.f32 %v953, %v1453
    %v1518 = vadd.f32 %v958, %v1453
    %v1519 = vadd.f32 %v963, %v1453
    %v1520 = vadd.f32 %v968, %v1455
    %v1521 = vadd.f32 %v973, %v1455
    %v1522 = vadd.f32 %v978, %v1455
    %v1523 = vadd.f32 %v983, %v1455
    %v1524 = vadd.f32 %v988, %v1455
    %v1525 = vadd.f32 %v993, %v1455
    %v1526 = vadd.f32 %v998, %v1455
    %v1527 = vadd.f32 %v1003, %v1455
    %v1528 = vadd.f32 %v1008, %v1455
    %v1529 = vadd.f32 %v1013, %v1455
    %v1530 = vadd.f32 %v1018, %v1455
    %v1531 = vadd.f32 %v1023, %v1455
    %v1532 = vadd.f32 %v1028, %v1455
    %v1533 = vadd.f32 %v1033, %v1455
    %v1534 = vadd.f32 %v1038, %v1455
    %v1535 = vadd.f32 %v1043, %v1455
    %v1536 = vadd.f32 %v1048, %v1457
    %v1537 = vadd.f32 %v1053, %v1457
    %v1538 = vadd.f32 %v1058, %v1457
    %v1539 = vadd.f32 %v1063, %v1457
    %v1540 = vadd.f32 %v1068, %v1457
    %v1541 = vadd.f32 %v1073, %v1457
    %v1542 = vadd.f32 %v1078, %v1457
    %v1543 = vadd.f32 %v1083, %v1457
    %v1544 = vadd.f32 %v1088, %v1457
    %v1545 = vadd.f32 %v1093, %v1457
    %v1546 = vadd.f32 %v1098, %v1457
    %v1547 = vadd.f32 %v1103, %v1457
    %v1548 = vadd.f32 %v1108, %v1457
    %v1549 = vadd.f32 %v1113, %v1457
    %v1550 = vadd.f32 %v1118, %v1457
    %v1551 = vadd.f32 %v1123, %v1457
    %v1552 = vadd.f32 %v1128, %v1459
    %v1553 = vadd.f32 %v1133, %v1459
    %v1554 = vadd.f32 %v1138, %v1459
    %v1555 = vadd.f32 %v1143, %v1459
    %v1556 = vadd.f32 %v1148, %v1459
    %v1557 = vadd.f32 %v1153, %v1459
    %v1558 = vadd.f32 %v1158, %v1459
    %v1559 = vadd.f32 %v1163, %v1459
    %v1560 = vadd.f32 %v1168, %v1459
    %v1561 = vadd.f32 %v1173, %v1459
    %v1562 = vadd.f32 %v1178, %v1459
    %v1563 = vadd.f32 %v1183, %v1459
    %v1564 = vadd.f32 %v1188, %v1459
    %v1565 = vadd.f32 %v1193, %v1459
    %v1566 = vadd.f32 %v1198, %v1459
    %v1567 = vadd.f32 %v1203, %v1459
    %v1568 = vadd.f32 %v1208, %v1461
    %v1569 = vadd.f32 %v1213, %v1461
    %v1570 = vadd.f32 %v1218, %v1461
    %v1571 = vadd.f32 %v1223, %v1461
    %v1572 = vadd.f32 %v1228, %v1461
    %v1573 = vadd.f32 %v1233, %v1461
    %v1574 = vadd.f32 %v1238, %v1461
    %v1575 = vadd.f32 %v1243, %v1461
    %v1576 = vadd.f32 %v1248, %v1461
    %v1577 = vadd.f32 %v1253, %v1461
    %v1578 = vadd.f32 %v1258, %v1461
    %v1579 = vadd.f32 %v1263, %v1461
    %v1580 = vadd.f32 %v1268, %v1461
    %v1581 = vadd.f32 %v1273, %v1461
    %v1582 = vadd.f32 %v1278, %v1461
    %v1583 = vadd.f32 %v1283, %v1461
    %v1584 = vadd.f32 %v1288, %v1463
    %v1585 = vadd.f32 %v1293, %v1463
    %v1586 = vadd.f32 %v1298, %v1463
    %v1587 = vadd.f32 %v1303, %v1463
    %v1588 = vadd.f32 %v1308, %v1463
    %v1589 = vadd.f32 %v1313, %v1463
    %v1590 = vadd.f32 %v1318, %v1463
    %v1591 = vadd.f32 %v1323, %v1463
    %v1592 = vadd.f32 %v1328, %v1463
    %v1593 = vadd.f32 %v1333, %v1463
    %v1594 = vadd.f32 %v1338, %v1463
    %v1595 = vadd.f32 %v1343, %v1463
    %v1596 = vadd.f32 %v1348, %v1463
    %v1597 = vadd.f32 %v1353, %v1463
    %v1598 = vadd.f32 %v1358, %v1463
    %v1599 = vadd.f32 %v1363, %v1463
    %v1600 = vld [vmem:[%s7] sm:$0x1]
    %v1602 = vlaneseq
    %v1603 = vshrl.u32 %v1602, 7
    %v1604 = vsub.s32 0, %v1603
    %v1605 = vrot.slane %v1600, %v1604
    %v1607 = vadd.f32 %v1472, %v1605
    %v1608 = vadd.f32 %v1473, %v1605
    %v1609 = vadd.f32 %v1474, %v1605
    %v1610 = vadd.f32 %v1475, %v1605
    %v1611 = vadd.f32 %v1476, %v1605
    %v1612 = vadd.f32 %v1477, %v1605
    %v1613 = vadd.f32 %v1478, %v1605
    %v1614 = vadd.f32 %v1479, %v1605
    %v1615 = vadd.f32 %v1480, %v1605
    %v1616 = vadd.f32 %v1481, %v1605
    %v1617 = vadd.f32 %v1482, %v1605
    %v1618 = vadd.f32 %v1483, %v1605
    %v1619 = vadd.f32 %v1484, %v1605
    %v1620 = vadd.f32 %v1485, %v1605
    %v1621 = vadd.f32 %v1486, %v1605
    %v1622 = vadd.f32 %v1487, %v1605
    %v1623 = vadd.f32 %v1488, %v1605
    %v1624 = vadd.f32 %v1489, %v1605
    %v1625 = vadd.f32 %v1490, %v1605
    %v1626 = vadd.f32 %v1491, %v1605
    %v1627 = vadd.f32 %v1492, %v1605
    %v1628 = vadd.f32 %v1493, %v1605
    %v1629 = vadd.f32 %v1494, %v1605
    %v1630 = vadd.f32 %v1495, %v1605
    %v1631 = vadd.f32 %v1496, %v1605
    %v1632 = vadd.f32 %v1497, %v1605
    %v1633 = vadd.f32 %v1498, %v1605
    %v1634 = vadd.f32 %v1499, %v1605
    %v1635 = vadd.f32 %v1500, %v1605
    %v1636 = vadd.f32 %v1501, %v1605
    %v1637 = vadd.f32 %v1502, %v1605
    %v1638 = vadd.f32 %v1503, %v1605
    %v1639 = vadd.f32 %v1504, %v1605
    %v1640 = vadd.f32 %v1505, %v1605
    %v1641 = vadd.f32 %v1506, %v1605
    %v1642 = vadd.f32 %v1507, %v1605
    %v1643 = vadd.f32 %v1508, %v1605
    %v1644 = vadd.f32 %v1509, %v1605
    %v1645 = vadd.f32 %v1510, %v1605
    %v1646 = vadd.f32 %v1511, %v1605
    %v1647 = vadd.f32 %v1512, %v1605
    %v1648 = vadd.f32 %v1513, %v1605
    %v1649 = vadd.f32 %v1514, %v1605
    %v1650 = vadd.f32 %v1515, %v1605
    %v1651 = vadd.f32 %v1516, %v1605
    %v1652 = vadd.f32 %v1517, %v1605
    %v1653 = vadd.f32 %v1518, %v1605
    %v1654 = vadd.f32 %v1519, %v1605
    %v1655 = vadd.f32 %v1520, %v1605
    %v1656 = vadd.f32 %v1521, %v1605
    %v1657 = vadd.f32 %v1522, %v1605
    %v1658 = vadd.f32 %v1523, %v1605
    %v1659 = vadd.f32 %v1524, %v1605
    %v1660 = vadd.f32 %v1525, %v1605
    %v1661 = vadd.f32 %v1526, %v1605
    %v1662 = vadd.f32 %v1527, %v1605
    %v1663 = vadd.f32 %v1528, %v1605
    %v1664 = vadd.f32 %v1529, %v1605
    %v1665 = vadd.f32 %v1530, %v1605
    %v1666 = vadd.f32 %v1531, %v1605
    %v1667 = vadd.f32 %v1532, %v1605
    %v1668 = vadd.f32 %v1533, %v1605
    %v1669 = vadd.f32 %v1534, %v1605
    %v1670 = vadd.f32 %v1535, %v1605
    %v1671 = vadd.f32 %v1536, %v1605
    %v1672 = vadd.f32 %v1537, %v1605
    %v1673 = vadd.f32 %v1538, %v1605
    %v1674 = vadd.f32 %v1539, %v1605
    %v1675 = vadd.f32 %v1540, %v1605
    %v1676 = vadd.f32 %v1541, %v1605
    %v1677 = vadd.f32 %v1542, %v1605
    %v1678 = vadd.f32 %v1543, %v1605
    %v1679 = vadd.f32 %v1544, %v1605
    %v1680 = vadd.f32 %v1545, %v1605
    %v1681 = vadd.f32 %v1546, %v1605
    %v1682 = vadd.f32 %v1547, %v1605
    %v1683 = vadd.f32 %v1548, %v1605
    %v1684 = vadd.f32 %v1549, %v1605
    %v1685 = vadd.f32 %v1550, %v1605
    %v1686 = vadd.f32 %v1551, %v1605
    %v1687 = vadd.f32 %v1552, %v1605
    %v1688 = vadd.f32 %v1553, %v1605
    %v1689 = vadd.f32 %v1554, %v1605
    %v1690 = vadd.f32 %v1555, %v1605
    %v1691 = vadd.f32 %v1556, %v1605
    %v1692 = vadd.f32 %v1557, %v1605
    %v1693 = vadd.f32 %v1558, %v1605
    %v1694 = vadd.f32 %v1559, %v1605
    %v1695 = vadd.f32 %v1560, %v1605
    %v1696 = vadd.f32 %v1561, %v1605
    %v1697 = vadd.f32 %v1562, %v1605
    %v1698 = vadd.f32 %v1563, %v1605
    %v1699 = vadd.f32 %v1564, %v1605
    %v1700 = vadd.f32 %v1565, %v1605
    %v1701 = vadd.f32 %v1566, %v1605
    %v1702 = vadd.f32 %v1567, %v1605
    %v1703 = vadd.f32 %v1568, %v1605
    %v1704 = vadd.f32 %v1569, %v1605
    %v1705 = vadd.f32 %v1570, %v1605
    %v1706 = vadd.f32 %v1571, %v1605
    %v1707 = vadd.f32 %v1572, %v1605
    %v1708 = vadd.f32 %v1573, %v1605
    %v1709 = vadd.f32 %v1574, %v1605
    %v1710 = vadd.f32 %v1575, %v1605
    %v1711 = vadd.f32 %v1576, %v1605
    %v1712 = vadd.f32 %v1577, %v1605
    %v1713 = vadd.f32 %v1578, %v1605
    %v1714 = vadd.f32 %v1579, %v1605
    %v1715 = vadd.f32 %v1580, %v1605
    %v1716 = vadd.f32 %v1581, %v1605
    %v1717 = vadd.f32 %v1582, %v1605
    %v1718 = vadd.f32 %v1583, %v1605
    %v1719 = vadd.f32 %v1584, %v1605
    %v1720 = vadd.f32 %v1585, %v1605
    %v1721 = vadd.f32 %v1586, %v1605
    %v1722 = vadd.f32 %v1587, %v1605
    %v1723 = vadd.f32 %v1588, %v1605
    %v1724 = vadd.f32 %v1589, %v1605
    %v1725 = vadd.f32 %v1590, %v1605
    %v1726 = vadd.f32 %v1591, %v1605
    %v1727 = vadd.f32 %v1592, %v1605
    %v1728 = vadd.f32 %v1593, %v1605
    %v1729 = vadd.f32 %v1594, %v1605
    %v1730 = vadd.f32 %v1595, %v1605
    %v1731 = vadd.f32 %v1596, %v1605
    %v1732 = vadd.f32 %v1597, %v1605
    %v1733 = vadd.f32 %v1598, %v1605
    %v1734 = vadd.f32 %v1599, %v1605
    %v1735 = vmax.f32 %v1607, 0.0
    %v1736 = vmax.f32 %v1608, 0.0
    %v1737 = vmax.f32 %v1609, 0.0
    %v1738 = vmax.f32 %v1610, 0.0
    %v1739 = vmax.f32 %v1611, 0.0
    %v1740 = vmax.f32 %v1612, 0.0
    %v1741 = vmax.f32 %v1613, 0.0
    %v1742 = vmax.f32 %v1614, 0.0
    %v1743 = vmax.f32 %v1615, 0.0
    %v1744 = vmax.f32 %v1616, 0.0
    %v1745 = vmax.f32 %v1617, 0.0
    %v1746 = vmax.f32 %v1618, 0.0
    %v1747 = vmax.f32 %v1619, 0.0
    %v1748 = vmax.f32 %v1620, 0.0
    %v1749 = vmax.f32 %v1621, 0.0
    %v1750 = vmax.f32 %v1622, 0.0
    %v1751 = vmax.f32 %v1623, 0.0
    %v1752 = vmax.f32 %v1624, 0.0
    %v1753 = vmax.f32 %v1625, 0.0
    %v1754 = vmax.f32 %v1626, 0.0
    %v1755 = vmax.f32 %v1627, 0.0
    %v1756 = vmax.f32 %v1628, 0.0
    %v1757 = vmax.f32 %v1629, 0.0
    %v1758 = vmax.f32 %v1630, 0.0
    %v1759 = vmax.f32 %v1631, 0.0
    %v1760 = vmax.f32 %v1632, 0.0
    %v1761 = vmax.f32 %v1633, 0.0
    %v1762 = vmax.f32 %v1634, 0.0
    %v1763 = vmax.f32 %v1635, 0.0
    %v1764 = vmax.f32 %v1636, 0.0
    %v1765 = vmax.f32 %v1637, 0.0
    %v1766 = vmax.f32 %v1638, 0.0
    %v1767 = vmax.f32 %v1639, 0.0
    %v1768 = vmax.f32 %v1640, 0.0
    %v1769 = vmax.f32 %v1641, 0.0
    %v1770 = vmax.f32 %v1642, 0.0
    %v1771 = vmax.f32 %v1643, 0.0
    %v1772 = vmax.f32 %v1644, 0.0
    %v1773 = vmax.f32 %v1645, 0.0
    %v1774 = vmax.f32 %v1646, 0.0
    %v1775 = vmax.f32 %v1647, 0.0
    %v1776 = vmax.f32 %v1648, 0.0
    %v1777 = vmax.f32 %v1649, 0.0
    %v1778 = vmax.f32 %v1650, 0.0
    %v1779 = vmax.f32 %v1651, 0.0
    %v1780 = vmax.f32 %v1652, 0.0
    %v1781 = vmax.f32 %v1653, 0.0
    %v1782 = vmax.f32 %v1654, 0.0
    %v1783 = vmax.f32 %v1655, 0.0
    %v1784 = vmax.f32 %v1656, 0.0
    %v1785 = vmax.f32 %v1657, 0.0
    %v1786 = vmax.f32 %v1658, 0.0
    %v1787 = vmax.f32 %v1659, 0.0
    %v1788 = vmax.f32 %v1660, 0.0
    %v1789 = vmax.f32 %v1661, 0.0
    %v1790 = vmax.f32 %v1662, 0.0
    %v1791 = vmax.f32 %v1663, 0.0
    %v1792 = vmax.f32 %v1664, 0.0
    %v1793 = vmax.f32 %v1665, 0.0
    %v1794 = vmax.f32 %v1666, 0.0
    %v1795 = vmax.f32 %v1667, 0.0
    %v1796 = vmax.f32 %v1668, 0.0
    %v1797 = vmax.f32 %v1669, 0.0
    %v1798 = vmax.f32 %v1670, 0.0
    %v1799 = vmax.f32 %v1671, 0.0
    %v1800 = vmax.f32 %v1672, 0.0
    %v1801 = vmax.f32 %v1673, 0.0
    %v1802 = vmax.f32 %v1674, 0.0
    %v1803 = vmax.f32 %v1675, 0.0
    %v1804 = vmax.f32 %v1676, 0.0
    %v1805 = vmax.f32 %v1677, 0.0
    %v1806 = vmax.f32 %v1678, 0.0
    %v1807 = vmax.f32 %v1679, 0.0
    %v1808 = vmax.f32 %v1680, 0.0
    %v1809 = vmax.f32 %v1681, 0.0
    %v1810 = vmax.f32 %v1682, 0.0
    %v1811 = vmax.f32 %v1683, 0.0
    %v1812 = vmax.f32 %v1684, 0.0
    %v1813 = vmax.f32 %v1685, 0.0
    %v1814 = vmax.f32 %v1686, 0.0
    %v1815 = vmax.f32 %v1687, 0.0
    %v1816 = vmax.f32 %v1688, 0.0
    %v1817 = vmax.f32 %v1689, 0.0
    %v1818 = vmax.f32 %v1690, 0.0
    %v1819 = vmax.f32 %v1691, 0.0
    %v1820 = vmax.f32 %v1692, 0.0
    %v1821 = vmax.f32 %v1693, 0.0
    %v1822 = vmax.f32 %v1694, 0.0
    %v1823 = vmax.f32 %v1695, 0.0
    %v1824 = vmax.f32 %v1696, 0.0
    %v1825 = vmax.f32 %v1697, 0.0
    %v1826 = vmax.f32 %v1698, 0.0
    %v1827 = vmax.f32 %v1699, 0.0
    %v1828 = vmax.f32 %v1700, 0.0
    %v1829 = vmax.f32 %v1701, 0.0
    %v1830 = vmax.f32 %v1702, 0.0
    %v1831 = vmax.f32 %v1703, 0.0
    %v1832 = vmax.f32 %v1704, 0.0
    %v1833 = vmax.f32 %v1705, 0.0
    %v1834 = vmax.f32 %v1706, 0.0
    %v1835 = vmax.f32 %v1707, 0.0
    %v1836 = vmax.f32 %v1708, 0.0
    %v1837 = vmax.f32 %v1709, 0.0
    %v1838 = vmax.f32 %v1710, 0.0
    %v1839 = vmax.f32 %v1711, 0.0
    %v1840 = vmax.f32 %v1712, 0.0
    %v1841 = vmax.f32 %v1713, 0.0
    %v1842 = vmax.f32 %v1714, 0.0
    %v1843 = vmax.f32 %v1715, 0.0
    %v1844 = vmax.f32 %v1716, 0.0
    %v1845 = vmax.f32 %v1717, 0.0
    %v1846 = vmax.f32 %v1718, 0.0
    %v1847 = vmax.f32 %v1719, 0.0
    %v1848 = vmax.f32 %v1720, 0.0
    %v1849 = vmax.f32 %v1721, 0.0
    %v1850 = vmax.f32 %v1722, 0.0
    %v1851 = vmax.f32 %v1723, 0.0
    %v1852 = vmax.f32 %v1724, 0.0
    %v1853 = vmax.f32 %v1725, 0.0
    %v1854 = vmax.f32 %v1726, 0.0
    %v1855 = vmax.f32 %v1727, 0.0
    %v1856 = vmax.f32 %v1728, 0.0
    %v1857 = vmax.f32 %v1729, 0.0
    %v1858 = vmax.f32 %v1730, 0.0
    %v1859 = vmax.f32 %v1731, 0.0
    %v1860 = vmax.f32 %v1732, 0.0
    %v1861 = vmax.f32 %v1733, 0.0
    %v1862 = vmax.f32 %v1734, 0.0
    %v1863 = vld [vmem:[%s8] sm:$0x1]
    %v1865 = vlaneseq
    %v1866 = vshrl.u32 %v1865, 7
    %v1867 = vsub.s32 0, %v1866
    %v1868 = vrot.slane %v1863, %v1867
    %v1870 = vmul.f32 %v1735, %v1868
    %v1871 = vmul.f32 %v1736, %v1868
    %v1872 = vmul.f32 %v1737, %v1868
    %v1873 = vmul.f32 %v1738, %v1868
    %v1874 = vmul.f32 %v1739, %v1868
    %v1875 = vmul.f32 %v1740, %v1868
    %v1876 = vmul.f32 %v1741, %v1868
    %v1877 = vmul.f32 %v1742, %v1868
    %v1878 = vmul.f32 %v1743, %v1868
    %v1879 = vmul.f32 %v1744, %v1868
    %v1880 = vmul.f32 %v1745, %v1868
    %v1881 = vmul.f32 %v1746, %v1868
    %v1882 = vmul.f32 %v1747, %v1868
    %v1883 = vmul.f32 %v1748, %v1868
    %v1884 = vmul.f32 %v1749, %v1868
    %v1885 = vmul.f32 %v1750, %v1868
    %v1886 = vmul.f32 %v1751, %v1868
    %v1887 = vmul.f32 %v1752, %v1868
    %v1888 = vmul.f32 %v1753, %v1868
    %v1889 = vmul.f32 %v1754, %v1868
    %v1890 = vmul.f32 %v1755, %v1868
    %v1891 = vmul.f32 %v1756, %v1868
    %v1892 = vmul.f32 %v1757, %v1868
    %v1893 = vmul.f32 %v1758, %v1868
    %v1894 = vmul.f32 %v1759, %v1868
    %v1895 = vmul.f32 %v1760, %v1868
    %v1896 = vmul.f32 %v1761, %v1868
    %v1897 = vmul.f32 %v1762, %v1868
    %v1898 = vmul.f32 %v1763, %v1868
    %v1899 = vmul.f32 %v1764, %v1868
    %v1900 = vmul.f32 %v1765, %v1868
    %v1901 = vmul.f32 %v1766, %v1868
    %v1902 = vmul.f32 %v1767, %v1868
    %v1903 = vmul.f32 %v1768, %v1868
    %v1904 = vmul.f32 %v1769, %v1868
    %v1905 = vmul.f32 %v1770, %v1868
    %v1906 = vmul.f32 %v1771, %v1868
    %v1907 = vmul.f32 %v1772, %v1868
    %v1908 = vmul.f32 %v1773, %v1868
    %v1909 = vmul.f32 %v1774, %v1868
    %v1910 = vmul.f32 %v1775, %v1868
    %v1911 = vmul.f32 %v1776, %v1868
    %v1912 = vmul.f32 %v1777, %v1868
    %v1913 = vmul.f32 %v1778, %v1868
    %v1914 = vmul.f32 %v1779, %v1868
    %v1915 = vmul.f32 %v1780, %v1868
    %v1916 = vmul.f32 %v1781, %v1868
    %v1917 = vmul.f32 %v1782, %v1868
    %v1918 = vmul.f32 %v1783, %v1868
    %v1919 = vmul.f32 %v1784, %v1868
    %v1920 = vmul.f32 %v1785, %v1868
    %v1921 = vmul.f32 %v1786, %v1868
    %v1922 = vmul.f32 %v1787, %v1868
    %v1923 = vmul.f32 %v1788, %v1868
    %v1924 = vmul.f32 %v1789, %v1868
    %v1925 = vmul.f32 %v1790, %v1868
    %v1926 = vmul.f32 %v1791, %v1868
    %v1927 = vmul.f32 %v1792, %v1868
    %v1928 = vmul.f32 %v1793, %v1868
    %v1929 = vmul.f32 %v1794, %v1868
    %v1930 = vmul.f32 %v1795, %v1868
    %v1931 = vmul.f32 %v1796, %v1868
    %v1932 = vmul.f32 %v1797, %v1868
    %v1933 = vmul.f32 %v1798, %v1868
    %v1934 = vmul.f32 %v1799, %v1868
    %v1935 = vmul.f32 %v1800, %v1868
    %v1936 = vmul.f32 %v1801, %v1868
    %v1937 = vmul.f32 %v1802, %v1868
    %v1938 = vmul.f32 %v1803, %v1868
    %v1939 = vmul.f32 %v1804, %v1868
    %v1940 = vmul.f32 %v1805, %v1868
    %v1941 = vmul.f32 %v1806, %v1868
    %v1942 = vmul.f32 %v1807, %v1868
    %v1943 = vmul.f32 %v1808, %v1868
    %v1944 = vmul.f32 %v1809, %v1868
    %v1945 = vmul.f32 %v1810, %v1868
    %v1946 = vmul.f32 %v1811, %v1868
    %v1947 = vmul.f32 %v1812, %v1868
    %v1948 = vmul.f32 %v1813, %v1868
    %v1949 = vmul.f32 %v1814, %v1868
    %v1950 = vmul.f32 %v1815, %v1868
    %v1951 = vmul.f32 %v1816, %v1868
    %v1952 = vmul.f32 %v1817, %v1868
    %v1953 = vmul.f32 %v1818, %v1868
    %v1954 = vmul.f32 %v1819, %v1868
    %v1955 = vmul.f32 %v1820, %v1868
    %v1956 = vmul.f32 %v1821, %v1868
    %v1957 = vmul.f32 %v1822, %v1868
    %v1958 = vmul.f32 %v1823, %v1868
    %v1959 = vmul.f32 %v1824, %v1868
    %v1960 = vmul.f32 %v1825, %v1868
    %v1961 = vmul.f32 %v1826, %v1868
    %v1962 = vmul.f32 %v1827, %v1868
    %v1963 = vmul.f32 %v1828, %v1868
    %v1964 = vmul.f32 %v1829, %v1868
    %v1965 = vmul.f32 %v1830, %v1868
    %v1966 = vmul.f32 %v1831, %v1868
    %v1967 = vmul.f32 %v1832, %v1868
    %v1968 = vmul.f32 %v1833, %v1868
    %v1969 = vmul.f32 %v1834, %v1868
    %v1970 = vmul.f32 %v1835, %v1868
    %v1971 = vmul.f32 %v1836, %v1868
    %v1972 = vmul.f32 %v1837, %v1868
    %v1973 = vmul.f32 %v1838, %v1868
    %v1974 = vmul.f32 %v1839, %v1868
    %v1975 = vmul.f32 %v1840, %v1868
    %v1976 = vmul.f32 %v1841, %v1868
    %v1977 = vmul.f32 %v1842, %v1868
    %v1978 = vmul.f32 %v1843, %v1868
    %v1979 = vmul.f32 %v1844, %v1868
    %v1980 = vmul.f32 %v1845, %v1868
    %v1981 = vmul.f32 %v1846, %v1868
    %v1982 = vmul.f32 %v1847, %v1868
    %v1983 = vmul.f32 %v1848, %v1868
    %v1984 = vmul.f32 %v1849, %v1868
    %v1985 = vmul.f32 %v1850, %v1868
    %v1986 = vmul.f32 %v1851, %v1868
    %v1987 = vmul.f32 %v1852, %v1868
    %v1988 = vmul.f32 %v1853, %v1868
    %v1989 = vmul.f32 %v1854, %v1868
    %v1990 = vmul.f32 %v1855, %v1868
    %v1991 = vmul.f32 %v1856, %v1868
    %v1992 = vmul.f32 %v1857, %v1868
    %v1993 = vmul.f32 %v1858, %v1868
    %v1994 = vmul.f32 %v1859, %v1868
    %v1995 = vmul.f32 %v1860, %v1868
    %v1996 = vmul.f32 %v1861, %v1868
    %v1997 = vmul.f32 %v1862, %v1868
    %v1998 = vsel %vm173, %v1870, 0.0
    %1999 = vadd.xlane.f32.xlu0 %v1998
    %v2000 = vpop.xlane.xlu0 %1999
    %v2001 = vsel %vm173, %v1871, 0.0
    %2002 = vadd.xlane.f32.xlu0 %v2001
    %v2003 = vpop.xlane.xlu0 %2002
    %v2004 = vsel %vm173, %v1872, 0.0
    %2005 = vadd.xlane.f32.xlu0 %v2004
    %v2006 = vpop.xlane.xlu0 %2005
    %v2007 = vsel %vm173, %v1873, 0.0
    %2008 = vadd.xlane.f32.xlu0 %v2007
    %v2009 = vpop.xlane.xlu0 %2008
    %v2010 = vsel %vm173, %v1874, 0.0
    %2011 = vadd.xlane.f32.xlu0 %v2010
    %v2012 = vpop.xlane.xlu0 %2011
    %v2013 = vsel %vm173, %v1875, 0.0
    %2014 = vadd.xlane.f32.xlu0 %v2013
    %v2015 = vpop.xlane.xlu0 %2014
    %v2016 = vsel %vm173, %v1876, 0.0
    %2017 = vadd.xlane.f32.xlu0 %v2016
    %v2018 = vpop.xlane.xlu0 %2017
    %v2019 = vsel %vm173, %v1877, 0.0
    %2020 = vadd.xlane.f32.xlu0 %v2019
    %v2021 = vpop.xlane.xlu0 %2020
    %v2022 = vsel %vm173, %v1878, 0.0
    %2023 = vadd.xlane.f32.xlu0 %v2022
    %v2024 = vpop.xlane.xlu0 %2023
    %v2025 = vsel %vm173, %v1879, 0.0
    %2026 = vadd.xlane.f32.xlu0 %v2025
    %v2027 = vpop.xlane.xlu0 %2026
    %v2028 = vsel %vm173, %v1880, 0.0
    %2029 = vadd.xlane.f32.xlu0 %v2028
    %v2030 = vpop.xlane.xlu0 %2029
    %v2031 = vsel %vm173, %v1881, 0.0
    %2032 = vadd.xlane.f32.xlu0 %v2031
    %v2033 = vpop.xlane.xlu0 %2032
    %v2034 = vsel %vm173, %v1882, 0.0
    %2035 = vadd.xlane.f32.xlu0 %v2034
    %v2036 = vpop.xlane.xlu0 %2035
    %v2037 = vsel %vm173, %v1883, 0.0
    %2038 = vadd.xlane.f32.xlu0 %v2037
    %v2039 = vpop.xlane.xlu0 %2038
    %v2040 = vsel %vm173, %v1884, 0.0
    %2041 = vadd.xlane.f32.xlu0 %v2040
    %v2042 = vpop.xlane.xlu0 %2041
    %v2043 = vsel %vm173, %v1885, 0.0
    %2044 = vadd.xlane.f32.xlu0 %v2043
    %v2045 = vpop.xlane.xlu0 %2044
    %v2046 = vsel %vm173, %v1886, 0.0
    %2047 = vadd.xlane.f32.xlu0 %v2046
    %v2048 = vpop.xlane.xlu0 %2047
    %v2049 = vsel %vm173, %v1887, 0.0
    %2050 = vadd.xlane.f32.xlu0 %v2049
    %v2051 = vpop.xlane.xlu0 %2050
    %v2052 = vsel %vm173, %v1888, 0.0
    %2053 = vadd.xlane.f32.xlu0 %v2052
    %v2054 = vpop.xlane.xlu0 %2053
    %v2055 = vsel %vm173, %v1889, 0.0
    %2056 = vadd.xlane.f32.xlu0 %v2055
    %v2057 = vpop.xlane.xlu0 %2056
    %v2058 = vsel %vm173, %v1890, 0.0
    %2059 = vadd.xlane.f32.xlu0 %v2058
    %v2060 = vpop.xlane.xlu0 %2059
    %v2061 = vsel %vm173, %v1891, 0.0
    %2062 = vadd.xlane.f32.xlu0 %v2061
    %v2063 = vpop.xlane.xlu0 %2062
    %v2064 = vsel %vm173, %v1892, 0.0
    %2065 = vadd.xlane.f32.xlu0 %v2064
    %v2066 = vpop.xlane.xlu0 %2065
    %v2067 = vsel %vm173, %v1893, 0.0
    %2068 = vadd.xlane.f32.xlu0 %v2067
    %v2069 = vpop.xlane.xlu0 %2068
    %v2070 = vsel %vm173, %v1894, 0.0
    %2071 = vadd.xlane.f32.xlu0 %v2070
    %v2072 = vpop.xlane.xlu0 %2071
    %v2073 = vsel %vm173, %v1895, 0.0
    %2074 = vadd.xlane.f32.xlu0 %v2073
    %v2075 = vpop.xlane.xlu0 %2074
    %v2076 = vsel %vm173, %v1896, 0.0
    %2077 = vadd.xlane.f32.xlu0 %v2076
    %v2078 = vpop.xlane.xlu0 %2077
    %v2079 = vsel %vm173, %v1897, 0.0
    %2080 = vadd.xlane.f32.xlu0 %v2079
    %v2081 = vpop.xlane.xlu0 %2080
    %v2082 = vsel %vm173, %v1898, 0.0
    %2083 = vadd.xlane.f32.xlu0 %v2082
    %v2084 = vpop.xlane.xlu0 %2083
    %v2085 = vsel %vm173, %v1899, 0.0
    %2086 = vadd.xlane.f32.xlu0 %v2085
    %v2087 = vpop.xlane.xlu0 %2086
    %v2088 = vsel %vm173, %v1900, 0.0
    %2089 = vadd.xlane.f32.xlu0 %v2088
    %v2090 = vpop.xlane.xlu0 %2089
    %v2091 = vsel %vm173, %v1901, 0.0
    %2092 = vadd.xlane.f32.xlu0 %v2091
    %v2093 = vpop.xlane.xlu0 %2092
    %v2094 = vsel %vm173, %v1902, 0.0
    %2095 = vadd.xlane.f32.xlu0 %v2094
    %v2096 = vpop.xlane.xlu0 %2095
    %v2097 = vsel %vm173, %v1903, 0.0
    %2098 = vadd.xlane.f32.xlu0 %v2097
    %v2099 = vpop.xlane.xlu0 %2098
    %v2100 = vsel %vm173, %v1904, 0.0
    %2101 = vadd.xlane.f32.xlu0 %v2100
    %v2102 = vpop.xlane.xlu0 %2101
    %v2103 = vsel %vm173, %v1905, 0.0
    %2104 = vadd.xlane.f32.xlu0 %v2103
    %v2105 = vpop.xlane.xlu0 %2104
    %v2106 = vsel %vm173, %v1906, 0.0
    %2107 = vadd.xlane.f32.xlu0 %v2106
    %v2108 = vpop.xlane.xlu0 %2107
    %v2109 = vsel %vm173, %v1907, 0.0
    %2110 = vadd.xlane.f32.xlu0 %v2109
    %v2111 = vpop.xlane.xlu0 %2110
    %v2112 = vsel %vm173, %v1908, 0.0
    %2113 = vadd.xlane.f32.xlu0 %v2112
    %v2114 = vpop.xlane.xlu0 %2113
    %v2115 = vsel %vm173, %v1909, 0.0
    %2116 = vadd.xlane.f32.xlu0 %v2115
    %v2117 = vpop.xlane.xlu0 %2116
    %v2118 = vsel %vm173, %v1910, 0.0
    %2119 = vadd.xlane.f32.xlu0 %v2118
    %v2120 = vpop.xlane.xlu0 %2119
    %v2121 = vsel %vm173, %v1911, 0.0
    %2122 = vadd.xlane.f32.xlu0 %v2121
    %v2123 = vpop.xlane.xlu0 %2122
    %v2124 = vsel %vm173, %v1912, 0.0
    %2125 = vadd.xlane.f32.xlu0 %v2124
    %v2126 = vpop.xlane.xlu0 %2125
    %v2127 = vsel %vm173, %v1913, 0.0
    %2128 = vadd.xlane.f32.xlu0 %v2127
    %v2129 = vpop.xlane.xlu0 %2128
    %v2130 = vsel %vm173, %v1914, 0.0
    %2131 = vadd.xlane.f32.xlu0 %v2130
    %v2132 = vpop.xlane.xlu0 %2131
    %v2133 = vsel %vm173, %v1915, 0.0
    %2134 = vadd.xlane.f32.xlu0 %v2133
    %v2135 = vpop.xlane.xlu0 %2134
    %v2136 = vsel %vm173, %v1916, 0.0
    %2137 = vadd.xlane.f32.xlu0 %v2136
    %v2138 = vpop.xlane.xlu0 %2137
    %v2139 = vsel %vm173, %v1917, 0.0
    %2140 = vadd.xlane.f32.xlu0 %v2139
    %v2141 = vpop.xlane.xlu0 %2140
    %v2142 = vsel %vm173, %v1918, 0.0
    %2143 = vadd.xlane.f32.xlu0 %v2142
    %v2144 = vpop.xlane.xlu0 %2143
    %v2145 = vsel %vm173, %v1919, 0.0
    %2146 = vadd.xlane.f32.xlu0 %v2145
    %v2147 = vpop.xlane.xlu0 %2146
    %v2148 = vsel %vm173, %v1920, 0.0
    %2149 = vadd.xlane.f32.xlu0 %v2148
    %v2150 = vpop.xlane.xlu0 %2149
    %v2151 = vsel %vm173, %v1921, 0.0
    %2152 = vadd.xlane.f32.xlu0 %v2151
    %v2153 = vpop.xlane.xlu0 %2152
    %v2154 = vsel %vm173, %v1922, 0.0
    %2155 = vadd.xlane.f32.xlu0 %v2154
    %v2156 = vpop.xlane.xlu0 %2155
    %v2157 = vsel %vm173, %v1923, 0.0
    %2158 = vadd.xlane.f32.xlu0 %v2157
    %v2159 = vpop.xlane.xlu0 %2158
    %v2160 = vsel %vm173, %v1924, 0.0
    %2161 = vadd.xlane.f32.xlu0 %v2160
    %v2162 = vpop.xlane.xlu0 %2161
    %v2163 = vsel %vm173, %v1925, 0.0
    %2164 = vadd.xlane.f32.xlu0 %v2163
    %v2165 = vpop.xlane.xlu0 %2164
    %v2166 = vsel %vm173, %v1926, 0.0
    %2167 = vadd.xlane.f32.xlu0 %v2166
    %v2168 = vpop.xlane.xlu0 %2167
    %v2169 = vsel %vm173, %v1927, 0.0
    %2170 = vadd.xlane.f32.xlu0 %v2169
    %v2171 = vpop.xlane.xlu0 %2170
    %v2172 = vsel %vm173, %v1928, 0.0
    %2173 = vadd.xlane.f32.xlu0 %v2172
    %v2174 = vpop.xlane.xlu0 %2173
    %v2175 = vsel %vm173, %v1929, 0.0
    %2176 = vadd.xlane.f32.xlu0 %v2175
    %v2177 = vpop.xlane.xlu0 %2176
    %v2178 = vsel %vm173, %v1930, 0.0
    %2179 = vadd.xlane.f32.xlu0 %v2178
    %v2180 = vpop.xlane.xlu0 %2179
    %v2181 = vsel %vm173, %v1931, 0.0
    %2182 = vadd.xlane.f32.xlu0 %v2181
    %v2183 = vpop.xlane.xlu0 %2182
    %v2184 = vsel %vm173, %v1932, 0.0
    %2185 = vadd.xlane.f32.xlu0 %v2184
    %v2186 = vpop.xlane.xlu0 %2185
    %v2187 = vsel %vm173, %v1933, 0.0
    %2188 = vadd.xlane.f32.xlu0 %v2187
    %v2189 = vpop.xlane.xlu0 %2188
    %v2190 = vsel %vm173, %v1934, 0.0
    %2191 = vadd.xlane.f32.xlu0 %v2190
    %v2192 = vpop.xlane.xlu0 %2191
    %v2193 = vsel %vm173, %v1935, 0.0
    %2194 = vadd.xlane.f32.xlu0 %v2193
    %v2195 = vpop.xlane.xlu0 %2194
    %v2196 = vsel %vm173, %v1936, 0.0
    %2197 = vadd.xlane.f32.xlu0 %v2196
    %v2198 = vpop.xlane.xlu0 %2197
    %v2199 = vsel %vm173, %v1937, 0.0
    %2200 = vadd.xlane.f32.xlu0 %v2199
    %v2201 = vpop.xlane.xlu0 %2200
    %v2202 = vsel %vm173, %v1938, 0.0
    %2203 = vadd.xlane.f32.xlu0 %v2202
    %v2204 = vpop.xlane.xlu0 %2203
    %v2205 = vsel %vm173, %v1939, 0.0
    %2206 = vadd.xlane.f32.xlu0 %v2205
    %v2207 = vpop.xlane.xlu0 %2206
    %v2208 = vsel %vm173, %v1940, 0.0
    %2209 = vadd.xlane.f32.xlu0 %v2208
    %v2210 = vpop.xlane.xlu0 %2209
    %v2211 = vsel %vm173, %v1941, 0.0
    %2212 = vadd.xlane.f32.xlu0 %v2211
    %v2213 = vpop.xlane.xlu0 %2212
    %v2214 = vsel %vm173, %v1942, 0.0
    %2215 = vadd.xlane.f32.xlu0 %v2214
    %v2216 = vpop.xlane.xlu0 %2215
    %v2217 = vsel %vm173, %v1943, 0.0
    %2218 = vadd.xlane.f32.xlu0 %v2217
    %v2219 = vpop.xlane.xlu0 %2218
    %v2220 = vsel %vm173, %v1944, 0.0
    %2221 = vadd.xlane.f32.xlu0 %v2220
    %v2222 = vpop.xlane.xlu0 %2221
    %v2223 = vsel %vm173, %v1945, 0.0
    %2224 = vadd.xlane.f32.xlu0 %v2223
    %v2225 = vpop.xlane.xlu0 %2224
    %v2226 = vsel %vm173, %v1946, 0.0
    %2227 = vadd.xlane.f32.xlu0 %v2226
    %v2228 = vpop.xlane.xlu0 %2227
    %v2229 = vsel %vm173, %v1947, 0.0
    %2230 = vadd.xlane.f32.xlu0 %v2229
    %v2231 = vpop.xlane.xlu0 %2230
    %v2232 = vsel %vm173, %v1948, 0.0
    %2233 = vadd.xlane.f32.xlu0 %v2232
    %v2234 = vpop.xlane.xlu0 %2233
    %v2235 = vsel %vm173, %v1949, 0.0
    %2236 = vadd.xlane.f32.xlu0 %v2235
    %v2237 = vpop.xlane.xlu0 %2236
    %v2238 = vsel %vm173, %v1950, 0.0
    %2239 = vadd.xlane.f32.xlu0 %v2238
    %v2240 = vpop.xlane.xlu0 %2239
    %v2241 = vsel %vm173, %v1951, 0.0
    %2242 = vadd.xlane.f32.xlu0 %v2241
    %v2243 = vpop.xlane.xlu0 %2242
    %v2244 = vsel %vm173, %v1952, 0.0
    %2245 = vadd.xlane.f32.xlu0 %v2244
    %v2246 = vpop.xlane.xlu0 %2245
    %v2247 = vsel %vm173, %v1953, 0.0
    %2248 = vadd.xlane.f32.xlu0 %v2247
    %v2249 = vpop.xlane.xlu0 %2248
    %v2250 = vsel %vm173, %v1954, 0.0
    %2251 = vadd.xlane.f32.xlu0 %v2250
    %v2252 = vpop.xlane.xlu0 %2251
    %v2253 = vsel %vm173, %v1955, 0.0
    %2254 = vadd.xlane.f32.xlu0 %v2253
    %v2255 = vpop.xlane.xlu0 %2254
    %v2256 = vsel %vm173, %v1956, 0.0
    %2257 = vadd.xlane.f32.xlu0 %v2256
    %v2258 = vpop.xlane.xlu0 %2257
    %v2259 = vsel %vm173, %v1957, 0.0
    %2260 = vadd.xlane.f32.xlu0 %v2259
    %v2261 = vpop.xlane.xlu0 %2260
    %v2262 = vsel %vm173, %v1958, 0.0
    %2263 = vadd.xlane.f32.xlu0 %v2262
    %v2264 = vpop.xlane.xlu0 %2263
    %v2265 = vsel %vm173, %v1959, 0.0
    %2266 = vadd.xlane.f32.xlu0 %v2265
    %v2267 = vpop.xlane.xlu0 %2266
    %v2268 = vsel %vm173, %v1960, 0.0
    %2269 = vadd.xlane.f32.xlu0 %v2268
    %v2270 = vpop.xlane.xlu0 %2269
    %v2271 = vsel %vm173, %v1961, 0.0
    %2272 = vadd.xlane.f32.xlu0 %v2271
    %v2273 = vpop.xlane.xlu0 %2272
    %v2274 = vsel %vm173, %v1962, 0.0
    %2275 = vadd.xlane.f32.xlu0 %v2274
    %v2276 = vpop.xlane.xlu0 %2275
    %v2277 = vsel %vm173, %v1963, 0.0
    %2278 = vadd.xlane.f32.xlu0 %v2277
    %v2279 = vpop.xlane.xlu0 %2278
    %v2280 = vsel %vm173, %v1964, 0.0
    %2281 = vadd.xlane.f32.xlu0 %v2280
    %v2282 = vpop.xlane.xlu0 %2281
    %v2283 = vsel %vm173, %v1965, 0.0
    %2284 = vadd.xlane.f32.xlu0 %v2283
    %v2285 = vpop.xlane.xlu0 %2284
    %v2286 = vsel %vm173, %v1966, 0.0
    %2287 = vadd.xlane.f32.xlu0 %v2286
    %v2288 = vpop.xlane.xlu0 %2287
    %v2289 = vsel %vm173, %v1967, 0.0
    %2290 = vadd.xlane.f32.xlu0 %v2289
    %v2291 = vpop.xlane.xlu0 %2290
    %v2292 = vsel %vm173, %v1968, 0.0
    %2293 = vadd.xlane.f32.xlu0 %v2292
    %v2294 = vpop.xlane.xlu0 %2293
    %v2295 = vsel %vm173, %v1969, 0.0
    %2296 = vadd.xlane.f32.xlu0 %v2295
    %v2297 = vpop.xlane.xlu0 %2296
    %v2298 = vsel %vm173, %v1970, 0.0
    %2299 = vadd.xlane.f32.xlu0 %v2298
    %v2300 = vpop.xlane.xlu0 %2299
    %v2301 = vsel %vm173, %v1971, 0.0
    %2302 = vadd.xlane.f32.xlu0 %v2301
    %v2303 = vpop.xlane.xlu0 %2302
    %v2304 = vsel %vm173, %v1972, 0.0
    %2305 = vadd.xlane.f32.xlu0 %v2304
    %v2306 = vpop.xlane.xlu0 %2305
    %v2307 = vsel %vm173, %v1973, 0.0
    %2308 = vadd.xlane.f32.xlu0 %v2307
    %v2309 = vpop.xlane.xlu0 %2308
    %v2310 = vsel %vm173, %v1974, 0.0
    %2311 = vadd.xlane.f32.xlu0 %v2310
    %v2312 = vpop.xlane.xlu0 %2311
    %v2313 = vsel %vm173, %v1975, 0.0
    %2314 = vadd.xlane.f32.xlu0 %v2313
    %v2315 = vpop.xlane.xlu0 %2314
    %v2316 = vsel %vm173, %v1976, 0.0
    %2317 = vadd.xlane.f32.xlu0 %v2316
    %v2318 = vpop.xlane.xlu0 %2317
    %v2319 = vsel %vm173, %v1977, 0.0
    %2320 = vadd.xlane.f32.xlu0 %v2319
    %v2321 = vpop.xlane.xlu0 %2320
    %v2322 = vsel %vm173, %v1978, 0.0
    %2323 = vadd.xlane.f32.xlu0 %v2322
    %v2324 = vpop.xlane.xlu0 %2323
    %v2325 = vsel %vm173, %v1979, 0.0
    %2326 = vadd.xlane.f32.xlu0 %v2325
    %v2327 = vpop.xlane.xlu0 %2326
    %v2328 = vsel %vm173, %v1980, 0.0
    %2329 = vadd.xlane.f32.xlu0 %v2328
    %v2330 = vpop.xlane.xlu0 %2329
    %v2331 = vsel %vm173, %v1981, 0.0
    %2332 = vadd.xlane.f32.xlu0 %v2331
    %v2333 = vpop.xlane.xlu0 %2332
    %v2334 = vsel %vm173, %v1982, 0.0
    %2335 = vadd.xlane.f32.xlu0 %v2334
    %v2336 = vpop.xlane.xlu0 %2335
    %v2337 = vsel %vm173, %v1983, 0.0
    %2338 = vadd.xlane.f32.xlu0 %v2337
    %v2339 = vpop.xlane.xlu0 %2338
    %v2340 = vsel %vm173, %v1984, 0.0
    %2341 = vadd.xlane.f32.xlu0 %v2340
    %v2342 = vpop.xlane.xlu0 %2341
    %v2343 = vsel %vm173, %v1985, 0.0
    %2344 = vadd.xlane.f32.xlu0 %v2343
    %v2345 = vpop.xlane.xlu0 %2344
    %v2346 = vsel %vm173, %v1986, 0.0
    %2347 = vadd.xlane.f32.xlu0 %v2346
    %v2348 = vpop.xlane.xlu0 %2347
    %v2349 = vsel %vm173, %v1987, 0.0
    %2350 = vadd.xlane.f32.xlu0 %v2349
    %v2351 = vpop.xlane.xlu0 %2350
    %v2352 = vsel %vm173, %v1988, 0.0
    %2353 = vadd.xlane.f32.xlu0 %v2352
    %v2354 = vpop.xlane.xlu0 %2353
    %v2355 = vsel %vm173, %v1989, 0.0
    %2356 = vadd.xlane.f32.xlu0 %v2355
    %v2357 = vpop.xlane.xlu0 %2356
    %v2358 = vsel %vm173, %v1990, 0.0
    %2359 = vadd.xlane.f32.xlu0 %v2358
    %v2360 = vpop.xlane.xlu0 %2359
    %v2361 = vsel %vm173, %v1991, 0.0
    %2362 = vadd.xlane.f32.xlu0 %v2361
    %v2363 = vpop.xlane.xlu0 %2362
    %v2364 = vsel %vm173, %v1992, 0.0
    %2365 = vadd.xlane.f32.xlu0 %v2364
    %v2366 = vpop.xlane.xlu0 %2365
    %v2367 = vsel %vm173, %v1993, 0.0
    %2368 = vadd.xlane.f32.xlu0 %v2367
    %v2369 = vpop.xlane.xlu0 %2368
    %v2370 = vsel %vm173, %v1994, 0.0
    %2371 = vadd.xlane.f32.xlu0 %v2370
    %v2372 = vpop.xlane.xlu0 %2371
    %v2373 = vsel %vm173, %v1995, 0.0
    %2374 = vadd.xlane.f32.xlu0 %v2373
    %v2375 = vpop.xlane.xlu0 %2374
    %v2376 = vsel %vm173, %v1996, 0.0
    %2377 = vadd.xlane.f32.xlu0 %v2376
    %v2378 = vpop.xlane.xlu0 %2377
    %v2379 = vsel %vm173, %v1997, 0.0
    %2380 = vadd.xlane.f32.xlu0 %v2379
    %v2381 = vpop.xlane.xlu0 %2380
    %v2382 = vld [vmem:[#allocation3] sm:$0x1]
    %v2384 = vlaneseq
    %v2385 = vshrl.u32 %v2384, 7
    %v2386 = vsub.s32 0, %v2385
    %v2387 = vrot.slane %v2382, %v2386
    %2388 = vset.pattern.permute.xlu0 0
    %2389 = vperm.xlu0 %2388, %v2387
    %v2390 = vpop.permute.xlu0 %2389
    %v2392 = vadd.f32 %v2000, %v2390
    %v2393 = vadd.f32 %v2003, %v2390
    %v2394 = vadd.f32 %v2006, %v2390
    %v2395 = vadd.f32 %v2009, %v2390
    %v2396 = vadd.f32 %v2012, %v2390
    %v2397 = vadd.f32 %v2015, %v2390
    %v2398 = vadd.f32 %v2018, %v2390
    %v2399 = vadd.f32 %v2021, %v2390
    %v2400 = vadd.f32 %v2024, %v2390
    %v2401 = vadd.f32 %v2027, %v2390
    %v2402 = vadd.f32 %v2030, %v2390
    %v2403 = vadd.f32 %v2033, %v2390
    %v2404 = vadd.f32 %v2036, %v2390
    %v2405 = vadd.f32 %v2039, %v2390
    %v2406 = vadd.f32 %v2042, %v2390
    %v2407 = vadd.f32 %v2045, %v2390
    %v2408 = vadd.f32 %v2048, %v2390
    %v2409 = vadd.f32 %v2051, %v2390
    %v2410 = vadd.f32 %v2054, %v2390
    %v2411 = vadd.f32 %v2057, %v2390
    %v2412 = vadd.f32 %v2060, %v2390
    %v2413 = vadd.f32 %v2063, %v2390
    %v2414 = vadd.f32 %v2066, %v2390
    %v2415 = vadd.f32 %v2069, %v2390
    %v2416 = vadd.f32 %v2072, %v2390
    %v2417 = vadd.f32 %v2075, %v2390
    %v2418 = vadd.f32 %v2078, %v2390
    %v2419 = vadd.f32 %v2081, %v2390
    %v2420 = vadd.f32 %v2084, %v2390
    %v2421 = vadd.f32 %v2087, %v2390
    %v2422 = vadd.f32 %v2090, %v2390
    %v2423 = vadd.f32 %v2093, %v2390
    %v2424 = vadd.f32 %v2096, %v2390
    %v2425 = vadd.f32 %v2099, %v2390
    %v2426 = vadd.f32 %v2102, %v2390
    %v2427 = vadd.f32 %v2105, %v2390
    %v2428 = vadd.f32 %v2108, %v2390
    %v2429 = vadd.f32 %v2111, %v2390
    %v2430 = vadd.f32 %v2114, %v2390
    %v2431 = vadd.f32 %v2117, %v2390
    %v2432 = vadd.f32 %v2120, %v2390
    %v2433 = vadd.f32 %v2123, %v2390
    %v2434 = vadd.f32 %v2126, %v2390
    %v2435 = vadd.f32 %v2129, %v2390
    %v2436 = vadd.f32 %v2132, %v2390
    %v2437 = vadd.f32 %v2135, %v2390
    %v2438 = vadd.f32 %v2138, %v2390
    %v2439 = vadd.f32 %v2141, %v2390
    %v2440 = vadd.f32 %v2144, %v2390
    %v2441 = vadd.f32 %v2147, %v2390
    %v2442 = vadd.f32 %v2150, %v2390
    %v2443 = vadd.f32 %v2153, %v2390
    %v2444 = vadd.f32 %v2156, %v2390
    %v2445 = vadd.f32 %v2159, %v2390
    %v2446 = vadd.f32 %v2162, %v2390
    %v2447 = vadd.f32 %v2165, %v2390
    %v2448 = vadd.f32 %v2168, %v2390
    %v2449 = vadd.f32 %v2171, %v2390
    %v2450 = vadd.f32 %v2174, %v2390
    %v2451 = vadd.f32 %v2177, %v2390
    %v2452 = vadd.f32 %v2180, %v2390
    %v2453 = vadd.f32 %v2183, %v2390
    %v2454 = vadd.f32 %v2186, %v2390
    %v2455 = vadd.f32 %v2189, %v2390
    %v2456 = vadd.f32 %v2192, %v2390
    %v2457 = vadd.f32 %v2195, %v2390
    %v2458 = vadd.f32 %v2198, %v2390
    %v2459 = vadd.f32 %v2201, %v2390
    %v2460 = vadd.f32 %v2204, %v2390
    %v2461 = vadd.f32 %v2207, %v2390
    %v2462 = vadd.f32 %v2210, %v2390
    %v2463 = vadd.f32 %v2213, %v2390
    %v2464 = vadd.f32 %v2216, %v2390
    %v2465 = vadd.f32 %v2219, %v2390
    %v2466 = vadd.f32 %v2222, %v2390
    %v2467 = vadd.f32 %v2225, %v2390
    %v2468 = vadd.f32 %v2228, %v2390
    %v2469 = vadd.f32 %v2231, %v2390
    %v2470 = vadd.f32 %v2234, %v2390
    %v2471 = vadd.f32 %v2237, %v2390
    %v2472 = vadd.f32 %v2240, %v2390
    %v2473 = vadd.f32 %v2243, %v2390
    %v2474 = vadd.f32 %v2246, %v2390
    %v2475 = vadd.f32 %v2249, %v2390
    %v2476 = vadd.f32 %v2252, %v2390
    %v2477 = vadd.f32 %v2255, %v2390
    %v2478 = vadd.f32 %v2258, %v2390
    %v2479 = vadd.f32 %v2261, %v2390
    %v2480 = vadd.f32 %v2264, %v2390
    %v2481 = vadd.f32 %v2267, %v2390
    %v2482 = vadd.f32 %v2270, %v2390
    %v2483 = vadd.f32 %v2273, %v2390
    %v2484 = vadd.f32 %v2276, %v2390
    %v2485 = vadd.f32 %v2279, %v2390
    %v2486 = vadd.f32 %v2282, %v2390
    %v2487 = vadd.f32 %v2285, %v2390
    %v2488 = vadd.f32 %v2288, %v2390
    %v2489 = vadd.f32 %v2291, %v2390
    %v2490 = vadd.f32 %v2294, %v2390
    %v2491 = vadd.f32 %v2297, %v2390
    %v2492 = vadd.f32 %v2300, %v2390
    %v2493 = vadd.f32 %v2303, %v2390
    %v2494 = vadd.f32 %v2306, %v2390
    %v2495 = vadd.f32 %v2309, %v2390
    %v2496 = vadd.f32 %v2312, %v2390
    %v2497 = vadd.f32 %v2315, %v2390
    %v2498 = vadd.f32 %v2318, %v2390
    %v2499 = vadd.f32 %v2321, %v2390
    %v2500 = vadd.f32 %v2324, %v2390
    %v2501 = vadd.f32 %v2327, %v2390
    %v2502 = vadd.f32 %v2330, %v2390
    %v2503 = vadd.f32 %v2333, %v2390
    %v2504 = vadd.f32 %v2336, %v2390
    %v2505 = vadd.f32 %v2339, %v2390
    %v2506 = vadd.f32 %v2342, %v2390
    %v2507 = vadd.f32 %v2345, %v2390
    %v2508 = vadd.f32 %v2348, %v2390
    %v2509 = vadd.f32 %v2351, %v2390
    %v2510 = vadd.f32 %v2354, %v2390
    %v2511 = vadd.f32 %v2357, %v2390
    %v2512 = vadd.f32 %v2360, %v2390
    %v2513 = vadd.f32 %v2363, %v2390
    %v2514 = vadd.f32 %v2366, %v2390
    %v2515 = vadd.f32 %v2369, %v2390
    %v2516 = vadd.f32 %v2372, %v2390
    %v2517 = vadd.f32 %v2375, %v2390
    %v2518 = vadd.f32 %v2378, %v2390
    %v2519 = vadd.f32 %v2381, %v2390
    %v2520 = vlaneseq
    %v2521 = vand.u32 %v2520, 127
    %vm2522 = vcmp.lt.s32.totalorder %v2521, 8
    %v2651 = vlaneseq
    %v2652 = vshrl.u32 %v2651, 7
    %v2653 = vsub.s32 %v2521, %v2652
    %v2654 = vrot.slane %v2392, %v2653
    %v2655 = vadd.s32 %v2521, 4294967288
    %v2656 = vlaneseq
    %v2657 = vshrl.u32 %v2656, 7
    %v2658 = vsub.s32 %v2655, %v2657
    %v2659 = vrot.slane %v2393, %v2658
    %vm2660 = vcmask 130112
    %v2661 = vsel %vm2660, %v2659, %v2654
    %v2662 = vadd.s32 %v2521, 4294967280
    %v2663 = vlaneseq
    %v2664 = vshrl.u32 %v2663, 7
    %v2665 = vsub.s32 %v2662, %v2664
    %v2666 = vrot.slane %v2394, %v2665
    %vm2667 = vcmask 195712
    %v2668 = vsel %vm2667, %v2666, %v2661
    %v2669 = vadd.s32 %v2521, 4294967272
    %v2670 = vlaneseq
    %v2671 = vshrl.u32 %v2670, 7
    %v2672 = vsub.s32 %v2669, %v2671
    %v2673 = vrot.slane %v2395, %v2672
    %vm2674 = vcmask 261312
    %v2675 = vsel %vm2674, %v2673, %v2668
    %v2676 = vadd.s32 %v2521, 4294967264
    %v2677 = vlaneseq
    %v2678 = vshrl.u32 %v2677, 7
    %v2679 = vsub.s32 %v2676, %v2678
    %v2680 = vrot.slane %v2396, %v2679
    %vm2681 = vcmask 326912
    %v2682 = vsel %vm2681, %v2680, %v2675
    %v2683 = vadd.s32 %v2521, 4294967256
    %v2684 = vlaneseq
    %v2685 = vshrl.u32 %v2684, 7
    %v2686 = vsub.s32 %v2683, %v2685
    %v2687 = vrot.slane %v2397, %v2686
    %vm2688 = vcmask 392512
    %v2689 = vsel %vm2688, %v2687, %v2682
    %v2690 = vadd.s32 %v2521, 4294967248
    %v2691 = vlaneseq
    %v2692 = vshrl.u32 %v2691, 7
    %v2693 = vsub.s32 %v2690, %v2692
    %v2694 = vrot.slane %v2398, %v2693
    %vm2695 = vcmask 458112
    %v2696 = vsel %vm2695, %v2694, %v2689
    %v2697 = vadd.s32 %v2521, 4294967240
    %v2698 = vlaneseq
    %v2699 = vshrl.u32 %v2698, 7
    %v2700 = vsub.s32 %v2697, %v2699
    %v2701 = vrot.slane %v2399, %v2700
    %vm2702 = vcmask 523712
    %v2703 = vsel %vm2702, %v2701, %v2696
    %v2704 = vadd.s32 %v2521, 4294967232
    %v2705 = vlaneseq
    %v2706 = vshrl.u32 %v2705, 7
    %v2707 = vsub.s32 %v2704, %v2706
    %v2708 = vrot.slane %v2400, %v2707
    %vm2709 = vcmask 589312
    %v2710 = vsel %vm2709, %v2708, %v2703
    %v2711 = vadd.s32 %v2521, 4294967224
    %v2712 = vlaneseq
    %v2713 = vshrl.u32 %v2712, 7
    %v2714 = vsub.s32 %v2711, %v2713
    %v2715 = vrot.slane %v2401, %v2714
    %vm2716 = vcmask 654912
    %v2717 = vsel %vm2716, %v2715, %v2710
    %v2718 = vadd.s32 %v2521, 4294967216
    %v2719 = vlaneseq
    %v2720 = vshrl.u32 %v2719, 7
    %v2721 = vsub.s32 %v2718, %v2720
    %v2722 = vrot.slane %v2402, %v2721
    %vm2723 = vcmask 720512
    %v2724 = vsel %vm2723, %v2722, %v2717
    %v2725 = vadd.s32 %v2521, 4294967208
    %v2726 = vlaneseq
    %v2727 = vshrl.u32 %v2726, 7
    %v2728 = vsub.s32 %v2725, %v2727
    %v2729 = vrot.slane %v2403, %v2728
    %vm2730 = vcmask 786112
    %v2731 = vsel %vm2730, %v2729, %v2724
    %v2732 = vadd.s32 %v2521, 4294967200
    %v2733 = vlaneseq
    %v2734 = vshrl.u32 %v2733, 7
    %v2735 = vsub.s32 %v2732, %v2734
    %v2736 = vrot.slane %v2404, %v2735
    %vm2737 = vcmask 851712
    %v2738 = vsel %vm2737, %v2736, %v2731
    %v2739 = vadd.s32 %v2521, 4294967192
    %v2740 = vlaneseq
    %v2741 = vshrl.u32 %v2740, 7
    %v2742 = vsub.s32 %v2739, %v2741
    %v2743 = vrot.slane %v2405, %v2742
    %vm2744 = vcmask 917312
    %v2745 = vsel %vm2744, %v2743, %v2738
    %v2746 = vadd.s32 %v2521, 4294967184
    %v2747 = vlaneseq
    %v2748 = vshrl.u32 %v2747, 7
    %v2749 = vsub.s32 %v2746, %v2748
    %v2750 = vrot.slane %v2406, %v2749
    %vm2751 = vcmask 982912
    %v2752 = vsel %vm2751, %v2750, %v2745
    %v2753 = vadd.s32 %v2521, 4294967176
    %v2754 = vlaneseq
    %v2755 = vshrl.u32 %v2754, 7
    %v2756 = vsub.s32 %v2753, %v2755
    %v2757 = vrot.slane %v2407, %v2756
    %vm2758 = vcmask 1048512
    %v2759 = vsel %vm2758, %v2757, %v2752
    %v2760 = vlaneseq
    %v2761 = vshrl.u32 %v2760, 7
    %v2762 = vsub.s32 %v2521, %v2761
    %v2763 = vrot.slane %v2408, %v2762
    %v2764 = vlaneseq
    %v2765 = vshrl.u32 %v2764, 7
    %v2766 = vsub.s32 %v2655, %v2765
    %v2767 = vrot.slane %v2409, %v2766
    %v2768 = vsel %vm2660, %v2767, %v2763
    %v2769 = vlaneseq
    %v2770 = vshrl.u32 %v2769, 7
    %v2771 = vsub.s32 %v2662, %v2770
    %v2772 = vrot.slane %v2410, %v2771
    %v2773 = vsel %vm2667, %v2772, %v2768
    %v2774 = vlaneseq
    %v2775 = vshrl.u32 %v2774, 7
    %v2776 = vsub.s32 %v2669, %v2775
    %v2777 = vrot.slane %v2411, %v2776
    %v2778 = vsel %vm2674, %v2777, %v2773
    %v2779 = vlaneseq
    %v2780 = vshrl.u32 %v2779, 7
    %v2781 = vsub.s32 %v2676, %v2780
    %v2782 = vrot.slane %v2412, %v2781
    %v2783 = vsel %vm2681, %v2782, %v2778
    %v2784 = vlaneseq
    %v2785 = vshrl.u32 %v2784, 7
    %v2786 = vsub.s32 %v2683, %v2785
    %v2787 = vrot.slane %v2413, %v2786
    %v2788 = vsel %vm2688, %v2787, %v2783
    %v2789 = vlaneseq
    %v2790 = vshrl.u32 %v2789, 7
    %v2791 = vsub.s32 %v2690, %v2790
    %v2792 = vrot.slane %v2414, %v2791
    %v2793 = vsel %vm2695, %v2792, %v2788
    %v2794 = vlaneseq
    %v2795 = vshrl.u32 %v2794, 7
    %v2796 = vsub.s32 %v2697, %v2795
    %v2797 = vrot.slane %v2415, %v2796
    %v2798 = vsel %vm2702, %v2797, %v2793
    %v2799 = vlaneseq
    %v2800 = vshrl.u32 %v2799, 7
    %v2801 = vsub.s32 %v2704, %v2800
    %v2802 = vrot.slane %v2416, %v2801
    %v2803 = vsel %vm2709, %v2802, %v2798
    %v2804 = vlaneseq
    %v2805 = vshrl.u32 %v2804, 7
    %v2806 = vsub.s32 %v2711, %v2805
    %v2807 = vrot.slane %v2417, %v2806
    %v2808 = vsel %vm2716, %v2807, %v2803
    %v2809 = vlaneseq
    %v2810 = vshrl.u32 %v2809, 7
    %v2811 = vsub.s32 %v2718, %v2810
    %v2812 = vrot.slane %v2418, %v2811
    %v2813 = vsel %vm2723, %v2812, %v2808
    %v2814 = vlaneseq
    %v2815 = vshrl.u32 %v2814, 7
    %v2816 = vsub.s32 %v2725, %v2815
    %v2817 = vrot.slane %v2419, %v2816
    %v2818 = vsel %vm2730, %v2817, %v2813
    %v2819 = vlaneseq
    %v2820 = vshrl.u32 %v2819, 7
    %v2821 = vsub.s32 %v2732, %v2820
    %v2822 = vrot.slane %v2420, %v2821
    %v2823 = vsel %vm2737, %v2822, %v2818
    %v2824 = vlaneseq
    %v2825 = vshrl.u32 %v2824, 7
    %v2826 = vsub.s32 %v2739, %v2825
    %v2827 = vrot.slane %v2421, %v2826
    %v2828 = vsel %vm2744, %v2827, %v2823
    %v2829 = vlaneseq
    %v2830 = vshrl.u32 %v2829, 7
    %v2831 = vsub.s32 %v2746, %v2830
    %v2832 = vrot.slane %v2422, %v2831
    %v2833 = vsel %vm2751, %v2832, %v2828
    %v2834 = vlaneseq
    %v2835 = vshrl.u32 %v2834, 7
    %v2836 = vsub.s32 %v2753, %v2835
    %v2837 = vrot.slane %v2423, %v2836
    %v2838 = vsel %vm2758, %v2837, %v2833
    %v2839 = vlaneseq
    %v2840 = vshrl.u32 %v2839, 7
    %v2841 = vsub.s32 %v2521, %v2840
    %v2842 = vrot.slane %v2424, %v2841
    %v2843 = vlaneseq
    %v2844 = vshrl.u32 %v2843, 7
    %v2845 = vsub.s32 %v2655, %v2844
    %v2846 = vrot.slane %v2425, %v2845
    %v2847 = vsel %vm2660, %v2846, %v2842
    %v2848 = vlaneseq
    %v2849 = vshrl.u32 %v2848, 7
    %v2850 = vsub.s32 %v2662, %v2849
    %v2851 = vrot.slane %v2426, %v2850
    %v2852 = vsel %vm2667, %v2851, %v2847
    %v2853 = vlaneseq
    %v2854 = vshrl.u32 %v2853, 7
    %v2855 = vsub.s32 %v2669, %v2854
    %v2856 = vrot.slane %v2427, %v2855
    %v2857 = vsel %vm2674, %v2856, %v2852
    %v2858 = vlaneseq
    %v2859 = vshrl.u32 %v2858, 7
    %v2860 = vsub.s32 %v2676, %v2859
    %v2861 = vrot.slane %v2428, %v2860
    %v2862 = vsel %vm2681, %v2861, %v2857
    %v2863 = vlaneseq
    %v2864 = vshrl.u32 %v2863, 7
    %v2865 = vsub.s32 %v2683, %v2864
    %v2866 = vrot.slane %v2429, %v2865
    %v2867 = vsel %vm2688, %v2866, %v2862
    %v2868 = vlaneseq
    %v2869 = vshrl.u32 %v2868, 7
    %v2870 = vsub.s32 %v2690, %v2869
    %v2871 = vrot.slane %v2430, %v2870
    %v2872 = vsel %vm2695, %v2871, %v2867
    %v2873 = vlaneseq
    %v2874 = vshrl.u32 %v2873, 7
    %v2875 = vsub.s32 %v2697, %v2874
    %v2876 = vrot.slane %v2431, %v2875
    %v2877 = vsel %vm2702, %v2876, %v2872
    %v2878 = vlaneseq
    %v2879 = vshrl.u32 %v2878, 7
    %v2880 = vsub.s32 %v2704, %v2879
    %v2881 = vrot.slane %v2432, %v2880
    %v2882 = vsel %vm2709, %v2881, %v2877
    %v2883 = vlaneseq
    %v2884 = vshrl.u32 %v2883, 7
    %v2885 = vsub.s32 %v2711, %v2884
    %v2886 = vrot.slane %v2433, %v2885
    %v2887 = vsel %vm2716, %v2886, %v2882
    %v2888 = vlaneseq
    %v2889 = vshrl.u32 %v2888, 7
    %v2890 = vsub.s32 %v2718, %v2889
    %v2891 = vrot.slane %v2434, %v2890
    %v2892 = vsel %vm2723, %v2891, %v2887
    %v2893 = vlaneseq
    %v2894 = vshrl.u32 %v2893, 7
    %v2895 = vsub.s32 %v2725, %v2894
    %v2896 = vrot.slane %v2435, %v2895
    %v2897 = vsel %vm2730, %v2896, %v2892
    %v2898 = vlaneseq
    %v2899 = vshrl.u32 %v2898, 7
    %v2900 = vsub.s32 %v2732, %v2899
    %v2901 = vrot.slane %v2436, %v2900
    %v2902 = vsel %vm2737, %v2901, %v2897
    %v2903 = vlaneseq
    %v2904 = vshrl.u32 %v2903, 7
    %v2905 = vsub.s32 %v2739, %v2904
    %v2906 = vrot.slane %v2437, %v2905
    %v2907 = vsel %vm2744, %v2906, %v2902
    %v2908 = vlaneseq
    %v2909 = vshrl.u32 %v2908, 7
    %v2910 = vsub.s32 %v2746, %v2909
    %v2911 = vrot.slane %v2438, %v2910
    %v2912 = vsel %vm2751, %v2911, %v2907
    %v2913 = vlaneseq
    %v2914 = vshrl.u32 %v2913, 7
    %v2915 = vsub.s32 %v2753, %v2914
    %v2916 = vrot.slane %v2439, %v2915
    %v2917 = vsel %vm2758, %v2916, %v2912
    %v2918 = vlaneseq
    %v2919 = vshrl.u32 %v2918, 7
    %v2920 = vsub.s32 %v2521, %v2919
    %v2921 = vrot.slane %v2440, %v2920
    %v2922 = vlaneseq
    %v2923 = vshrl.u32 %v2922, 7
    %v2924 = vsub.s32 %v2655, %v2923
    %v2925 = vrot.slane %v2441, %v2924
    %v2926 = vsel %vm2660, %v2925, %v2921
    %v2927 = vlaneseq
    %v2928 = vshrl.u32 %v2927, 7
    %v2929 = vsub.s32 %v2662, %v2928
    %v2930 = vrot.slane %v2442, %v2929
    %v2931 = vsel %vm2667, %v2930, %v2926
    %v2932 = vlaneseq
    %v2933 = vshrl.u32 %v2932, 7
    %v2934 = vsub.s32 %v2669, %v2933
    %v2935 = vrot.slane %v2443, %v2934
    %v2936 = vsel %vm2674, %v2935, %v2931
    %v2937 = vlaneseq
    %v2938 = vshrl.u32 %v2937, 7
    %v2939 = vsub.s32 %v2676, %v2938
    %v2940 = vrot.slane %v2444, %v2939
    %v2941 = vsel %vm2681, %v2940, %v2936
    %v2942 = vlaneseq
    %v2943 = vshrl.u32 %v2942, 7
    %v2944 = vsub.s32 %v2683, %v2943
    %v2945 = vrot.slane %v2445, %v2944
    %v2946 = vsel %vm2688, %v2945, %v2941
    %v2947 = vlaneseq
    %v2948 = vshrl.u32 %v2947, 7
    %v2949 = vsub.s32 %v2690, %v2948
    %v2950 = vrot.slane %v2446, %v2949
    %v2951 = vsel %vm2695, %v2950, %v2946
    %v2952 = vlaneseq
    %v2953 = vshrl.u32 %v2952, 7
    %v2954 = vsub.s32 %v2697, %v2953
    %v2955 = vrot.slane %v2447, %v2954
    %v2956 = vsel %vm2702, %v2955, %v2951
    %v2957 = vlaneseq
    %v2958 = vshrl.u32 %v2957, 7
    %v2959 = vsub.s32 %v2704, %v2958
    %v2960 = vrot.slane %v2448, %v2959
    %v2961 = vsel %vm2709, %v2960, %v2956
    %v2962 = vlaneseq
    %v2963 = vshrl.u32 %v2962, 7
    %v2964 = vsub.s32 %v2711, %v2963
    %v2965 = vrot.slane %v2449, %v2964
    %v2966 = vsel %vm2716, %v2965, %v2961
    %v2967 = vlaneseq
    %v2968 = vshrl.u32 %v2967, 7
    %v2969 = vsub.s32 %v2718, %v2968
    %v2970 = vrot.slane %v2450, %v2969
    %v2971 = vsel %vm2723, %v2970, %v2966
    %v2972 = vlaneseq
    %v2973 = vshrl.u32 %v2972, 7
    %v2974 = vsub.s32 %v2725, %v2973
    %v2975 = vrot.slane %v2451, %v2974
    %v2976 = vsel %vm2730, %v2975, %v2971
    %v2977 = vlaneseq
    %v2978 = vshrl.u32 %v2977, 7
    %v2979 = vsub.s32 %v2732, %v2978
    %v2980 = vrot.slane %v2452, %v2979
    %v2981 = vsel %vm2737, %v2980, %v2976
    %v2982 = vlaneseq
    %v2983 = vshrl.u32 %v2982, 7
    %v2984 = vsub.s32 %v2739, %v2983
    %v2985 = vrot.slane %v2453, %v2984
    %v2986 = vsel %vm2744, %v2985, %v2981
    %v2987 = vlaneseq
    %v2988 = vshrl.u32 %v2987, 7
    %v2989 = vsub.s32 %v2746, %v2988
    %v2990 = vrot.slane %v2454, %v2989
    %v2991 = vsel %vm2751, %v2990, %v2986
    %v2992 = vlaneseq
    %v2993 = vshrl.u32 %v2992, 7
    %v2994 = vsub.s32 %v2753, %v2993
    %v2995 = vrot.slane %v2455, %v2994
    %v2996 = vsel %vm2758, %v2995, %v2991
    %v2997 = vlaneseq
    %v2998 = vshrl.u32 %v2997, 7
    %v2999 = vsub.s32 %v2521, %v2998
    %v3000 = vrot.slane %v2456, %v2999
    %v3001 = vlaneseq
    %v3002 = vshrl.u32 %v3001, 7
    %v3003 = vsub.s32 %v2655, %v3002
    %v3004 = vrot.slane %v2457, %v3003
    %v3005 = vsel %vm2660, %v3004, %v3000
    %v3006 = vlaneseq
    %v3007 = vshrl.u32 %v3006, 7
    %v3008 = vsub.s32 %v2662, %v3007
    %v3009 = vrot.slane %v2458, %v3008
    %v3010 = vsel %vm2667, %v3009, %v3005
    %v3011 = vlaneseq
    %v3012 = vshrl.u32 %v3011, 7
    %v3013 = vsub.s32 %v2669, %v3012
    %v3014 = vrot.slane %v2459, %v3013
    %v3015 = vsel %vm2674, %v3014, %v3010
    %v3016 = vlaneseq
    %v3017 = vshrl.u32 %v3016, 7
    %v3018 = vsub.s32 %v2676, %v3017
    %v3019 = vrot.slane %v2460, %v3018
    %v3020 = vsel %vm2681, %v3019, %v3015
    %v3021 = vlaneseq
    %v3022 = vshrl.u32 %v3021, 7
    %v3023 = vsub.s32 %v2683, %v3022
    %v3024 = vrot.slane %v2461, %v3023
    %v3025 = vsel %vm2688, %v3024, %v3020
    %v3026 = vlaneseq
    %v3027 = vshrl.u32 %v3026, 7
    %v3028 = vsub.s32 %v2690, %v3027
    %v3029 = vrot.slane %v2462, %v3028
    %v3030 = vsel %vm2695, %v3029, %v3025
    %v3031 = vlaneseq
    %v3032 = vshrl.u32 %v3031, 7
    %v3033 = vsub.s32 %v2697, %v3032
    %v3034 = vrot.slane %v2463, %v3033
    %v3035 = vsel %vm2702, %v3034, %v3030
    %v3036 = vlaneseq
    %v3037 = vshrl.u32 %v3036, 7
    %v3038 = vsub.s32 %v2704, %v3037
    %v3039 = vrot.slane %v2464, %v3038
    %v3040 = vsel %vm2709, %v3039, %v3035
    %v3041 = vlaneseq
    %v3042 = vshrl.u32 %v3041, 7
    %v3043 = vsub.s32 %v2711, %v3042
    %v3044 = vrot.slane %v2465, %v3043
    %v3045 = vsel %vm2716, %v3044, %v3040
    %v3046 = vlaneseq
    %v3047 = vshrl.u32 %v3046, 7
    %v3048 = vsub.s32 %v2718, %v3047
    %v3049 = vrot.slane %v2466, %v3048
    %v3050 = vsel %vm2723, %v3049, %v3045
    %v3051 = vlaneseq
    %v3052 = vshrl.u32 %v3051, 7
    %v3053 = vsub.s32 %v2725, %v3052
    %v3054 = vrot.slane %v2467, %v3053
    %v3055 = vsel %vm2730, %v3054, %v3050
    %v3056 = vlaneseq
    %v3057 = vshrl.u32 %v3056, 7
    %v3058 = vsub.s32 %v2732, %v3057
    %v3059 = vrot.slane %v2468, %v3058
    %v3060 = vsel %vm2737, %v3059, %v3055
    %v3061 = vlaneseq
    %v3062 = vshrl.u32 %v3061, 7
    %v3063 = vsub.s32 %v2739, %v3062
    %v3064 = vrot.slane %v2469, %v3063
    %v3065 = vsel %vm2744, %v3064, %v3060
    %v3066 = vlaneseq
    %v3067 = vshrl.u32 %v3066, 7
    %v3068 = vsub.s32 %v2746, %v3067
    %v3069 = vrot.slane %v2470, %v3068
    %v3070 = vsel %vm2751, %v3069, %v3065
    %v3071 = vlaneseq
    %v3072 = vshrl.u32 %v3071, 7
    %v3073 = vsub.s32 %v2753, %v3072
    %v3074 = vrot.slane %v2471, %v3073
    %v3075 = vsel %vm2758, %v3074, %v3070
    %v3076 = vlaneseq
    %v3077 = vshrl.u32 %v3076, 7
    %v3078 = vsub.s32 %v2521, %v3077
    %v3079 = vrot.slane %v2472, %v3078
    %v3080 = vlaneseq
    %v3081 = vshrl.u32 %v3080, 7
    %v3082 = vsub.s32 %v2655, %v3081
    %v3083 = vrot.slane %v2473, %v3082
    %v3084 = vsel %vm2660, %v3083, %v3079
    %v3085 = vlaneseq
    %v3086 = vshrl.u32 %v3085, 7
    %v3087 = vsub.s32 %v2662, %v3086
    %v3088 = vrot.slane %v2474, %v3087
    %v3089 = vsel %vm2667, %v3088, %v3084
    %v3090 = vlaneseq
    %v3091 = vshrl.u32 %v3090, 7
    %v3092 = vsub.s32 %v2669, %v3091
    %v3093 = vrot.slane %v2475, %v3092
    %v3094 = vsel %vm2674, %v3093, %v3089
    %v3095 = vlaneseq
    %v3096 = vshrl.u32 %v3095, 7
    %v3097 = vsub.s32 %v2676, %v3096
    %v3098 = vrot.slane %v2476, %v3097
    %v3099 = vsel %vm2681, %v3098, %v3094
    %v3100 = vlaneseq
    %v3101 = vshrl.u32 %v3100, 7
    %v3102 = vsub.s32 %v2683, %v3101
    %v3103 = vrot.slane %v2477, %v3102
    %v3104 = vsel %vm2688, %v3103, %v3099
    %v3105 = vlaneseq
    %v3106 = vshrl.u32 %v3105, 7
    %v3107 = vsub.s32 %v2690, %v3106
    %v3108 = vrot.slane %v2478, %v3107
    %v3109 = vsel %vm2695, %v3108, %v3104
    %v3110 = vlaneseq
    %v3111 = vshrl.u32 %v3110, 7
    %v3112 = vsub.s32 %v2697, %v3111
    %v3113 = vrot.slane %v2479, %v3112
    %v3114 = vsel %vm2702, %v3113, %v3109
    %v3115 = vlaneseq
    %v3116 = vshrl.u32 %v3115, 7
    %v3117 = vsub.s32 %v2704, %v3116
    %v3118 = vrot.slane %v2480, %v3117
    %v3119 = vsel %vm2709, %v3118, %v3114
    %v3120 = vlaneseq
    %v3121 = vshrl.u32 %v3120, 7
    %v3122 = vsub.s32 %v2711, %v3121
    %v3123 = vrot.slane %v2481, %v3122
    %v3124 = vsel %vm2716, %v3123, %v3119
    %v3125 = vlaneseq
    %v3126 = vshrl.u32 %v3125, 7
    %v3127 = vsub.s32 %v2718, %v3126
    %v3128 = vrot.slane %v2482, %v3127
    %v3129 = vsel %vm2723, %v3128, %v3124
    %v3130 = vlaneseq
    %v3131 = vshrl.u32 %v3130, 7
    %v3132 = vsub.s32 %v2725, %v3131
    %v3133 = vrot.slane %v2483, %v3132
    %v3134 = vsel %vm2730, %v3133, %v3129
    %v3135 = vlaneseq
    %v3136 = vshrl.u32 %v3135, 7
    %v3137 = vsub.s32 %v2732, %v3136
    %v3138 = vrot.slane %v2484, %v3137
    %v3139 = vsel %vm2737, %v3138, %v3134
    %v3140 = vlaneseq
    %v3141 = vshrl.u32 %v3140, 7
    %v3142 = vsub.s32 %v2739, %v3141
    %v3143 = vrot.slane %v2485, %v3142
    %v3144 = vsel %vm2744, %v3143, %v3139
    %v3145 = vlaneseq
    %v3146 = vshrl.u32 %v3145, 7
    %v3147 = vsub.s32 %v2746, %v3146
    %v3148 = vrot.slane %v2486, %v3147
    %v3149 = vsel %vm2751, %v3148, %v3144
    %v3150 = vlaneseq
    %v3151 = vshrl.u32 %v3150, 7
    %v3152 = vsub.s32 %v2753, %v3151
    %v3153 = vrot.slane %v2487, %v3152
    %v3154 = vsel %vm2758, %v3153, %v3149
    %v3155 = vlaneseq
    %v3156 = vshrl.u32 %v3155, 7
    %v3157 = vsub.s32 %v2521, %v3156
    %v3158 = vrot.slane %v2488, %v3157
    %v3159 = vlaneseq
    %v3160 = vshrl.u32 %v3159, 7
    %v3161 = vsub.s32 %v2655, %v3160
    %v3162 = vrot.slane %v2489, %v3161
    %v3163 = vsel %vm2660, %v3162, %v3158
    %v3164 = vlaneseq
    %v3165 = vshrl.u32 %v3164, 7
    %v3166 = vsub.s32 %v2662, %v3165
    %v3167 = vrot.slane %v2490, %v3166
    %v3168 = vsel %vm2667, %v3167, %v3163
    %v3169 = vlaneseq
    %v3170 = vshrl.u32 %v3169, 7
    %v3171 = vsub.s32 %v2669, %v3170
    %v3172 = vrot.slane %v2491, %v3171
    %v3173 = vsel %vm2674, %v3172, %v3168
    %v3174 = vlaneseq
    %v3175 = vshrl.u32 %v3174, 7
    %v3176 = vsub.s32 %v2676, %v3175
    %v3177 = vrot.slane %v2492, %v3176
    %v3178 = vsel %vm2681, %v3177, %v3173
    %v3179 = vlaneseq
    %v3180 = vshrl.u32 %v3179, 7
    %v3181 = vsub.s32 %v2683, %v3180
    %v3182 = vrot.slane %v2493, %v3181
    %v3183 = vsel %vm2688, %v3182, %v3178
    %v3184 = vlaneseq
    %v3185 = vshrl.u32 %v3184, 7
    %v3186 = vsub.s32 %v2690, %v3185
    %v3187 = vrot.slane %v2494, %v3186
    %v3188 = vsel %vm2695, %v3187, %v3183
    %v3189 = vlaneseq
    %v3190 = vshrl.u32 %v3189, 7
    %v3191 = vsub.s32 %v2697, %v3190
    %v3192 = vrot.slane %v2495, %v3191
    %v3193 = vsel %vm2702, %v3192, %v3188
    %v3194 = vlaneseq
    %v3195 = vshrl.u32 %v3194, 7
    %v3196 = vsub.s32 %v2704, %v3195
    %v3197 = vrot.slane %v2496, %v3196
    %v3198 = vsel %vm2709, %v3197, %v3193
    %v3199 = vlaneseq
    %v3200 = vshrl.u32 %v3199, 7
    %v3201 = vsub.s32 %v2711, %v3200
    %v3202 = vrot.slane %v2497, %v3201
    %v3203 = vsel %vm2716, %v3202, %v3198
    %v3204 = vlaneseq
    %v3205 = vshrl.u32 %v3204, 7
    %v3206 = vsub.s32 %v2718, %v3205
    %v3207 = vrot.slane %v2498, %v3206
    %v3208 = vsel %vm2723, %v3207, %v3203
    %v3209 = vlaneseq
    %v3210 = vshrl.u32 %v3209, 7
    %v3211 = vsub.s32 %v2725, %v3210
    %v3212 = vrot.slane %v2499, %v3211
    %v3213 = vsel %vm2730, %v3212, %v3208
    %v3214 = vlaneseq
    %v3215 = vshrl.u32 %v3214, 7
    %v3216 = vsub.s32 %v2732, %v3215
    %v3217 = vrot.slane %v2500, %v3216
    %v3218 = vsel %vm2737, %v3217, %v3213
    %v3219 = vlaneseq
    %v3220 = vshrl.u32 %v3219, 7
    %v3221 = vsub.s32 %v2739, %v3220
    %v3222 = vrot.slane %v2501, %v3221
    %v3223 = vsel %vm2744, %v3222, %v3218
    %v3224 = vlaneseq
    %v3225 = vshrl.u32 %v3224, 7
    %v3226 = vsub.s32 %v2746, %v3225
    %v3227 = vrot.slane %v2502, %v3226
    %v3228 = vsel %vm2751, %v3227, %v3223
    %v3229 = vlaneseq
    %v3230 = vshrl.u32 %v3229, 7
    %v3231 = vsub.s32 %v2753, %v3230
    %v3232 = vrot.slane %v2503, %v3231
    %v3233 = vsel %vm2758, %v3232, %v3228
    %v3234 = vlaneseq
    %v3235 = vshrl.u32 %v3234, 7
    %v3236 = vsub.s32 %v2521, %v3235
    %v3237 = vrot.slane %v2504, %v3236
    %v3238 = vlaneseq
    %v3239 = vshrl.u32 %v3238, 7
    %v3240 = vsub.s32 %v2655, %v3239
    %v3241 = vrot.slane %v2505, %v3240
    %v3242 = vsel %vm2660, %v3241, %v3237
    %v3243 = vlaneseq
    %v3244 = vshrl.u32 %v3243, 7
    %v3245 = vsub.s32 %v2662, %v3244
    %v3246 = vrot.slane %v2506, %v3245
    %v3247 = vsel %vm2667, %v3246, %v3242
    %v3248 = vlaneseq
    %v3249 = vshrl.u32 %v3248, 7
    %v3250 = vsub.s32 %v2669, %v3249
    %v3251 = vrot.slane %v2507, %v3250
    %v3252 = vsel %vm2674, %v3251, %v3247
    %v3253 = vlaneseq
    %v3254 = vshrl.u32 %v3253, 7
    %v3255 = vsub.s32 %v2676, %v3254
    %v3256 = vrot.slane %v2508, %v3255
    %v3257 = vsel %vm2681, %v3256, %v3252
    %v3258 = vlaneseq
    %v3259 = vshrl.u32 %v3258, 7
    %v3260 = vsub.s32 %v2683, %v3259
    %v3261 = vrot.slane %v2509, %v3260
    %v3262 = vsel %vm2688, %v3261, %v3257
    %v3263 = vlaneseq
    %v3264 = vshrl.u32 %v3263, 7
    %v3265 = vsub.s32 %v2690, %v3264
    %v3266 = vrot.slane %v2510, %v3265
    %v3267 = vsel %vm2695, %v3266, %v3262
    %v3268 = vlaneseq
    %v3269 = vshrl.u32 %v3268, 7
    %v3270 = vsub.s32 %v2697, %v3269
    %v3271 = vrot.slane %v2511, %v3270
    %v3272 = vsel %vm2702, %v3271, %v3267
    %v3273 = vlaneseq
    %v3274 = vshrl.u32 %v3273, 7
    %v3275 = vsub.s32 %v2704, %v3274
    %v3276 = vrot.slane %v2512, %v3275
    %v3277 = vsel %vm2709, %v3276, %v3272
    %v3278 = vlaneseq
    %v3279 = vshrl.u32 %v3278, 7
    %v3280 = vsub.s32 %v2711, %v3279
    %v3281 = vrot.slane %v2513, %v3280
    %v3282 = vsel %vm2716, %v3281, %v3277
    %v3283 = vlaneseq
    %v3284 = vshrl.u32 %v3283, 7
    %v3285 = vsub.s32 %v2718, %v3284
    %v3286 = vrot.slane %v2514, %v3285
    %v3287 = vsel %vm2723, %v3286, %v3282
    %v3288 = vlaneseq
    %v3289 = vshrl.u32 %v3288, 7
    %v3290 = vsub.s32 %v2725, %v3289
    %v3291 = vrot.slane %v2515, %v3290
    %v3292 = vsel %vm2730, %v3291, %v3287
    %v3293 = vlaneseq
    %v3294 = vshrl.u32 %v3293, 7
    %v3295 = vsub.s32 %v2732, %v3294
    %v3296 = vrot.slane %v2516, %v3295
    %v3297 = vsel %vm2737, %v3296, %v3292
    %v3298 = vlaneseq
    %v3299 = vshrl.u32 %v3298, 7
    %v3300 = vsub.s32 %v2739, %v3299
    %v3301 = vrot.slane %v2517, %v3300
    %v3302 = vsel %vm2744, %v3301, %v3297
    %v3303 = vlaneseq
    %v3304 = vshrl.u32 %v3303, 7
    %v3305 = vsub.s32 %v2746, %v3304
    %v3306 = vrot.slane %v2518, %v3305
    %v3307 = vsel %vm2751, %v3306, %v3302
    %v3308 = vlaneseq
    %v3309 = vshrl.u32 %v3308, 7
    %v3310 = vsub.s32 %v2753, %v3309
    %v3311 = vrot.slane %v2519, %v3310
    %v3312 = vsel %vm2758, %v3311, %v3307
    %vm3313 = vcmask 1041409
    %v3314 = vsel %vm3313, %v2838, %v2759
    %vm3315 = vcmask 1042434
    %v3316 = vsel %vm3315, %v2917, %v3314
    %vm3317 = vcmask 1043459
    %v3318 = vsel %vm3317, %v2996, %v3316
    %vm3319 = vcmask 1044484
    %v3320 = vsel %vm3319, %v3075, %v3318
    %vm3321 = vcmask 1045509
    %v3322 = vsel %vm3321, %v3154, %v3320
    %vm3323 = vcmask 1046534
    %v3324 = vsel %vm3323, %v3233, %v3322
    %vm3325 = vcmask 1047559
    %v3326 = vsel %vm3325, %v3312, %v3324
    %v3328 = vsel %vm2522, %v3326, 0.0
    %3329 = vadd.xlane.f32.xlu0 %v3328
    %v3330 = vpop.xlane.xlu0 %3329
    %v3331 = vrcp.pop 8.0
    %v3332 = vmul.f32 %v3330, %v3331
    %3334 = vset.pattern.permute.xlu0 0
    %3335 = vperm.xlu0 %3334, %v274
    %v3336 = vpop.permute.xlu0 %3335
    %v3337 = vlaneseq
    %v3338 = vshrl.u32 %v3337, 7
    %v3339 = vsub.s32 0, %v3338
    %v3340 = vrot.slane %v3336, %v3339
    %v3341 = vlaneseq
    %v3342 = vshrl.u32 %v3341, 7
    %v3343 = vsub.s32 1, %v3342
    %v3344 = vrot.slane %v3336, %v3343
    %v3345 = vlaneseq
    %v3346 = vshrl.u32 %v3345, 7
    %v3347 = vsub.s32 2, %v3346
    %v3348 = vrot.slane %v3336, %v3347
    %v3349 = vlaneseq
    %v3350 = vshrl.u32 %v3349, 7
    %v3351 = vsub.s32 3, %v3350
    %v3352 = vrot.slane %v3336, %v3351
    %v3353 = vlaneseq
    %v3354 = vshrl.u32 %v3353, 7
    %v3355 = vsub.s32 4, %v3354
    %v3356 = vrot.slane %v3336, %v3355
    %v3357 = vlaneseq
    %v3358 = vshrl.u32 %v3357, 7
    %v3359 = vsub.s32 5, %v3358
    %v3360 = vrot.slane %v3336, %v3359
    %v3361 = vlaneseq
    %v3362 = vshrl.u32 %v3361, 7
    %v3363 = vsub.s32 6, %v3362
    %v3364 = vrot.slane %v3336, %v3363
    %v3365 = vlaneseq
    %v3366 = vshrl.u32 %v3365, 7
    %v3367 = vsub.s32 7, %v3366
    %v3368 = vrot.slane %v3336, %v3367
    %v3377 = vadd.f32 %v2392, %v3340
    %v3378 = vadd.f32 %v2393, %v3340
    %v3379 = vadd.f32 %v2394, %v3340
    %v3380 = vadd.f32 %v2395, %v3340
    %v3381 = vadd.f32 %v2396, %v3340
    %v3382 = vadd.f32 %v2397, %v3340
    %v3383 = vadd.f32 %v2398, %v3340
    %v3384 = vadd.f32 %v2399, %v3340
    %v3385 = vadd.f32 %v2400, %v3340
    %v3386 = vadd.f32 %v2401, %v3340
    %v3387 = vadd.f32 %v2402, %v3340
    %v3388 = vadd.f32 %v2403, %v3340
    %v3389 = vadd.f32 %v2404, %v3340
    %v3390 = vadd.f32 %v2405, %v3340
    %v3391 = vadd.f32 %v2406, %v3340
    %v3392 = vadd.f32 %v2407, %v3340
    %v3393 = vadd.f32 %v2408, %v3344
    %v3394 = vadd.f32 %v2409, %v3344
    %v3395 = vadd.f32 %v2410, %v3344
    %v3396 = vadd.f32 %v2411, %v3344
    %v3397 = vadd.f32 %v2412, %v3344
    %v3398 = vadd.f32 %v2413, %v3344
    %v3399 = vadd.f32 %v2414, %v3344
    %v3400 = vadd.f32 %v2415, %v3344
    %v3401 = vadd.f32 %v2416, %v3344
    %v3402 = vadd.f32 %v2417, %v3344
    %v3403 = vadd.f32 %v2418, %v3344
    %v3404 = vadd.f32 %v2419, %v3344
    %v3405 = vadd.f32 %v2420, %v3344
    %v3406 = vadd.f32 %v2421, %v3344
    %v3407 = vadd.f32 %v2422, %v3344
    %v3408 = vadd.f32 %v2423, %v3344
    %v3409 = vadd.f32 %v2424, %v3348
    %v3410 = vadd.f32 %v2425, %v3348
    %v3411 = vadd.f32 %v2426, %v3348
    %v3412 = vadd.f32 %v2427, %v3348
    %v3413 = vadd.f32 %v2428, %v3348
    %v3414 = vadd.f32 %v2429, %v3348
    %v3415 = vadd.f32 %v2430, %v3348
    %v3416 = vadd.f32 %v2431, %v3348
    %v3417 = vadd.f32 %v2432, %v3348
    %v3418 = vadd.f32 %v2433, %v3348
    %v3419 = vadd.f32 %v2434, %v3348
    %v3420 = vadd.f32 %v2435, %v3348
    %v3421 = vadd.f32 %v2436, %v3348
    %v3422 = vadd.f32 %v2437, %v3348
    %v3423 = vadd.f32 %v2438, %v3348
    %v3424 = vadd.f32 %v2439, %v3348
    %v3425 = vadd.f32 %v2440, %v3352
    %v3426 = vadd.f32 %v2441, %v3352
    %v3427 = vadd.f32 %v2442, %v3352
    %v3428 = vadd.f32 %v2443, %v3352
    %v3429 = vadd.f32 %v2444, %v3352
    %v3430 = vadd.f32 %v2445, %v3352
    %v3431 = vadd.f32 %v2446, %v3352
    %v3432 = vadd.f32 %v2447, %v3352
    %v3433 = vadd.f32 %v2448, %v3352
    %v3434 = vadd.f32 %v2449, %v3352
    %v3435 = vadd.f32 %v2450, %v3352
    %v3436 = vadd.f32 %v2451, %v3352
    %v3437 = vadd.f32 %v2452, %v3352
    %v3438 = vadd.f32 %v2453, %v3352
    %v3439 = vadd.f32 %v2454, %v3352
    %v3440 = vadd.f32 %v2455, %v3352
    %v3441 = vadd.f32 %v2456, %v3356
    %v3442 = vadd.f32 %v2457, %v3356
    %v3443 = vadd.f32 %v2458, %v3356
    %v3444 = vadd.f32 %v2459, %v3356
    %v3445 = vadd.f32 %v2460, %v3356
    %v3446 = vadd.f32 %v2461, %v3356
    %v3447 = vadd.f32 %v2462, %v3356
    %v3448 = vadd.f32 %v2463, %v3356
    %v3449 = vadd.f32 %v2464, %v3356
    %v3450 = vadd.f32 %v2465, %v3356
    %v3451 = vadd.f32 %v2466, %v3356
    %v3452 = vadd.f32 %v2467, %v3356
    %v3453 = vadd.f32 %v2468, %v3356
    %v3454 = vadd.f32 %v2469, %v3356
    %v3455 = vadd.f32 %v2470, %v3356
    %v3456 = vadd.f32 %v2471, %v3356
    %v3457 = vadd.f32 %v2472, %v3360
    %v3458 = vadd.f32 %v2473, %v3360
    %v3459 = vadd.f32 %v2474, %v3360
    %v3460 = vadd.f32 %v2475, %v3360
    %v3461 = vadd.f32 %v2476, %v3360
    %v3462 = vadd.f32 %v2477, %v3360
    %v3463 = vadd.f32 %v2478, %v3360
    %v3464 = vadd.f32 %v2479, %v3360
    %v3465 = vadd.f32 %v2480, %v3360
    %v3466 = vadd.f32 %v2481, %v3360
    %v3467 = vadd.f32 %v2482, %v3360
    %v3468 = vadd.f32 %v2483, %v3360
    %v3469 = vadd.f32 %v2484, %v3360
    %v3470 = vadd.f32 %v2485, %v3360
    %v3471 = vadd.f32 %v2486, %v3360
    %v3472 = vadd.f32 %v2487, %v3360
    %v3473 = vadd.f32 %v2488, %v3364
    %v3474 = vadd.f32 %v2489, %v3364
    %v3475 = vadd.f32 %v2490, %v3364
    %v3476 = vadd.f32 %v2491, %v3364
    %v3477 = vadd.f32 %v2492, %v3364
    %v3478 = vadd.f32 %v2493, %v3364
    %v3479 = vadd.f32 %v2494, %v3364
    %v3480 = vadd.f32 %v2495, %v3364
    %v3481 = vadd.f32 %v2496, %v3364
    %v3482 = vadd.f32 %v2497, %v3364
    %v3483 = vadd.f32 %v2498, %v3364
    %v3484 = vadd.f32 %v2499, %v3364
    %v3485 = vadd.f32 %v2500, %v3364
    %v3486 = vadd.f32 %v2501, %v3364
    %v3487 = vadd.f32 %v2502, %v3364
    %v3488 = vadd.f32 %v2503, %v3364
    %v3489 = vadd.f32 %v2504, %v3368
    %v3490 = vadd.f32 %v2505, %v3368
    %v3491 = vadd.f32 %v2506, %v3368
    %v3492 = vadd.f32 %v2507, %v3368
    %v3493 = vadd.f32 %v2508, %v3368
    %v3494 = vadd.f32 %v2509, %v3368
    %v3495 = vadd.f32 %v2510, %v3368
    %v3496 = vadd.f32 %v2511, %v3368
    %v3497 = vadd.f32 %v2512, %v3368
    %v3498 = vadd.f32 %v2513, %v3368
    %v3499 = vadd.f32 %v2514, %v3368
    %v3500 = vadd.f32 %v2515, %v3368
    %v3501 = vadd.f32 %v2516, %v3368
    %v3502 = vadd.f32 %v2517, %v3368
    %v3503 = vadd.f32 %v2518, %v3368
    %v3504 = vadd.f32 %v2519, %v3368
    %v3506 = vlaneseq
    %v3507 = vshrl.u32 %v3506, 7
    %v3508 = vsub.s32 0, %v3507
    %v3509 = vrot.slane %v3332, %v3508
    %v3510 = vlaneseq
    %v3511 = vshrl.u32 %v3510, 7
    %v3512 = vsub.s32 1, %v3511
    %v3513 = vrot.slane %v3332, %v3512
    %v3514 = vlaneseq
    %v3515 = vshrl.u32 %v3514, 7
    %v3516 = vsub.s32 2, %v3515
    %v3517 = vrot.slane %v3332, %v3516
    %v3518 = vlaneseq
    %v3519 = vshrl.u32 %v3518, 7
    %v3520 = vsub.s32 3, %v3519
    %v3521 = vrot.slane %v3332, %v3520
    %v3522 = vlaneseq
    %v3523 = vshrl.u32 %v3522, 7
    %v3524 = vsub.s32 4, %v3523
    %v3525 = vrot.slane %v3332, %v3524
    %v3526 = vlaneseq
    %v3527 = vshrl.u32 %v3526, 7
    %v3528 = vsub.s32 5, %v3527
    %v3529 = vrot.slane %v3332, %v3528
    %v3530 = vlaneseq
    %v3531 = vshrl.u32 %v3530, 7
    %v3532 = vsub.s32 6, %v3531
    %v3533 = vrot.slane %v3332, %v3532
    %v3534 = vlaneseq
    %v3535 = vshrl.u32 %v3534, 7
    %v3536 = vsub.s32 7, %v3535
    %v3537 = vrot.slane %v3332, %v3536
    %v3546 = vsub.f32 %v3377, %v3509
    %v3547 = vsub.f32 %v3378, %v3509
    %v3548 = vsub.f32 %v3379, %v3509
    %v3549 = vsub.f32 %v3380, %v3509
    %v3550 = vsub.f32 %v3381, %v3509
    %v3551 = vsub.f32 %v3382, %v3509
    %v3552 = vsub.f32 %v3383, %v3509
    %v3553 = vsub.f32 %v3384, %v3509
    %v3554 = vsub.f32 %v3385, %v3509
    %v3555 = vsub.f32 %v3386, %v3509
    %v3556 = vsub.f32 %v3387, %v3509
    %v3557 = vsub.f32 %v3388, %v3509
    %v3558 = vsub.f32 %v3389, %v3509
    %v3559 = vsub.f32 %v3390, %v3509
    %v3560 = vsub.f32 %v3391, %v3509
    %v3561 = vsub.f32 %v3392, %v3509
    %v3562 = vsub.f32 %v3393, %v3513
    %v3563 = vsub.f32 %v3394, %v3513
    %v3564 = vsub.f32 %v3395, %v3513
    %v3565 = vsub.f32 %v3396, %v3513
    %v3566 = vsub.f32 %v3397, %v3513
    %v3567 = vsub.f32 %v3398, %v3513
    %v3568 = vsub.f32 %v3399, %v3513
    %v3569 = vsub.f32 %v3400, %v3513
    %v3570 = vsub.f32 %v3401, %v3513
    %v3571 = vsub.f32 %v3402, %v3513
    %v3572 = vsub.f32 %v3403, %v3513
    %v3573 = vsub.f32 %v3404, %v3513
    %v3574 = vsub.f32 %v3405, %v3513
    %v3575 = vsub.f32 %v3406, %v3513
    %v3576 = vsub.f32 %v3407, %v3513
    %v3577 = vsub.f32 %v3408, %v3513
    %v3578 = vsub.f32 %v3409, %v3517
    %v3579 = vsub.f32 %v3410, %v3517
    %v3580 = vsub.f32 %v3411, %v3517
    %v3581 = vsub.f32 %v3412, %v3517
    %v3582 = vsub.f32 %v3413, %v3517
    %v3583 = vsub.f32 %v3414, %v3517
    %v3584 = vsub.f32 %v3415, %v3517
    %v3585 = vsub.f32 %v3416, %v3517
    %v3586 = vsub.f32 %v3417, %v3517
    %v3587 = vsub.f32 %v3418, %v3517
    %v3588 = vsub.f32 %v3419, %v3517
    %v3589 = vsub.f32 %v3420, %v3517
    %v3590 = vsub.f32 %v3421, %v3517
    %v3591 = vsub.f32 %v3422, %v3517
    %v3592 = vsub.f32 %v3423, %v3517
    %v3593 = vsub.f32 %v3424, %v3517
    %v3594 = vsub.f32 %v3425, %v3521
    %v3595 = vsub.f32 %v3426, %v3521
    %v3596 = vsub.f32 %v3427, %v3521
    %v3597 = vsub.f32 %v3428, %v3521
    %v3598 = vsub.f32 %v3429, %v3521
    %v3599 = vsub.f32 %v3430, %v3521
    %v3600 = vsub.f32 %v3431, %v3521
    %v3601 = vsub.f32 %v3432, %v3521
    %v3602 = vsub.f32 %v3433, %v3521
    %v3603 = vsub.f32 %v3434, %v3521
    %v3604 = vsub.f32 %v3435, %v3521
    %v3605 = vsub.f32 %v3436, %v3521
    %v3606 = vsub.f32 %v3437, %v3521
    %v3607 = vsub.f32 %v3438, %v3521
    %v3608 = vsub.f32 %v3439, %v3521
    %v3609 = vsub.f32 %v3440, %v3521
    %v3610 = vsub.f32 %v3441, %v3525
    %v3611 = vsub.f32 %v3442, %v3525
    %v3612 = vsub.f32 %v3443, %v3525
    %v3613 = vsub.f32 %v3444, %v3525
    %v3614 = vsub.f32 %v3445, %v3525
    %v3615 = vsub.f32 %v3446, %v3525
    %v3616 = vsub.f32 %v3447, %v3525
    %v3617 = vsub.f32 %v3448, %v3525
    %v3618 = vsub.f32 %v3449, %v3525
    %v3619 = vsub.f32 %v3450, %v3525
    %v3620 = vsub.f32 %v3451, %v3525
    %v3621 = vsub.f32 %v3452, %v3525
    %v3622 = vsub.f32 %v3453, %v3525
    %v3623 = vsub.f32 %v3454, %v3525
    %v3624 = vsub.f32 %v3455, %v3525
    %v3625 = vsub.f32 %v3456, %v3525
    %v3626 = vsub.f32 %v3457, %v3529
    %v3627 = vsub.f32 %v3458, %v3529
    %v3628 = vsub.f32 %v3459, %v3529
    %v3629 = vsub.f32 %v3460, %v3529
    %v3630 = vsub.f32 %v3461, %v3529
    %v3631 = vsub.f32 %v3462, %v3529
    %v3632 = vsub.f32 %v3463, %v3529
    %v3633 = vsub.f32 %v3464, %v3529
    %v3634 = vsub.f32 %v3465, %v3529
    %v3635 = vsub.f32 %v3466, %v3529
    %v3636 = vsub.f32 %v3467, %v3529
    %v3637 = vsub.f32 %v3468, %v3529
    %v3638 = vsub.f32 %v3469, %v3529
    %v3639 = vsub.f32 %v3470, %v3529
    %v3640 = vsub.f32 %v3471, %v3529
    %v3641 = vsub.f32 %v3472, %v3529
    %v3642 = vsub.f32 %v3473, %v3533
    %v3643 = vsub.f32 %v3474, %v3533
    %v3644 = vsub.f32 %v3475, %v3533
    %v3645 = vsub.f32 %v3476, %v3533
    %v3646 = vsub.f32 %v3477, %v3533
    %v3647 = vsub.f32 %v3478, %v3533
    %v3648 = vsub.f32 %v3479, %v3533
    %v3649 = vsub.f32 %v3480, %v3533
    %v3650 = vsub.f32 %v3481, %v3533
    %v3651 = vsub.f32 %v3482, %v3533
    %v3652 = vsub.f32 %v3483, %v3533
    %v3653 = vsub.f32 %v3484, %v3533
    %v3654 = vsub.f32 %v3485, %v3533
    %v3655 = vsub.f32 %v3486, %v3533
    %v3656 = vsub.f32 %v3487, %v3533
    %v3657 = vsub.f32 %v3488, %v3533
    %v3658 = vsub.f32 %v3489, %v3537
    %v3659 = vsub.f32 %v3490, %v3537
    %v3660 = vsub.f32 %v3491, %v3537
    %v3661 = vsub.f32 %v3492, %v3537
    %v3662 = vsub.f32 %v3493, %v3537
    %v3663 = vsub.f32 %v3494, %v3537
    %v3664 = vsub.f32 %v3495, %v3537
    %v3665 = vsub.f32 %v3496, %v3537
    %v3666 = vsub.f32 %v3497, %v3537
    %v3667 = vsub.f32 %v3498, %v3537
    %v3668 = vsub.f32 %v3499, %v3537
    %v3669 = vsub.f32 %v3500, %v3537
    %v3670 = vsub.f32 %v3501, %v3537
    %v3671 = vsub.f32 %v3502, %v3537
    %v3672 = vsub.f32 %v3503, %v3537
    %v3673 = vsub.f32 %v3504, %v3537
    %3802 = vset.pattern.permute.xlu0 0
    %3803 = vperm.xlu0 %3802, %v3546
    %v3804 = vpop.permute.xlu0 %3803
    %3805 = vset.pattern.permute.xlu0 0
    %3806 = vperm.xlu0 %3805, %v3547
    %v3807 = vpop.permute.xlu0 %3806
    %3808 = vset.pattern.permute.xlu0 0
    %3809 = vperm.xlu0 %3808, %v3548
    %v3810 = vpop.permute.xlu0 %3809
    %3811 = vset.pattern.permute.xlu0 0
    %3812 = vperm.xlu0 %3811, %v3549
    %v3813 = vpop.permute.xlu0 %3812
    %3814 = vset.pattern.permute.xlu0 0
    %3815 = vperm.xlu0 %3814, %v3550
    %v3816 = vpop.permute.xlu0 %3815
    %3817 = vset.pattern.permute.xlu0 0
    %3818 = vperm.xlu0 %3817, %v3551
    %v3819 = vpop.permute.xlu0 %3818
    %3820 = vset.pattern.permute.xlu0 0
    %3821 = vperm.xlu0 %3820, %v3552
    %v3822 = vpop.permute.xlu0 %3821
    %3823 = vset.pattern.permute.xlu0 0
    %3824 = vperm.xlu0 %3823, %v3553
    %v3825 = vpop.permute.xlu0 %3824
    %3826 = vset.pattern.permute.xlu0 0
    %3827 = vperm.xlu0 %3826, %v3554
    %v3828 = vpop.permute.xlu0 %3827
    %3829 = vset.pattern.permute.xlu0 0
    %3830 = vperm.xlu0 %3829, %v3555
    %v3831 = vpop.permute.xlu0 %3830
    %3832 = vset.pattern.permute.xlu0 0
    %3833 = vperm.xlu0 %3832, %v3556
    %v3834 = vpop.permute.xlu0 %3833
    %3835 = vset.pattern.permute.xlu0 0
    %3836 = vperm.xlu0 %3835, %v3557
    %v3837 = vpop.permute.xlu0 %3836
    %3838 = vset.pattern.permute.xlu0 0
    %3839 = vperm.xlu0 %3838, %v3558
    %v3840 = vpop.permute.xlu0 %3839
    %3841 = vset.pattern.permute.xlu0 0
    %3842 = vperm.xlu0 %3841, %v3559
    %v3843 = vpop.permute.xlu0 %3842
    %3844 = vset.pattern.permute.xlu0 0
    %3845 = vperm.xlu0 %3844, %v3560
    %v3846 = vpop.permute.xlu0 %3845
    %3847 = vset.pattern.permute.xlu0 0
    %3848 = vperm.xlu0 %3847, %v3561
    %v3849 = vpop.permute.xlu0 %3848
    %3850 = vset.pattern.permute.xlu0 0
    %3851 = vperm.xlu0 %3850, %v3562
    %v3852 = vpop.permute.xlu0 %3851
    %3853 = vset.pattern.permute.xlu0 0
    %3854 = vperm.xlu0 %3853, %v3563
    %v3855 = vpop.permute.xlu0 %3854
    %3856 = vset.pattern.permute.xlu0 0
    %3857 = vperm.xlu0 %3856, %v3564
    %v3858 = vpop.permute.xlu0 %3857
    %3859 = vset.pattern.permute.xlu0 0
    %3860 = vperm.xlu0 %3859, %v3565
    %v3861 = vpop.permute.xlu0 %3860
    %3862 = vset.pattern.permute.xlu0 0
    %3863 = vperm.xlu0 %3862, %v3566
    %v3864 = vpop.permute.xlu0 %3863
    %3865 = vset.pattern.permute.xlu0 0
    %3866 = vperm.xlu0 %3865, %v3567
    %v3867 = vpop.permute.xlu0 %3866
    %3868 = vset.pattern.permute.xlu0 0
    %3869 = vperm.xlu0 %3868, %v3568
    %v3870 = vpop.permute.xlu0 %3869
    %3871 = vset.pattern.permute.xlu0 0
    %3872 = vperm.xlu0 %3871, %v3569
    %v3873 = vpop.permute.xlu0 %3872
    %3874 = vset.pattern.permute.xlu0 0
    %3875 = vperm.xlu0 %3874, %v3570
    %v3876 = vpop.permute.xlu0 %3875
    %3877 = vset.pattern.permute.xlu0 0
    %3878 = vperm.xlu0 %3877, %v3571
    %v3879 = vpop.permute.xlu0 %3878
    %3880 = vset.pattern.permute.xlu0 0
    %3881 = vperm.xlu0 %3880, %v3572
    %v3882 = vpop.permute.xlu0 %3881
    %3883 = vset.pattern.permute.xlu0 0
    %3884 = vperm.xlu0 %3883, %v3573
    %v3885 = vpop.permute.xlu0 %3884
    %3886 = vset.pattern.permute.xlu0 0
    %3887 = vperm.xlu0 %3886, %v3574
    %v3888 = vpop.permute.xlu0 %3887
    %3889 = vset.pattern.permute.xlu0 0
    %3890 = vperm.xlu0 %3889, %v3575
    %v3891 = vpop.permute.xlu0 %3890
    %3892 = vset.pattern.permute.xlu0 0
    %3893 = vperm.xlu0 %3892, %v3576
    %v3894 = vpop.permute.xlu0 %3893
    %3895 = vset.pattern.permute.xlu0 0
    %3896 = vperm.xlu0 %3895, %v3577
    %v3897 = vpop.permute.xlu0 %3896
    %3898 = vset.pattern.permute.xlu0 0
    %3899 = vperm.xlu0 %3898, %v3578
    %v3900 = vpop.permute.xlu0 %3899
    %3901 = vset.pattern.permute.xlu0 0
    %3902 = vperm.xlu0 %3901, %v3579
    %v3903 = vpop.permute.xlu0 %3902
    %3904 = vset.pattern.permute.xlu0 0
    %3905 = vperm.xlu0 %3904, %v3580
    %v3906 = vpop.permute.xlu0 %3905
    %3907 = vset.pattern.permute.xlu0 0
    %3908 = vperm.xlu0 %3907, %v3581
    %v3909 = vpop.permute.xlu0 %3908
    %3910 = vset.pattern.permute.xlu0 0
    %3911 = vperm.xlu0 %3910, %v3582
    %v3912 = vpop.permute.xlu0 %3911
    %3913 = vset.pattern.permute.xlu0 0
    %3914 = vperm.xlu0 %3913, %v3583
    %v3915 = vpop.permute.xlu0 %3914
    %3916 = vset.pattern.permute.xlu0 0
    %3917 = vperm.xlu0 %3916, %v3584
    %v3918 = vpop.permute.xlu0 %3917
    %3919 = vset.pattern.permute.xlu0 0
    %3920 = vperm.xlu0 %3919, %v3585
    %v3921 = vpop.permute.xlu0 %3920
    %3922 = vset.pattern.permute.xlu0 0
    %3923 = vperm.xlu0 %3922, %v3586
    %v3924 = vpop.permute.xlu0 %3923
    %3925 = vset.pattern.permute.xlu0 0
    %3926 = vperm.xlu0 %3925, %v3587
    %v3927 = vpop.permute.xlu0 %3926
    %3928 = vset.pattern.permute.xlu0 0
    %3929 = vperm.xlu0 %3928, %v3588
    %v3930 = vpop.permute.xlu0 %3929
    %3931 = vset.pattern.permute.xlu0 0
    %3932 = vperm.xlu0 %3931, %v3589
    %v3933 = vpop.permute.xlu0 %3932
    %3934 = vset.pattern.permute.xlu0 0
    %3935 = vperm.xlu0 %3934, %v3590
    %v3936 = vpop.permute.xlu0 %3935
    %3937 = vset.pattern.permute.xlu0 0
    %3938 = vperm.xlu0 %3937, %v3591
    %v3939 = vpop.permute.xlu0 %3938
    %3940 = vset.pattern.permute.xlu0 0
    %3941 = vperm.xlu0 %3940, %v3592
    %v3942 = vpop.permute.xlu0 %3941
    %3943 = vset.pattern.permute.xlu0 0
    %3944 = vperm.xlu0 %3943, %v3593
    %v3945 = vpop.permute.xlu0 %3944
    %3946 = vset.pattern.permute.xlu0 0
    %3947 = vperm.xlu0 %3946, %v3594
    %v3948 = vpop.permute.xlu0 %3947
    %3949 = vset.pattern.permute.xlu0 0
    %3950 = vperm.xlu0 %3949, %v3595
    %v3951 = vpop.permute.xlu0 %3950
    %3952 = vset.pattern.permute.xlu0 0
    %3953 = vperm.xlu0 %3952, %v3596
    %v3954 = vpop.permute.xlu0 %3953
    %3955 = vset.pattern.permute.xlu0 0
    %3956 = vperm.xlu0 %3955, %v3597
    %v3957 = vpop.permute.xlu0 %3956
    %3958 = vset.pattern.permute.xlu0 0
    %3959 = vperm.xlu0 %3958, %v3598
    %v3960 = vpop.permute.xlu0 %3959
    %3961 = vset.pattern.permute.xlu0 0
    %3962 = vperm.xlu0 %3961, %v3599
    %v3963 = vpop.permute.xlu0 %3962
    %3964 = vset.pattern.permute.xlu0 0
    %3965 = vperm.xlu0 %3964, %v3600
    %v3966 = vpop.permute.xlu0 %3965
    %3967 = vset.pattern.permute.xlu0 0
    %3968 = vperm.xlu0 %3967, %v3601
    %v3969 = vpop.permute.xlu0 %3968
    %3970 = vset.pattern.permute.xlu0 0
    %3971 = vperm.xlu0 %3970, %v3602
    %v3972 = vpop.permute.xlu0 %3971
    %3973 = vset.pattern.permute.xlu0 0
    %3974 = vperm.xlu0 %3973, %v3603
    %v3975 = vpop.permute.xlu0 %3974
    %3976 = vset.pattern.permute.xlu0 0
    %3977 = vperm.xlu0 %3976, %v3604
    %v3978 = vpop.permute.xlu0 %3977
    %3979 = vset.pattern.permute.xlu0 0
    %3980 = vperm.xlu0 %3979, %v3605
    %v3981 = vpop.permute.xlu0 %3980
    %3982 = vset.pattern.permute.xlu0 0
    %3983 = vperm.xlu0 %3982, %v3606
    %v3984 = vpop.permute.xlu0 %3983
    %3985 = vset.pattern.permute.xlu0 0
    %3986 = vperm.xlu0 %3985, %v3607
    %v3987 = vpop.permute.xlu0 %3986
    %3988 = vset.pattern.permute.xlu0 0
    %3989 = vperm.xlu0 %3988, %v3608
    %v3990 = vpop.permute.xlu0 %3989
    %3991 = vset.pattern.permute.xlu0 0
    %3992 = vperm.xlu0 %3991, %v3609
    %v3993 = vpop.permute.xlu0 %3992
    %3994 = vset.pattern.permute.xlu0 0
    %3995 = vperm.xlu0 %3994, %v3610
    %v3996 = vpop.permute.xlu0 %3995
    %3997 = vset.pattern.permute.xlu0 0
    %3998 = vperm.xlu0 %3997, %v3611
    %v3999 = vpop.permute.xlu0 %3998
    %4000 = vset.pattern.permute.xlu0 0
    %4001 = vperm.xlu0 %4000, %v3612
    %v4002 = vpop.permute.xlu0 %4001
    %4003 = vset.pattern.permute.xlu0 0
    %4004 = vperm.xlu0 %4003, %v3613
    %v4005 = vpop.permute.xlu0 %4004
    %4006 = vset.pattern.permute.xlu0 0
    %4007 = vperm.xlu0 %4006, %v3614
    %v4008 = vpop.permute.xlu0 %4007
    %4009 = vset.pattern.permute.xlu0 0
    %4010 = vperm.xlu0 %4009, %v3615
    %v4011 = vpop.permute.xlu0 %4010
    %4012 = vset.pattern.permute.xlu0 0
    %4013 = vperm.xlu0 %4012, %v3616
    %v4014 = vpop.permute.xlu0 %4013
    %4015 = vset.pattern.permute.xlu0 0
    %4016 = vperm.xlu0 %4015, %v3617
    %v4017 = vpop.permute.xlu0 %4016
    %4018 = vset.pattern.permute.xlu0 0
    %4019 = vperm.xlu0 %4018, %v3618
    %v4020 = vpop.permute.xlu0 %4019
    %4021 = vset.pattern.permute.xlu0 0
    %4022 = vperm.xlu0 %4021, %v3619
    %v4023 = vpop.permute.xlu0 %4022
    %4024 = vset.pattern.permute.xlu0 0
    %4025 = vperm.xlu0 %4024, %v3620
    %v4026 = vpop.permute.xlu0 %4025
    %4027 = vset.pattern.permute.xlu0 0
    %4028 = vperm.xlu0 %4027, %v3621
    %v4029 = vpop.permute.xlu0 %4028
    %4030 = vset.pattern.permute.xlu0 0
    %4031 = vperm.xlu0 %4030, %v3622
    %v4032 = vpop.permute.xlu0 %4031
    %4033 = vset.pattern.permute.xlu0 0
    %4034 = vperm.xlu0 %4033, %v3623
    %v4035 = vpop.permute.xlu0 %4034
    %4036 = vset.pattern.permute.xlu0 0
    %4037 = vperm.xlu0 %4036, %v3624
    %v4038 = vpop.permute.xlu0 %4037
    %4039 = vset.pattern.permute.xlu0 0
    %4040 = vperm.xlu0 %4039, %v3625
    %v4041 = vpop.permute.xlu0 %4040
    %4042 = vset.pattern.permute.xlu0 0
    %4043 = vperm.xlu0 %4042, %v3626
    %v4044 = vpop.permute.xlu0 %4043
    %4045 = vset.pattern.permute.xlu0 0
    %4046 = vperm.xlu0 %4045, %v3627
    %v4047 = vpop.permute.xlu0 %4046
    %4048 = vset.pattern.permute.xlu0 0
    %4049 = vperm.xlu0 %4048, %v3628
    %v4050 = vpop.permute.xlu0 %4049
    %4051 = vset.pattern.permute.xlu0 0
    %4052 = vperm.xlu0 %4051, %v3629
    %v4053 = vpop.permute.xlu0 %4052
    %4054 = vset.pattern.permute.xlu0 0
    %4055 = vperm.xlu0 %4054, %v3630
    %v4056 = vpop.permute.xlu0 %4055
    %4057 = vset.pattern.permute.xlu0 0
    %4058 = vperm.xlu0 %4057, %v3631
    %v4059 = vpop.permute.xlu0 %4058
    %4060 = vset.pattern.permute.xlu0 0
    %4061 = vperm.xlu0 %4060, %v3632
    %v4062 = vpop.permute.xlu0 %4061
    %4063 = vset.pattern.permute.xlu0 0
    %4064 = vperm.xlu0 %4063, %v3633
    %v4065 = vpop.permute.xlu0 %4064
    %4066 = vset.pattern.permute.xlu0 0
    %4067 = vperm.xlu0 %4066, %v3634
    %v4068 = vpop.permute.xlu0 %4067
    %4069 = vset.pattern.permute.xlu0 0
    %4070 = vperm.xlu0 %4069, %v3635
    %v4071 = vpop.permute.xlu0 %4070
    %4072 = vset.pattern.permute.xlu0 0
    %4073 = vperm.xlu0 %4072, %v3636
    %v4074 = vpop.permute.xlu0 %4073
    %4075 = vset.pattern.permute.xlu0 0
    %4076 = vperm.xlu0 %4075, %v3637
    %v4077 = vpop.permute.xlu0 %4076
    %4078 = vset.pattern.permute.xlu0 0
    %4079 = vperm.xlu0 %4078, %v3638
    %v4080 = vpop.permute.xlu0 %4079
    %4081 = vset.pattern.permute.xlu0 0
    %4082 = vperm.xlu0 %4081, %v3639
    %v4083 = vpop.permute.xlu0 %4082
    %4084 = vset.pattern.permute.xlu0 0
    %4085 = vperm.xlu0 %4084, %v3640
    %v4086 = vpop.permute.xlu0 %4085
    %4087 = vset.pattern.permute.xlu0 0
    %4088 = vperm.xlu0 %4087, %v3641
    %v4089 = vpop.permute.xlu0 %4088
    %4090 = vset.pattern.permute.xlu0 0
    %4091 = vperm.xlu0 %4090, %v3642
    %v4092 = vpop.permute.xlu0 %4091
    %4093 = vset.pattern.permute.xlu0 0
    %4094 = vperm.xlu0 %4093, %v3643
    %v4095 = vpop.permute.xlu0 %4094
    %4096 = vset.pattern.permute.xlu0 0
    %4097 = vperm.xlu0 %4096, %v3644
    %v4098 = vpop.permute.xlu0 %4097
    %4099 = vset.pattern.permute.xlu0 0
    %4100 = vperm.xlu0 %4099, %v3645
    %v4101 = vpop.permute.xlu0 %4100
    %4102 = vset.pattern.permute.xlu0 0
    %4103 = vperm.xlu0 %4102, %v3646
    %v4104 = vpop.permute.xlu0 %4103
    %4105 = vset.pattern.permute.xlu0 0
    %4106 = vperm.xlu0 %4105, %v3647
    %v4107 = vpop.permute.xlu0 %4106
    %4108 = vset.pattern.permute.xlu0 0
    %4109 = vperm.xlu0 %4108, %v3648
    %v4110 = vpop.permute.xlu0 %4109
    %4111 = vset.pattern.permute.xlu0 0
    %4112 = vperm.xlu0 %4111, %v3649
    %v4113 = vpop.permute.xlu0 %4112
    %4114 = vset.pattern.permute.xlu0 0
    %4115 = vperm.xlu0 %4114, %v3650
    %v4116 = vpop.permute.xlu0 %4115
    %4117 = vset.pattern.permute.xlu0 0
    %4118 = vperm.xlu0 %4117, %v3651
    %v4119 = vpop.permute.xlu0 %4118
    %4120 = vset.pattern.permute.xlu0 0
    %4121 = vperm.xlu0 %4120, %v3652
    %v4122 = vpop.permute.xlu0 %4121
    %4123 = vset.pattern.permute.xlu0 0
    %4124 = vperm.xlu0 %4123, %v3653
    %v4125 = vpop.permute.xlu0 %4124
    %4126 = vset.pattern.permute.xlu0 0
    %4127 = vperm.xlu0 %4126, %v3654
    %v4128 = vpop.permute.xlu0 %4127
    %4129 = vset.pattern.permute.xlu0 0
    %4130 = vperm.xlu0 %4129, %v3655
    %v4131 = vpop.permute.xlu0 %4130
    %4132 = vset.pattern.permute.xlu0 0
    %4133 = vperm.xlu0 %4132, %v3656
    %v4134 = vpop.permute.xlu0 %4133
    %4135 = vset.pattern.permute.xlu0 0
    %4136 = vperm.xlu0 %4135, %v3657
    %v4137 = vpop.permute.xlu0 %4136
    %4138 = vset.pattern.permute.xlu0 0
    %4139 = vperm.xlu0 %4138, %v3658
    %v4140 = vpop.permute.xlu0 %4139
    %4141 = vset.pattern.permute.xlu0 0
    %4142 = vperm.xlu0 %4141, %v3659
    %v4143 = vpop.permute.xlu0 %4142
    %4144 = vset.pattern.permute.xlu0 0
    %4145 = vperm.xlu0 %4144, %v3660
    %v4146 = vpop.permute.xlu0 %4145
    %4147 = vset.pattern.permute.xlu0 0
    %4148 = vperm.xlu0 %4147, %v3661
    %v4149 = vpop.permute.xlu0 %4148
    %4150 = vset.pattern.permute.xlu0 0
    %4151 = vperm.xlu0 %4150, %v3662
    %v4152 = vpop.permute.xlu0 %4151
    %4153 = vset.pattern.permute.xlu0 0
    %4154 = vperm.xlu0 %4153, %v3663
    %v4155 = vpop.permute.xlu0 %4154
    %4156 = vset.pattern.permute.xlu0 0
    %4157 = vperm.xlu0 %4156, %v3664
    %v4158 = vpop.permute.xlu0 %4157
    %4159 = vset.pattern.permute.xlu0 0
    %4160 = vperm.xlu0 %4159, %v3665
    %v4161 = vpop.permute.xlu0 %4160
    %4162 = vset.pattern.permute.xlu0 0
    %4163 = vperm.xlu0 %4162, %v3666
    %v4164 = vpop.permute.xlu0 %4163
    %4165 = vset.pattern.permute.xlu0 0
    %4166 = vperm.xlu0 %4165, %v3667
    %v4167 = vpop.permute.xlu0 %4166
    %4168 = vset.pattern.permute.xlu0 0
    %4169 = vperm.xlu0 %4168, %v3668
    %v4170 = vpop.permute.xlu0 %4169
    %4171 = vset.pattern.permute.xlu0 0
    %4172 = vperm.xlu0 %4171, %v3669
    %v4173 = vpop.permute.xlu0 %4172
    %4174 = vset.pattern.permute.xlu0 0
    %4175 = vperm.xlu0 %4174, %v3670
    %v4176 = vpop.permute.xlu0 %4175
    %4177 = vset.pattern.permute.xlu0 0
    %4178 = vperm.xlu0 %4177, %v3671
    %v4179 = vpop.permute.xlu0 %4178
    %4180 = vset.pattern.permute.xlu0 0
    %4181 = vperm.xlu0 %4180, %v3672
    %v4182 = vpop.permute.xlu0 %4181
    %4183 = vset.pattern.permute.xlu0 0
    %4184 = vperm.xlu0 %4183, %v3673
    %v4185 = vpop.permute.xlu0 %4184
    %v4186 = vlaneseq
    %v4187 = vshrl.u32 %v4186, 7
    %v4188 = vsub.s32 %v2521, %v4187
    %v4189 = vrot.slane %v3804, %v4188
    %v4190 = vlaneseq
    %v4191 = vshrl.u32 %v4190, 7
    %v4192 = vsub.s32 %v2655, %v4191
    %v4193 = vrot.slane %v3807, %v4192
    %v4194 = vsel %vm2660, %v4193, %v4189
    %v4195 = vlaneseq
    %v4196 = vshrl.u32 %v4195, 7
    %v4197 = vsub.s32 %v2662, %v4196
    %v4198 = vrot.slane %v3810, %v4197
    %v4199 = vsel %vm2667, %v4198, %v4194
    %v4200 = vlaneseq
    %v4201 = vshrl.u32 %v4200, 7
    %v4202 = vsub.s32 %v2669, %v4201
    %v4203 = vrot.slane %v3813, %v4202
    %v4204 = vsel %vm2674, %v4203, %v4199
    %v4205 = vlaneseq
    %v4206 = vshrl.u32 %v4205, 7
    %v4207 = vsub.s32 %v2676, %v4206
    %v4208 = vrot.slane %v3816, %v4207
    %v4209 = vsel %vm2681, %v4208, %v4204
    %v4210 = vlaneseq
    %v4211 = vshrl.u32 %v4210, 7
    %v4212 = vsub.s32 %v2683, %v4211
    %v4213 = vrot.slane %v3819, %v4212
    %v4214 = vsel %vm2688, %v4213, %v4209
    %v4215 = vlaneseq
    %v4216 = vshrl.u32 %v4215, 7
    %v4217 = vsub.s32 %v2690, %v4216
    %v4218 = vrot.slane %v3822, %v4217
    %v4219 = vsel %vm2695, %v4218, %v4214
    %v4220 = vlaneseq
    %v4221 = vshrl.u32 %v4220, 7
    %v4222 = vsub.s32 %v2697, %v4221
    %v4223 = vrot.slane %v3825, %v4222
    %v4224 = vsel %vm2702, %v4223, %v4219
    %v4225 = vlaneseq
    %v4226 = vshrl.u32 %v4225, 7
    %v4227 = vsub.s32 %v2704, %v4226
    %v4228 = vrot.slane %v3828, %v4227
    %v4229 = vsel %vm2709, %v4228, %v4224
    %v4230 = vlaneseq
    %v4231 = vshrl.u32 %v4230, 7
    %v4232 = vsub.s32 %v2711, %v4231
    %v4233 = vrot.slane %v3831, %v4232
    %v4234 = vsel %vm2716, %v4233, %v4229
    %v4235 = vlaneseq
    %v4236 = vshrl.u32 %v4235, 7
    %v4237 = vsub.s32 %v2718, %v4236
    %v4238 = vrot.slane %v3834, %v4237
    %v4239 = vsel %vm2723, %v4238, %v4234
    %v4240 = vlaneseq
    %v4241 = vshrl.u32 %v4240, 7
    %v4242 = vsub.s32 %v2725, %v4241
    %v4243 = vrot.slane %v3837, %v4242
    %v4244 = vsel %vm2730, %v4243, %v4239
    %v4245 = vlaneseq
    %v4246 = vshrl.u32 %v4245, 7
    %v4247 = vsub.s32 %v2732, %v4246
    %v4248 = vrot.slane %v3840, %v4247
    %v4249 = vsel %vm2737, %v4248, %v4244
    %v4250 = vlaneseq
    %v4251 = vshrl.u32 %v4250, 7
    %v4252 = vsub.s32 %v2739, %v4251
    %v4253 = vrot.slane %v3843, %v4252
    %v4254 = vsel %vm2744, %v4253, %v4249
    %v4255 = vlaneseq
    %v4256 = vshrl.u32 %v4255, 7
    %v4257 = vsub.s32 %v2746, %v4256
    %v4258 = vrot.slane %v3846, %v4257
    %v4259 = vsel %vm2751, %v4258, %v4254
    %v4260 = vlaneseq
    %v4261 = vshrl.u32 %v4260, 7
    %v4262 = vsub.s32 %v2753, %v4261
    %v4263 = vrot.slane %v3849, %v4262
    %v4264 = vsel %vm2758, %v4263, %v4259
    %v4265 = vlaneseq
    %v4266 = vshrl.u32 %v4265, 7
    %v4267 = vsub.s32 %v2521, %v4266
    %v4268 = vrot.slane %v3852, %v4267
    %v4269 = vlaneseq
    %v4270 = vshrl.u32 %v4269, 7
    %v4271 = vsub.s32 %v2655, %v4270
    %v4272 = vrot.slane %v3855, %v4271
    %v4273 = vsel %vm2660, %v4272, %v4268
    %v4274 = vlaneseq
    %v4275 = vshrl.u32 %v4274, 7
    %v4276 = vsub.s32 %v2662, %v4275
    %v4277 = vrot.slane %v3858, %v4276
    %v4278 = vsel %vm2667, %v4277, %v4273
    %v4279 = vlaneseq
    %v4280 = vshrl.u32 %v4279, 7
    %v4281 = vsub.s32 %v2669, %v4280
    %v4282 = vrot.slane %v3861, %v4281
    %v4283 = vsel %vm2674, %v4282, %v4278
    %v4284 = vlaneseq
    %v4285 = vshrl.u32 %v4284, 7
    %v4286 = vsub.s32 %v2676, %v4285
    %v4287 = vrot.slane %v3864, %v4286
    %v4288 = vsel %vm2681, %v4287, %v4283
    %v4289 = vlaneseq
    %v4290 = vshrl.u32 %v4289, 7
    %v4291 = vsub.s32 %v2683, %v4290
    %v4292 = vrot.slane %v3867, %v4291
    %v4293 = vsel %vm2688, %v4292, %v4288
    %v4294 = vlaneseq
    %v4295 = vshrl.u32 %v4294, 7
    %v4296 = vsub.s32 %v2690, %v4295
    %v4297 = vrot.slane %v3870, %v4296
    %v4298 = vsel %vm2695, %v4297, %v4293
    %v4299 = vlaneseq
    %v4300 = vshrl.u32 %v4299, 7
    %v4301 = vsub.s32 %v2697, %v4300
    %v4302 = vrot.slane %v3873, %v4301
    %v4303 = vsel %vm2702, %v4302, %v4298
    %v4304 = vlaneseq
    %v4305 = vshrl.u32 %v4304, 7
    %v4306 = vsub.s32 %v2704, %v4305
    %v4307 = vrot.slane %v3876, %v4306
    %v4308 = vsel %vm2709, %v4307, %v4303
    %v4309 = vlaneseq
    %v4310 = vshrl.u32 %v4309, 7
    %v4311 = vsub.s32 %v2711, %v4310
    %v4312 = vrot.slane %v3879, %v4311
    %v4313 = vsel %vm2716, %v4312, %v4308
    %v4314 = vlaneseq
    %v4315 = vshrl.u32 %v4314, 7
    %v4316 = vsub.s32 %v2718, %v4315
    %v4317 = vrot.slane %v3882, %v4316
    %v4318 = vsel %vm2723, %v4317, %v4313
    %v4319 = vlaneseq
    %v4320 = vshrl.u32 %v4319, 7
    %v4321 = vsub.s32 %v2725, %v4320
    %v4322 = vrot.slane %v3885, %v4321
    %v4323 = vsel %vm2730, %v4322, %v4318
    %v4324 = vlaneseq
    %v4325 = vshrl.u32 %v4324, 7
    %v4326 = vsub.s32 %v2732, %v4325
    %v4327 = vrot.slane %v3888, %v4326
    %v4328 = vsel %vm2737, %v4327, %v4323
    %v4329 = vlaneseq
    %v4330 = vshrl.u32 %v4329, 7
    %v4331 = vsub.s32 %v2739, %v4330
    %v4332 = vrot.slane %v3891, %v4331
    %v4333 = vsel %vm2744, %v4332, %v4328
    %v4334 = vlaneseq
    %v4335 = vshrl.u32 %v4334, 7
    %v4336 = vsub.s32 %v2746, %v4335
    %v4337 = vrot.slane %v3894, %v4336
    %v4338 = vsel %vm2751, %v4337, %v4333
    %v4339 = vlaneseq
    %v4340 = vshrl.u32 %v4339, 7
    %v4341 = vsub.s32 %v2753, %v4340
    %v4342 = vrot.slane %v3897, %v4341
    %v4343 = vsel %vm2758, %v4342, %v4338
    %v4344 = vlaneseq
    %v4345 = vshrl.u32 %v4344, 7
    %v4346 = vsub.s32 %v2521, %v4345
    %v4347 = vrot.slane %v3900, %v4346
    %v4348 = vlaneseq
    %v4349 = vshrl.u32 %v4348, 7
    %v4350 = vsub.s32 %v2655, %v4349
    %v4351 = vrot.slane %v3903, %v4350
    %v4352 = vsel %vm2660, %v4351, %v4347
    %v4353 = vlaneseq
    %v4354 = vshrl.u32 %v4353, 7
    %v4355 = vsub.s32 %v2662, %v4354
    %v4356 = vrot.slane %v3906, %v4355
    %v4357 = vsel %vm2667, %v4356, %v4352
    %v4358 = vlaneseq
    %v4359 = vshrl.u32 %v4358, 7
    %v4360 = vsub.s32 %v2669, %v4359
    %v4361 = vrot.slane %v3909, %v4360
    %v4362 = vsel %vm2674, %v4361, %v4357
    %v4363 = vlaneseq
    %v4364 = vshrl.u32 %v4363, 7
    %v4365 = vsub.s32 %v2676, %v4364
    %v4366 = vrot.slane %v3912, %v4365
    %v4367 = vsel %vm2681, %v4366, %v4362
    %v4368 = vlaneseq
    %v4369 = vshrl.u32 %v4368, 7
    %v4370 = vsub.s32 %v2683, %v4369
    %v4371 = vrot.slane %v3915, %v4370
    %v4372 = vsel %vm2688, %v4371, %v4367
    %v4373 = vlaneseq
    %v4374 = vshrl.u32 %v4373, 7
    %v4375 = vsub.s32 %v2690, %v4374
    %v4376 = vrot.slane %v3918, %v4375
    %v4377 = vsel %vm2695, %v4376, %v4372
    %v4378 = vlaneseq
    %v4379 = vshrl.u32 %v4378, 7
    %v4380 = vsub.s32 %v2697, %v4379
    %v4381 = vrot.slane %v3921, %v4380
    %v4382 = vsel %vm2702, %v4381, %v4377
    %v4383 = vlaneseq
    %v4384 = vshrl.u32 %v4383, 7
    %v4385 = vsub.s32 %v2704, %v4384
    %v4386 = vrot.slane %v3924, %v4385
    %v4387 = vsel %vm2709, %v4386, %v4382
    %v4388 = vlaneseq
    %v4389 = vshrl.u32 %v4388, 7
    %v4390 = vsub.s32 %v2711, %v4389
    %v4391 = vrot.slane %v3927, %v4390
    %v4392 = vsel %vm2716, %v4391, %v4387
    %v4393 = vlaneseq
    %v4394 = vshrl.u32 %v4393, 7
    %v4395 = vsub.s32 %v2718, %v4394
    %v4396 = vrot.slane %v3930, %v4395
    %v4397 = vsel %vm2723, %v4396, %v4392
    %v4398 = vlaneseq
    %v4399 = vshrl.u32 %v4398, 7
    %v4400 = vsub.s32 %v2725, %v4399
    %v4401 = vrot.slane %v3933, %v4400
    %v4402 = vsel %vm2730, %v4401, %v4397
    %v4403 = vlaneseq
    %v4404 = vshrl.u32 %v4403, 7
    %v4405 = vsub.s32 %v2732, %v4404
    %v4406 = vrot.slane %v3936, %v4405
    %v4407 = vsel %vm2737, %v4406, %v4402
    %v4408 = vlaneseq
    %v4409 = vshrl.u32 %v4408, 7
    %v4410 = vsub.s32 %v2739, %v4409
    %v4411 = vrot.slane %v3939, %v4410
    %v4412 = vsel %vm2744, %v4411, %v4407
    %v4413 = vlaneseq
    %v4414 = vshrl.u32 %v4413, 7
    %v4415 = vsub.s32 %v2746, %v4414
    %v4416 = vrot.slane %v3942, %v4415
    %v4417 = vsel %vm2751, %v4416, %v4412
    %v4418 = vlaneseq
    %v4419 = vshrl.u32 %v4418, 7
    %v4420 = vsub.s32 %v2753, %v4419
    %v4421 = vrot.slane %v3945, %v4420
    %v4422 = vsel %vm2758, %v4421, %v4417
    %v4423 = vlaneseq
    %v4424 = vshrl.u32 %v4423, 7
    %v4425 = vsub.s32 %v2521, %v4424
    %v4426 = vrot.slane %v3948, %v4425
    %v4427 = vlaneseq
    %v4428 = vshrl.u32 %v4427, 7
    %v4429 = vsub.s32 %v2655, %v4428
    %v4430 = vrot.slane %v3951, %v4429
    %v4431 = vsel %vm2660, %v4430, %v4426
    %v4432 = vlaneseq
    %v4433 = vshrl.u32 %v4432, 7
    %v4434 = vsub.s32 %v2662, %v4433
    %v4435 = vrot.slane %v3954, %v4434
    %v4436 = vsel %vm2667, %v4435, %v4431
    %v4437 = vlaneseq
    %v4438 = vshrl.u32 %v4437, 7
    %v4439 = vsub.s32 %v2669, %v4438
    %v4440 = vrot.slane %v3957, %v4439
    %v4441 = vsel %vm2674, %v4440, %v4436
    %v4442 = vlaneseq
    %v4443 = vshrl.u32 %v4442, 7
    %v4444 = vsub.s32 %v2676, %v4443
    %v4445 = vrot.slane %v3960, %v4444
    %v4446 = vsel %vm2681, %v4445, %v4441
    %v4447 = vlaneseq
    %v4448 = vshrl.u32 %v4447, 7
    %v4449 = vsub.s32 %v2683, %v4448
    %v4450 = vrot.slane %v3963, %v4449
    %v4451 = vsel %vm2688, %v4450, %v4446
    %v4452 = vlaneseq
    %v4453 = vshrl.u32 %v4452, 7
    %v4454 = vsub.s32 %v2690, %v4453
    %v4455 = vrot.slane %v3966, %v4454
    %v4456 = vsel %vm2695, %v4455, %v4451
    %v4457 = vlaneseq
    %v4458 = vshrl.u32 %v4457, 7
    %v4459 = vsub.s32 %v2697, %v4458
    %v4460 = vrot.slane %v3969, %v4459
    %v4461 = vsel %vm2702, %v4460, %v4456
    %v4462 = vlaneseq
    %v4463 = vshrl.u32 %v4462, 7
    %v4464 = vsub.s32 %v2704, %v4463
    %v4465 = vrot.slane %v3972, %v4464
    %v4466 = vsel %vm2709, %v4465, %v4461
    %v4467 = vlaneseq
    %v4468 = vshrl.u32 %v4467, 7
    %v4469 = vsub.s32 %v2711, %v4468
    %v4470 = vrot.slane %v3975, %v4469
    %v4471 = vsel %vm2716, %v4470, %v4466
    %v4472 = vlaneseq
    %v4473 = vshrl.u32 %v4472, 7
    %v4474 = vsub.s32 %v2718, %v4473
    %v4475 = vrot.slane %v3978, %v4474
    %v4476 = vsel %vm2723, %v4475, %v4471
    %v4477 = vlaneseq
    %v4478 = vshrl.u32 %v4477, 7
    %v4479 = vsub.s32 %v2725, %v4478
    %v4480 = vrot.slane %v3981, %v4479
    %v4481 = vsel %vm2730, %v4480, %v4476
    %v4482 = vlaneseq
    %v4483 = vshrl.u32 %v4482, 7
    %v4484 = vsub.s32 %v2732, %v4483
    %v4485 = vrot.slane %v3984, %v4484
    %v4486 = vsel %vm2737, %v4485, %v4481
    %v4487 = vlaneseq
    %v4488 = vshrl.u32 %v4487, 7
    %v4489 = vsub.s32 %v2739, %v4488
    %v4490 = vrot.slane %v3987, %v4489
    %v4491 = vsel %vm2744, %v4490, %v4486
    %v4492 = vlaneseq
    %v4493 = vshrl.u32 %v4492, 7
    %v4494 = vsub.s32 %v2746, %v4493
    %v4495 = vrot.slane %v3990, %v4494
    %v4496 = vsel %vm2751, %v4495, %v4491
    %v4497 = vlaneseq
    %v4498 = vshrl.u32 %v4497, 7
    %v4499 = vsub.s32 %v2753, %v4498
    %v4500 = vrot.slane %v3993, %v4499
    %v4501 = vsel %vm2758, %v4500, %v4496
    %v4502 = vlaneseq
    %v4503 = vshrl.u32 %v4502, 7
    %v4504 = vsub.s32 %v2521, %v4503
    %v4505 = vrot.slane %v3996, %v4504
    %v4506 = vlaneseq
    %v4507 = vshrl.u32 %v4506, 7
    %v4508 = vsub.s32 %v2655, %v4507
    %v4509 = vrot.slane %v3999, %v4508
    %v4510 = vsel %vm2660, %v4509, %v4505
    %v4511 = vlaneseq
    %v4512 = vshrl.u32 %v4511, 7
    %v4513 = vsub.s32 %v2662, %v4512
    %v4514 = vrot.slane %v4002, %v4513
    %v4515 = vsel %vm2667, %v4514, %v4510
    %v4516 = vlaneseq
    %v4517 = vshrl.u32 %v4516, 7
    %v4518 = vsub.s32 %v2669, %v4517
    %v4519 = vrot.slane %v4005, %v4518
    %v4520 = vsel %vm2674, %v4519, %v4515
    %v4521 = vlaneseq
    %v4522 = vshrl.u32 %v4521, 7
    %v4523 = vsub.s32 %v2676, %v4522
    %v4524 = vrot.slane %v4008, %v4523
    %v4525 = vsel %vm2681, %v4524, %v4520
    %v4526 = vlaneseq
    %v4527 = vshrl.u32 %v4526, 7
    %v4528 = vsub.s32 %v2683, %v4527
    %v4529 = vrot.slane %v4011, %v4528
    %v4530 = vsel %vm2688, %v4529, %v4525
    %v4531 = vlaneseq
    %v4532 = vshrl.u32 %v4531, 7
    %v4533 = vsub.s32 %v2690, %v4532
    %v4534 = vrot.slane %v4014, %v4533
    %v4535 = vsel %vm2695, %v4534, %v4530
    %v4536 = vlaneseq
    %v4537 = vshrl.u32 %v4536, 7
    %v4538 = vsub.s32 %v2697, %v4537
    %v4539 = vrot.slane %v4017, %v4538
    %v4540 = vsel %vm2702, %v4539, %v4535
    %v4541 = vlaneseq
    %v4542 = vshrl.u32 %v4541, 7
    %v4543 = vsub.s32 %v2704, %v4542
    %v4544 = vrot.slane %v4020, %v4543
    %v4545 = vsel %vm2709, %v4544, %v4540
    %v4546 = vlaneseq
    %v4547 = vshrl.u32 %v4546, 7
    %v4548 = vsub.s32 %v2711, %v4547
    %v4549 = vrot.slane %v4023, %v4548
    %v4550 = vsel %vm2716, %v4549, %v4545
    %v4551 = vlaneseq
    %v4552 = vshrl.u32 %v4551, 7
    %v4553 = vsub.s32 %v2718, %v4552
    %v4554 = vrot.slane %v4026, %v4553
    %v4555 = vsel %vm2723, %v4554, %v4550
    %v4556 = vlaneseq
    %v4557 = vshrl.u32 %v4556, 7
    %v4558 = vsub.s32 %v2725, %v4557
    %v4559 = vrot.slane %v4029, %v4558
    %v4560 = vsel %vm2730, %v4559, %v4555
    %v4561 = vlaneseq
    %v4562 = vshrl.u32 %v4561, 7
    %v4563 = vsub.s32 %v2732, %v4562
    %v4564 = vrot.slane %v4032, %v4563
    %v4565 = vsel %vm2737, %v4564, %v4560
    %v4566 = vlaneseq
    %v4567 = vshrl.u32 %v4566, 7
    %v4568 = vsub.s32 %v2739, %v4567
    %v4569 = vrot.slane %v4035, %v4568
    %v4570 = vsel %vm2744, %v4569, %v4565
    %v4571 = vlaneseq
    %v4572 = vshrl.u32 %v4571, 7
    %v4573 = vsub.s32 %v2746, %v4572
    %v4574 = vrot.slane %v4038, %v4573
    %v4575 = vsel %vm2751, %v4574, %v4570
    %v4576 = vlaneseq
    %v4577 = vshrl.u32 %v4576, 7
    %v4578 = vsub.s32 %v2753, %v4577
    %v4579 = vrot.slane %v4041, %v4578
    %v4580 = vsel %vm2758, %v4579, %v4575
    %v4581 = vlaneseq
    %v4582 = vshrl.u32 %v4581, 7
    %v4583 = vsub.s32 %v2521, %v4582
    %v4584 = vrot.slane %v4044, %v4583
    %v4585 = vlaneseq
    %v4586 = vshrl.u32 %v4585, 7
    %v4587 = vsub.s32 %v2655, %v4586
    %v4588 = vrot.slane %v4047, %v4587
    %v4589 = vsel %vm2660, %v4588, %v4584
    %v4590 = vlaneseq
    %v4591 = vshrl.u32 %v4590, 7
    %v4592 = vsub.s32 %v2662, %v4591
    %v4593 = vrot.slane %v4050, %v4592
    %v4594 = vsel %vm2667, %v4593, %v4589
    %v4595 = vlaneseq
    %v4596 = vshrl.u32 %v4595, 7
    %v4597 = vsub.s32 %v2669, %v4596
    %v4598 = vrot.slane %v4053, %v4597
    %v4599 = vsel %vm2674, %v4598, %v4594
    %v4600 = vlaneseq
    %v4601 = vshrl.u32 %v4600, 7
    %v4602 = vsub.s32 %v2676, %v4601
    %v4603 = vrot.slane %v4056, %v4602
    %v4604 = vsel %vm2681, %v4603, %v4599
    %v4605 = vlaneseq
    %v4606 = vshrl.u32 %v4605, 7
    %v4607 = vsub.s32 %v2683, %v4606
    %v4608 = vrot.slane %v4059, %v4607
    %v4609 = vsel %vm2688, %v4608, %v4604
    %v4610 = vlaneseq
    %v4611 = vshrl.u32 %v4610, 7
    %v4612 = vsub.s32 %v2690, %v4611
    %v4613 = vrot.slane %v4062, %v4612
    %v4614 = vsel %vm2695, %v4613, %v4609
    %v4615 = vlaneseq
    %v4616 = vshrl.u32 %v4615, 7
    %v4617 = vsub.s32 %v2697, %v4616
    %v4618 = vrot.slane %v4065, %v4617
    %v4619 = vsel %vm2702, %v4618, %v4614
    %v4620 = vlaneseq
    %v4621 = vshrl.u32 %v4620, 7
    %v4622 = vsub.s32 %v2704, %v4621
    %v4623 = vrot.slane %v4068, %v4622
    %v4624 = vsel %vm2709, %v4623, %v4619
    %v4625 = vlaneseq
    %v4626 = vshrl.u32 %v4625, 7
    %v4627 = vsub.s32 %v2711, %v4626
    %v4628 = vrot.slane %v4071, %v4627
    %v4629 = vsel %vm2716, %v4628, %v4624
    %v4630 = vlaneseq
    %v4631 = vshrl.u32 %v4630, 7
    %v4632 = vsub.s32 %v2718, %v4631
    %v4633 = vrot.slane %v4074, %v4632
    %v4634 = vsel %vm2723, %v4633, %v4629
    %v4635 = vlaneseq
    %v4636 = vshrl.u32 %v4635, 7
    %v4637 = vsub.s32 %v2725, %v4636
    %v4638 = vrot.slane %v4077, %v4637
    %v4639 = vsel %vm2730, %v4638, %v4634
    %v4640 = vlaneseq
    %v4641 = vshrl.u32 %v4640, 7
    %v4642 = vsub.s32 %v2732, %v4641
    %v4643 = vrot.slane %v4080, %v4642
    %v4644 = vsel %vm2737, %v4643, %v4639
    %v4645 = vlaneseq
    %v4646 = vshrl.u32 %v4645, 7
    %v4647 = vsub.s32 %v2739, %v4646
    %v4648 = vrot.slane %v4083, %v4647
    %v4649 = vsel %vm2744, %v4648, %v4644
    %v4650 = vlaneseq
    %v4651 = vshrl.u32 %v4650, 7
    %v4652 = vsub.s32 %v2746, %v4651
    %v4653 = vrot.slane %v4086, %v4652
    %v4654 = vsel %vm2751, %v4653, %v4649
    %v4655 = vlaneseq
    %v4656 = vshrl.u32 %v4655, 7
    %v4657 = vsub.s32 %v2753, %v4656
    %v4658 = vrot.slane %v4089, %v4657
    %v4659 = vsel %vm2758, %v4658, %v4654
    %v4660 = vlaneseq
    %v4661 = vshrl.u32 %v4660, 7
    %v4662 = vsub.s32 %v2521, %v4661
    %v4663 = vrot.slane %v4092, %v4662
    %v4664 = vlaneseq
    %v4665 = vshrl.u32 %v4664, 7
    %v4666 = vsub.s32 %v2655, %v4665
    %v4667 = vrot.slane %v4095, %v4666
    %v4668 = vsel %vm2660, %v4667, %v4663
    %v4669 = vlaneseq
    %v4670 = vshrl.u32 %v4669, 7
    %v4671 = vsub.s32 %v2662, %v4670
    %v4672 = vrot.slane %v4098, %v4671
    %v4673 = vsel %vm2667, %v4672, %v4668
    %v4674 = vlaneseq
    %v4675 = vshrl.u32 %v4674, 7
    %v4676 = vsub.s32 %v2669, %v4675
    %v4677 = vrot.slane %v4101, %v4676
    %v4678 = vsel %vm2674, %v4677, %v4673
    %v4679 = vlaneseq
    %v4680 = vshrl.u32 %v4679, 7
    %v4681 = vsub.s32 %v2676, %v4680
    %v4682 = vrot.slane %v4104, %v4681
    %v4683 = vsel %vm2681, %v4682, %v4678
    %v4684 = vlaneseq
    %v4685 = vshrl.u32 %v4684, 7
    %v4686 = vsub.s32 %v2683, %v4685
    %v4687 = vrot.slane %v4107, %v4686
    %v4688 = vsel %vm2688, %v4687, %v4683
    %v4689 = vlaneseq
    %v4690 = vshrl.u32 %v4689, 7
    %v4691 = vsub.s32 %v2690, %v4690
    %v4692 = vrot.slane %v4110, %v4691
    %v4693 = vsel %vm2695, %v4692, %v4688
    %v4694 = vlaneseq
    %v4695 = vshrl.u32 %v4694, 7
    %v4696 = vsub.s32 %v2697, %v4695
    %v4697 = vrot.slane %v4113, %v4696
    %v4698 = vsel %vm2702, %v4697, %v4693
    %v4699 = vlaneseq
    %v4700 = vshrl.u32 %v4699, 7
    %v4701 = vsub.s32 %v2704, %v4700
    %v4702 = vrot.slane %v4116, %v4701
    %v4703 = vsel %vm2709, %v4702, %v4698
    %v4704 = vlaneseq
    %v4705 = vshrl.u32 %v4704, 7
    %v4706 = vsub.s32 %v2711, %v4705
    %v4707 = vrot.slane %v4119, %v4706
    %v4708 = vsel %vm2716, %v4707, %v4703
    %v4709 = vlaneseq
    %v4710 = vshrl.u32 %v4709, 7
    %v4711 = vsub.s32 %v2718, %v4710
    %v4712 = vrot.slane %v4122, %v4711
    %v4713 = vsel %vm2723, %v4712, %v4708
    %v4714 = vlaneseq
    %v4715 = vshrl.u32 %v4714, 7
    %v4716 = vsub.s32 %v2725, %v4715
    %v4717 = vrot.slane %v4125, %v4716
    %v4718 = vsel %vm2730, %v4717, %v4713
    %v4719 = vlaneseq
    %v4720 = vshrl.u32 %v4719, 7
    %v4721 = vsub.s32 %v2732, %v4720
    %v4722 = vrot.slane %v4128, %v4721
    %v4723 = vsel %vm2737, %v4722, %v4718
    %v4724 = vlaneseq
    %v4725 = vshrl.u32 %v4724, 7
    %v4726 = vsub.s32 %v2739, %v4725
    %v4727 = vrot.slane %v4131, %v4726
    %v4728 = vsel %vm2744, %v4727, %v4723
    %v4729 = vlaneseq
    %v4730 = vshrl.u32 %v4729, 7
    %v4731 = vsub.s32 %v2746, %v4730
    %v4732 = vrot.slane %v4134, %v4731
    %v4733 = vsel %vm2751, %v4732, %v4728
    %v4734 = vlaneseq
    %v4735 = vshrl.u32 %v4734, 7
    %v4736 = vsub.s32 %v2753, %v4735
    %v4737 = vrot.slane %v4137, %v4736
    %v4738 = vsel %vm2758, %v4737, %v4733
    %v4739 = vlaneseq
    %v4740 = vshrl.u32 %v4739, 7
    %v4741 = vsub.s32 %v2521, %v4740
    %v4742 = vrot.slane %v4140, %v4741
    %v4743 = vlaneseq
    %v4744 = vshrl.u32 %v4743, 7
    %v4745 = vsub.s32 %v2655, %v4744
    %v4746 = vrot.slane %v4143, %v4745
    %v4747 = vsel %vm2660, %v4746, %v4742
    %v4748 = vlaneseq
    %v4749 = vshrl.u32 %v4748, 7
    %v4750 = vsub.s32 %v2662, %v4749
    %v4751 = vrot.slane %v4146, %v4750
    %v4752 = vsel %vm2667, %v4751, %v4747
    %v4753 = vlaneseq
    %v4754 = vshrl.u32 %v4753, 7
    %v4755 = vsub.s32 %v2669, %v4754
    %v4756 = vrot.slane %v4149, %v4755
    %v4757 = vsel %vm2674, %v4756, %v4752
    %v4758 = vlaneseq
    %v4759 = vshrl.u32 %v4758, 7
    %v4760 = vsub.s32 %v2676, %v4759
    %v4761 = vrot.slane %v4152, %v4760
    %v4762 = vsel %vm2681, %v4761, %v4757
    %v4763 = vlaneseq
    %v4764 = vshrl.u32 %v4763, 7
    %v4765 = vsub.s32 %v2683, %v4764
    %v4766 = vrot.slane %v4155, %v4765
    %v4767 = vsel %vm2688, %v4766, %v4762
    %v4768 = vlaneseq
    %v4769 = vshrl.u32 %v4768, 7
    %v4770 = vsub.s32 %v2690, %v4769
    %v4771 = vrot.slane %v4158, %v4770
    %v4772 = vsel %vm2695, %v4771, %v4767
    %v4773 = vlaneseq
    %v4774 = vshrl.u32 %v4773, 7
    %v4775 = vsub.s32 %v2697, %v4774
    %v4776 = vrot.slane %v4161, %v4775
    %v4777 = vsel %vm2702, %v4776, %v4772
    %v4778 = vlaneseq
    %v4779 = vshrl.u32 %v4778, 7
    %v4780 = vsub.s32 %v2704, %v4779
    %v4781 = vrot.slane %v4164, %v4780
    %v4782 = vsel %vm2709, %v4781, %v4777
    %v4783 = vlaneseq
    %v4784 = vshrl.u32 %v4783, 7
    %v4785 = vsub.s32 %v2711, %v4784
    %v4786 = vrot.slane %v4167, %v4785
    %v4787 = vsel %vm2716, %v4786, %v4782
    %v4788 = vlaneseq
    %v4789 = vshrl.u32 %v4788, 7
    %v4790 = vsub.s32 %v2718, %v4789
    %v4791 = vrot.slane %v4170, %v4790
    %v4792 = vsel %vm2723, %v4791, %v4787
    %v4793 = vlaneseq
    %v4794 = vshrl.u32 %v4793, 7
    %v4795 = vsub.s32 %v2725, %v4794
    %v4796 = vrot.slane %v4173, %v4795
    %v4797 = vsel %vm2730, %v4796, %v4792
    %v4798 = vlaneseq
    %v4799 = vshrl.u32 %v4798, 7
    %v4800 = vsub.s32 %v2732, %v4799
    %v4801 = vrot.slane %v4176, %v4800
    %v4802 = vsel %vm2737, %v4801, %v4797
    %v4803 = vlaneseq
    %v4804 = vshrl.u32 %v4803, 7
    %v4805 = vsub.s32 %v2739, %v4804
    %v4806 = vrot.slane %v4179, %v4805
    %v4807 = vsel %vm2744, %v4806, %v4802
    %v4808 = vlaneseq
    %v4809 = vshrl.u32 %v4808, 7
    %v4810 = vsub.s32 %v2746, %v4809
    %v4811 = vrot.slane %v4182, %v4810
    %v4812 = vsel %vm2751, %v4811, %v4807
    %v4813 = vlaneseq
    %v4814 = vshrl.u32 %v4813, 7
    %v4815 = vsub.s32 %v2753, %v4814
    %v4816 = vrot.slane %v4185, %v4815
    %v4817 = vsel %vm2758, %v4816, %v4812
    %v4818 = vsel %vm3313, %v4343, %v4264
    %v4819 = vsel %vm3315, %v4422, %v4818
    %v4820 = vsel %vm3317, %v4501, %v4819
    %v4821 = vsel %vm3319, %v4580, %v4820
    %v4822 = vsel %vm3321, %v4659, %v4821
    %v4823 = vsel %vm3323, %v4738, %v4822
    %v4824 = vsel %vm3325, %v4817, %v4823
    %4826 = vst [vmem:[#allocation4] sm:$0xff] %v4824
    // Predicated region
    $region42: #{tpu_custom_call.1} parent=1 // pred_check
      _
    $region43: #{tpu_custom_call.1} parent=1 // pred_check_branch
      %4828 = sbr.rel (0) target = $region45
    $region44: #{tpu_custom_call.1} parent=1 // pred_region
      %s4830 = ssub.s32 128, 128
      %4831 = vsyncadd [#allocation5], %s4830
      %s4833 = sshll.u32 [#allocation4], 4
      %s4834 = int_to_ptr.vmem [resolvable:$true] %s4833
      %4836 = dma.vmem_to_hbm [thread:$0]  %s4834, 128, %s10, [#allocation5]
    $region45: #{tpu_custom_call.1} parent=1 // pred_fallthru
      _
    // Predicated region
    $region46: #{tpu_custom_call.1} parent=1 // pred_check
      _
    $region47: #{tpu_custom_call.1} parent=1 // pred_check_branch
      %4838 = sbr.rel (0) target = $region49
    $region48: #{tpu_custom_call.1} parent=1 // pred_region
      %4839 = dma.done [#allocation5], 128
    $region49: #{tpu_custom_call.1} parent=1 // pred_fallthru
      _
    %4840 = vsyncpa [#allocation5], 1

</llo_original>
